<compile_context>
chip_gen: v5e
topology: v5e:2x2
jax: 0.10.0
libtpu: 0.0.40
codegen_flags: <defaults>
</compile_context>

<pallas_src>
import functools

import jax
import jax.numpy as jnp
from jax import lax
from jax.experimental import pallas as pl
from jax.experimental.pallas import tpu as pltpu

_LN_EPS = 1e-5  # torch.nn.LayerNorm default


# --------------------------- small utilities -------------------------------
def _vmem_limit_bytes(frac=0.75, cap=96 * 1024 * 1024,
                      default=48 * 1024 * 1024):
    # Scoped-VMEM defaults are 16/32/32 MiB on v5e/v6e/v7x while physical VMEM
    # is 128/128/64 MiB; raise the limit but keep headroom below physical.
    try:
        return int(min(cap, pltpu.get_tpu_info().vmem_capacity_bytes * frac))
    except Exception:
        return default


def _resident_spec(shape):
    # Constant-index (weight) operand: its block index never changes across the
    # grid, so double buffering only wastes VMEM.  Request single buffering;
    # fall back silently on jax versions without `pipeline_mode`.
    index_map = lambda i: (0,) * len(shape)
    try:
        return pl.BlockSpec(shape, index_map, pipeline_mode=pl.Buffered(1))
    except Exception:
        return pl.BlockSpec(shape, index_map)


def _choose_batch_block(batch, n_tok, target_rows=512):
    # Largest divisor bb of `batch` whose flat (bb*n_tok, D) block is a legal
    # TPU block (row count multiple of 8, or the full extent), preferring
    # blocks near `target_rows` and a grid of length >= 2 (v7x has 2 TCs).
    legal = [bb for bb in range(1, batch + 1)
             if batch % bb == 0 and (bb * n_tok) % 8 == 0]
    if not legal:
        return batch                               # whole batch in one block
    fits = [bb for bb in legal if bb * n_tok <= target_rows]
    cands = fits if fits else [min(legal)]
    multi = [bb for bb in cands if batch // bb >= 2]
    return max(multi) if multi else max(cands)


# ----------------------------- in-kernel math -------------------------------
def _gelu(x):
    # tanh-approximation GELU: one EUP transcendental per element instead of a
    # ~15-op VALU erf polynomial (differs from torch's exact-erf GELU ~1e-3).
    c = 0.7978845608028654  # sqrt(2/pi)
    return 0.5 * x * (1.0 + jnp.tanh(c * (x + 0.044715 * x * x * x)))


def _layernorm(x, g, b):
    # One-pass statistics (sum and sum-of-squares): the two XLU reductions are
    # independent instead of serialized through (x - mu).  Clamp the variance
    # at 0 to guard rsqrt against f32 cancellation.
    d = x.shape[-1]
    s1 = jnp.sum(x, axis=-1, keepdims=True)
    s2 = jnp.sum(x * x, axis=-1, keepdims=True)
    mu = s1 * (1.0 / d)
    var = jnp.maximum(s2 * (1.0 / d) - mu * mu, 0.0)
    return (x - mu) * lax.rsqrt(var + _LN_EPS) * g + b


def _softmax_last(x):
    m = jnp.max(x, axis=-1, keepdims=True)
    e = jnp.exp(x - m)
    # approx reciprocal -> EUP slot instead of a VALU divide
    return e * pl.reciprocal(jnp.sum(e, axis=-1, keepdims=True), approx=True)


# ------------------------------- kernels ------------------------------------
def linear_kernel(x_ref, w_ref, b_ref, o_ref):
    # bf16 MXU matmul, f32 accumulation, f32 bias add.
    o_ref[...] = (jnp.dot(x_ref[...].astype(jnp.bfloat16),
                          w_ref[...].astype(jnp.bfloat16),
                          preferred_element_type=jnp.float32) + b_ref[...])


def head_kernel(x_ref, g_ref, beta_ref, w_ref, b_ref, o_ref):
    # fused LayerNorm + classification Linear
    xn = _layernorm(x_ref[...], g_ref[...], beta_ref[...])
    o_ref[...] = (jnp.dot(xn.astype(jnp.bfloat16),
                          w_ref[...].astype(jnp.bfloat16),
                          preferred_element_type=jnp.float32) + b_ref[...])


def transformer_layer_kernel(x_ref, ln1g_ref, ln1b_ref, wqkv_ref, wo_ref,
                             bo_ref, ln2g_ref, ln2b_ref, w1_ref, b1_ref,
                             w2_ref, b2_ref, o_ref,
                             q_s, k_s, v_s, cat_s, *, bb, n_tok, heads,
                             dim_head):
    # One grid step == `bb` batch elements.  x block is flat (bb*n_tok, D):
    # all weight matmuls run with bb*n_tok rows (better MXU occupancy than a
    # single sequence of ~200 tokens).
    x = x_ref[...]                               # (bb*n_tok, D) f32
    inner = heads * dim_head

    # ---- PreNorm + multi-head self attention ----
    xn = _layernorm(x, ln1g_ref[...], ln1b_ref[...])
    # QKV projection: one wide bf16 MXU matmul; attention scale is already
    # folded into the Q columns of wqkv (see prepare_vit_params).
    qkv = jnp.dot(xn.astype(jnp.bfloat16), wqkv_ref[...].astype(jnp.bfloat16),
                  preferred_element_type=jnp.float32)   # (bb*n_tok, 3*inner)

    # Relayout (m, (h d)) -> (bb*heads, n, d) via bf16 VMEM scratch stores.
    # TODO(synk): a lane-dense relayout (einshape / head-pair packing) would
    # avoid the sub-128-lane masked stores; kept as simple static slice copies
    # for lowering robustness.
    for b in range(bb):                          # static unroll: copies only
        r0 = b * n_tok
        for h in range(heads):
            g = b * heads + h
            c0 = h * dim_head
            q_s[g] = qkv[r0:r0 + n_tok, c0:c0 + dim_head].astype(jnp.bfloat16)
            k_s[g] = qkv[r0:r0 + n_tok,
                         inner + c0:inner + c0 + dim_head].astype(jnp.bfloat16)
            v_s[g] = qkv[r0:r0 + n_tok,
                         2 * inner + c0:
                         2 * inner + c0 + dim_head].astype(jnp.bfloat16)

    q = q_s[...]                                 # (bb*heads, n, d) bf16
    k = k_s[...]
    v = v_s[...]

    # Scores and context batched over (batch-in-block x heads): one 3-D
    # contraction each instead of many skinny matmuls + concatenate.
    scores = jnp.einsum('gnd,gmd->gnm', q, k,
                        preferred_element_type=jnp.float32)   # (G, n, n) f32
    attn = _softmax_last(scores)
    ctx = jnp.einsum('gnm,gmd->gnd', attn.astype(jnp.bfloat16), v,
                     preferred_element_type=jnp.float32)      # (G, n, d) f32

    # (g, n, d) -> (m, (h d)) by writing each head at its lane offset.
    for b in range(bb):
        r0 = b * n_tok
        for h in range(heads):
            g = b * heads + h
            cat_s[r0:r0 + n_tok,
                  h * dim_head:(h + 1) * dim_head] = ctx[g].astype(jnp.bfloat16)

    attn_out = jnp.dot(cat_s[...], wo_ref[...].astype(jnp.bfloat16),
                       preferred_element_type=jnp.float32) + bo_ref[...]
    x = x + attn_out                             # residual (f32)

    # ---- PreNorm + FeedForward ----
    # TODO(synk): at ViT-Large/Huge scale on v7x, stream w1/w2 over mlp_dim
    # tiles (pltpu.emit_pipeline or a separate K-tiled pallas_call) instead of
    # holding them fully VMEM-resident.
    xn2 = _layernorm(x, ln2g_ref[...], ln2b_ref[...])
    h1 = jnp.dot(xn2.astype(jnp.bfloat16), w1_ref[...].astype(jnp.bfloat16),
                 preferred_element_type=jnp.float32) + b1_ref[...]
    h1 = _gelu(h1)
    h2 = jnp.dot(h1.astype(jnp.bfloat16), w2_ref[...].astype(jnp.bfloat16),
                 preferred_element_type=jnp.float32) + b2_ref[...]
    o_ref[...] = x + h2                          # residual (f32)


# ------------------------------- wrappers ------------------------------------
def pallas_linear(x2d, w, b, *, tile_m=512):
    # Row-tiled patch-embedding Linear: 512-row tiles keep the HBM stream near
    # roofline while staying a few MB per (double-buffered) tile.
    m, kdim = x2d.shape
    n = w.shape[1]
    tm = min(tile_m, m)
    return pl.pallas_call(
        linear_kernel,
        out_shape=jax.ShapeDtypeStruct((m, n), jnp.float32),
        grid=(pl.cdiv(m, tm),),
        in_specs=[pl.BlockSpec((tm, kdim), lambda i: (i, 0)),
                  _resident_spec((kdim, n)),
                  _resident_spec((1, n))],
        out_specs=pl.BlockSpec((tm, n), lambda i: (i, 0)),
        compiler_params=pltpu.CompilerParams(
            dimension_semantics=("parallel",),
            vmem_limit_bytes=_vmem_limit_bytes()),
    )(x2d, w, b)


def pallas_head(x_cls, g, beta, w, b):
    bsz = x_cls.shape[0]
    c = w.shape[1]
    return pl.pallas_call(
        head_kernel,
        out_shape=jax.ShapeDtypeStruct((bsz, c), jnp.float32),
        compiler_params=pltpu.CompilerParams(
            vmem_limit_bytes=_vmem_limit_bytes()),
    )(x_cls, g, beta, w, b)


def pallas_transformer_layer(x_flat, p, *, n_tok, heads, dim_head, block_b):
    # x_flat: (B*n_tok, D) f32; p: a *prepared* layer dict (bf16 weights,
    # attention scale already folded into the Q columns of w_qkv).
    M, D = x_flat.shape
    inner = heads * dim_head
    mlp_dim = p["w1"].shape[1]
    rows = block_b * n_tok

    xmap = lambda i: (i, 0)
    cmap = lambda i: (0, 0)
    kern = functools.partial(transformer_layer_kernel, bb=block_b,
                             n_tok=n_tok, heads=heads, dim_head=dim_head)
    return pl.pallas_call(
        kern,
        out_shape=jax.ShapeDtypeStruct((M, D), jnp.float32),
        grid=(M // rows,),
        in_specs=[
            pl.BlockSpec((rows, D), xmap),        # x (flat rows)
            pl.BlockSpec((1, D), cmap),           # ln1 gamma
            pl.BlockSpec((1, D), cmap),           # ln1 beta
            _resident_spec((D, 3 * inner)),       # to_qkv (bf16, scale folded)
            _resident_spec((inner, D)),           # to_out weight (bf16)
            pl.BlockSpec((1, D), cmap),           # to_out bias
            pl.BlockSpec((1, D), cmap),           # ln2 gamma
            pl.BlockSpec((1, D), cmap),           # ln2 beta
            _resident_spec((D, mlp_dim)),         # ff w1 (bf16)
            pl.BlockSpec((1, mlp_dim), cmap),     # ff b1
            _resident_spec((mlp_dim, D)),         # ff w2 (bf16)
            pl.BlockSpec((1, D), cmap),           # ff b2
        ],
        out_specs=pl.BlockSpec((rows, D), xmap),
        scratch_shapes=[
            pltpu.VMEM((block_b * heads, n_tok, dim_head), jnp.bfloat16),  # q
            pltpu.VMEM((block_b * heads, n_tok, dim_head), jnp.bfloat16),  # k
            pltpu.VMEM((block_b * heads, n_tok, dim_head), jnp.bfloat16),  # v
            pltpu.VMEM((rows, inner), jnp.bfloat16),                       # cat
        ],
        # Residual stream writes back into the same HBM buffer it was read
        # from: no fresh (B*N, D) allocation per layer.
        input_output_aliases={0: 0},
        compiler_params=pltpu.CompilerParams(
            dimension_semantics=("parallel",),     # megacore / 2-TC split on B
            vmem_limit_bytes=_vmem_limit_bytes()),
    )(x_flat, p["ln1_g"], p["ln1_b"], p["w_qkv"], p["w_out"], p["b_out"],
      p["ln2_g"], p["ln2_b"], p["w1"], p["b1"], p["w2"], p["b2"])


# --------------------------- params + forward --------------------------------
def init_vit_params(key, *, image_size, patch_size, channels, num_classes,
                    dim, depth, heads, dim_head, mlp_dim):
    p1, p2 = patch_size
    patch_dim = channels * p1 * p2
    inner = heads * dim_head
    n_patches = (image_size[0] // p1) * (image_size[1] // p2)
    keys = jax.random.split(key, 6 + depth)

    def nrm(k, shape, scale=0.02):
        return scale * jax.random.normal(k, shape, dtype=jnp.float32)

    params = {
        "patch_w": nrm(keys[0], (patch_dim, dim)),
        "patch_b": jnp.zeros((1, dim), jnp.float32),
        "pos_emb": nrm(keys[1], (1, n_patches + 1, dim), 1.0),
        "cls_token": nrm(keys[2], (1, 1, dim), 1.0),
        "head_g": jnp.ones((1, dim), jnp.float32),
        "head_beta": jnp.zeros((1, dim), jnp.float32),
        "head_w": nrm(keys[3], (dim, num_classes)),
        "head_b": jnp.zeros((1, num_classes), jnp.float32),
        "layers": [],
    }
    for d in range(depth):
        lk = jax.random.split(keys[6 + d], 4)
        params["layers"].append({
            "ln1_g": jnp.ones((1, dim), jnp.float32),
            "ln1_b": jnp.zeros((1, dim), jnp.float32),
            "w_qkv": nrm(lk[0], (dim, 3 * inner)),
            "w_out": nrm(lk[1], (inner, dim)),
            "b_out": jnp.zeros((1, dim), jnp.float32),
            "ln2_g": jnp.ones((1, dim), jnp.float32),
            "ln2_b": jnp.zeros((1, dim), jnp.float32),
            "w1": nrm(lk[2], (dim, mlp_dim)),
            "b1": jnp.zeros((1, mlp_dim), jnp.float32),
            "w2": nrm(lk[3], (mlp_dim, dim)),
            "b2": jnp.zeros((1, dim), jnp.float32),
        })
    return params


def prepare_vit_params(params, *, heads, dim_head):
    """One-time inference prep (call ONCE, outside jit): fold the attention
    scale into the Q columns of w_qkv and cast every large matmul weight to
    bf16 (MXU-native).  This removes the per-forward f32 read + bf16 write of
    every weight that the old per-call casts caused (~3x weight HBM traffic)."""
    inner = heads * dim_head
    scale = dim_head ** -0.5
    out = dict(params)
    out["patch_w"] = params["patch_w"].astype(jnp.bfloat16)
    out["head_w"] = params["head_w"].astype(jnp.bfloat16)
    layers = []
    for p in params["layers"]:
        q = dict(p)
        q["w_qkv"] = (p["w_qkv"].at[:, :inner].multiply(scale)
                      ).astype(jnp.bfloat16)
        q["w_out"] = p["w_out"].astype(jnp.bfloat16)
        q["w1"] = p["w1"].astype(jnp.bfloat16)
        q["w2"] = p["w2"].astype(jnp.bfloat16)
        layers.append(q)
    out["layers"] = layers
    return out


def vit_forward(params, img, *, patch_size, heads, dim_head):
    # params must come from prepare_vit_params.  img: (B, C, H, W) NCHW.
    B, C, H, W = img.shape
    p1, p2 = patch_size
    hh, ww = H // p1, W // p2
    # Rearrange 'b c (h p1) (w p2) -> b (h w) (p1 p2 c)'  (glue, no compute)
    x = img.reshape(B, C, hh, p1, ww, p2)
    x = jnp.transpose(x, (0, 2, 4, 3, 5, 1))        # b h w p1 p2 c
    n = hh * ww
    x = x.reshape(B, n, p1 * p2 * C)

    dim = params["patch_w"].shape[1]
    # patch embedding (Linear) in Pallas, row-tiled
    x = pallas_linear(x.reshape(B * n, -1), params["patch_w"],
                      params["patch_b"])
    x = x.reshape(B, n, dim)

    # cls token + positional embedding (dropout p=0 -> identity)
    cls = jnp.broadcast_to(params["cls_token"], (B, 1, dim))
    x = jnp.concatenate([cls, x], axis=1)
    x = x + params["pos_emb"][:, :n + 1]

    # transformer encoder: one fused Pallas kernel per layer on a flat
    # (B*n_tok, D) token stream; several batch elements per grid step.
    n_tok = n + 1
    block_b = _choose_batch_block(B, n_tok)
    x_flat = x.reshape(B * n_tok, dim)
    for layer in params["layers"]:
        x_flat = pallas_transformer_layer(x_flat, layer, n_tok=n_tok,
                                          heads=heads, dim_head=dim_head,
                                          block_b=block_b)

    # pool='cls' -> take the cls token
    x_cls = x_flat.reshape(B, n_tok, dim)[:, 0]

    # mlp_head: fused LayerNorm + Linear in Pallas
    logits = pallas_head(x_cls, params["head_g"], params["head_beta"],
                         params["head_w"], params["head_b"])
    # TODO(synk): the PyTorch forward also returns a wall-clock timestamp
    # (timing instrumentation) -- not representable in a kernel; logits only.
    return logits


if __name__ == "__main__":
    image_size = (16, 16)
    patch_size = (4, 4)
    channels = 4
    num_classes = 10
    dim = 32
    depth = 2
    heads = 4
    dim_head = 8
    mlp_dim = 64
    batch = 2

    key = jax.random.PRNGKey(0)
    pkey, xkey = jax.random.split(key)
    params = init_vit_params(
        pkey, image_size=image_size, patch_size=patch_size, channels=channels,
        num_classes=num_classes, dim=dim, depth=depth, heads=heads,
        dim_head=dim_head, mlp_dim=mlp_dim)
    # one-time weight prep (scale fold + bf16 casts) outside the jitted path
    params = prepare_vit_params(params, heads=heads, dim_head=dim_head)
    img = jax.random.normal(xkey, (batch, channels) + image_size,
                            dtype=jnp.float32)

    fwd = jax.jit(functools.partial(vit_forward, patch_size=patch_size,
                                    heads=heads, dim_head=dim_head))
    logits = jax.block_until_ready(fwd(params, img))
    assert logits.shape == (batch, num_classes)
    print("KERNEL_OK")
</pallas_src>

<mosaic_0001>
module attributes {stable_mosaic.version = 11 : i64} {
  func.func @linear_kernel(%arg0: i32, %arg1: memref<32x64xf32, #tpu.memory_space<vmem>>, %arg2: memref<64x32xbf16, #tpu.memory_space<vmem>>, %arg3: memref<1x32xf32, #tpu.memory_space<vmem>>, %arg4: memref<32x32xf32, #tpu.memory_space<vmem>>) attributes {dimension_semantics = [#tpu.dimension_semantics<parallel>], iteration_bounds = array<i64: 1>, scalar_prefetch = 0 : i64, scratch_operands = 0 : i64, tpu.core_type = #tpu.core_type<tc>, window_params = [{transform_indices = @transform_0, window_bounds = array<i64: 32, 64>}, {pipeline_mode = #tpu.pipeline_mode<synchronous>, transform_indices = @transform_1, window_bounds = array<i64: 64, 32>}, {pipeline_mode = #tpu.pipeline_mode<synchronous>, transform_indices = @transform_2, window_bounds = array<i64: 1, 32>}, {transform_indices = @transform_3, window_bounds = array<i64: 32, 32>}]} {
    %c0 = arith.constant 0 : index
    %c0_0 = arith.constant 0 : index
    %0 = vector.load %arg1[%c0, %c0_0] : memref<32x64xf32, #tpu.memory_space<vmem>>, vector<32x64xf32>
    %1 = arith.truncf %0 : vector<32x64xf32> to vector<32x64xbf16>
    %c0_1 = arith.constant 0 : index
    %c0_2 = arith.constant 0 : index
    %2 = vector.load %arg2[%c0_1, %c0_2] : memref<64x32xbf16, #tpu.memory_space<vmem>>, vector<64x32xbf16>
    %cst = arith.constant dense<0.000000e+00> : vector<32x32xf32>
    %3 = tpu.matmul %1, %2, %cst {dimension_numbers = #tpu.dot_dimension_numbers<[1], [0], [0], [1], [0, 0, 1, 1], [], []>} : vector<32x64xbf16>, vector<64x32xbf16>, vector<32x32xf32> -> vector<32x32xf32>
    %c0_3 = arith.constant 0 : index
    %c0_4 = arith.constant 0 : index
    %4 = vector.load %arg3[%c0_3, %c0_4] : memref<1x32xf32, #tpu.memory_space<vmem>>, vector<1x32xf32>
    %5 = vector.broadcast %4 : vector<1x32xf32> to vector<32x32xf32>
    %6 = arith.addf %3, %5 : vector<32x32xf32>
    %c0_5 = arith.constant 0 : index
    %c0_6 = arith.constant 0 : index
    %7 = vector.load %arg4[%c0_5, %c0_6] : memref<32x32xf32, #tpu.memory_space<vmem>>, vector<32x32xf32>
    tpu.vector_store %arg4[%c0_5, %c0_6], %6 {strides = array<i32>} : memref<32x32xf32, #tpu.memory_space<vmem>>, vector<32x32xf32>,
    return
  }
  func.func @transform_0(%arg0: i32) -> (i32, i32) {
    %c0_i32 = arith.constant 0 : i32
    %c0_i32_0 = arith.constant 0 : i32
    return %arg0, %c0_i32 : i32, i32
  }
  func.func @transform_1(%arg0: i32) -> (i32, i32) {
    %c0_i32 = arith.constant 0 : i32
    %c0_i32_0 = arith.constant 0 : i32
    %c0_i32_1 = arith.constant 0 : i32
    return %c0_i32, %c0_i32_0 : i32, i32
  }
  func.func @transform_2(%arg0: i32) -> (i32, i32) {
    %c0_i32 = arith.constant 0 : i32
    %c0_i32_0 = arith.constant 0 : i32
    %c0_i32_1 = arith.constant 0 : i32
    return %c0_i32, %c0_i32_0 : i32, i32
  }
  func.func @transform_3(%arg0: i32) -> (i32, i32) {
    %c0_i32 = arith.constant 0 : i32
    %c0_i32_0 = arith.constant 0 : i32
    return %arg0, %c0_i32 : i32, i32
  }
}

module attributes {stable_mosaic.version = 11 : i64} {
  func.func @transformer_layer_kernel(%arg0: i32, %arg1: memref<34x32xf32, #tpu.memory_space<vmem>>, %arg2: memref<1x32xf32, #tpu.memory_space<vmem>>, %arg3: memref<1x32xf32, #tpu.memory_space<vmem>>, %arg4: memref<32x96xbf16, #tpu.memory_space<vmem>>, %arg5: memref<32x32xbf16, #tpu.memory_space<vmem>>, %arg6: memref<1x32xf32, #tpu.memory_space<vmem>>, %arg7: memref<1x32xf32, #tpu.memory_space<vmem>>, %arg8: memref<1x32xf32, #tpu.memory_space<vmem>>, %arg9: memref<32x64xbf16, #tpu.memory_space<vmem>>, %arg10: memref<1x64xf32, #tpu.memory_space<vmem>>, %arg11: memref<64x32xbf16, #tpu.memory_space<vmem>>, %arg12: memref<1x32xf32, #tpu.memory_space<vmem>>, %arg13: memref<34x32xf32, #tpu.memory_space<vmem>>, %arg14: memref<8x17x8xbf16, #tpu.memory_space<vmem>>, %arg15: memref<8x17x8xbf16, #tpu.memory_space<vmem>>, %arg16: memref<8x17x8xbf16, #tpu.memory_space<vmem>>, %arg17: memref<34x32xbf16, #tpu.memory_space<vmem>>) attributes {dimension_semantics = [#tpu.dimension_semantics<parallel>], iteration_bounds = array<i64: 1>, scalar_prefetch = 0 : i64, scratch_operands = 4 : i64, tpu.core_type = #tpu.core_type<tc>, window_params = [{transform_indices = @transform_0, window_bounds = array<i64: 34, 32>}, {pipeline_mode = #tpu.pipeline_mode<synchronous>, transform_indices = @transform_1, window_bounds = array<i64: 1, 32>}, {pipeline_mode = #tpu.pipeline_mode<synchronous>, transform_indices = @transform_2, window_bounds = array<i64: 1, 32>}, {pipeline_mode = #tpu.pipeline_mode<synchronous>, transform_indices = @transform_3, window_bounds = array<i64: 32, 96>}, {pipeline_mode = #tpu.pipeline_mode<synchronous>, transform_indices = @transform_4, window_bounds = array<i64: 32, 32>}, {pipeline_mode = #tpu.pipeline_mode<synchronous>, transform_indices = @transform_5, window_bounds = array<i64: 1, 32>}, {pipeline_mode = #tpu.pipeline_mode<synchronous>, transform_indices = @transform_6, window_bounds = array<i64: 1, 32>}, {pipeline_mode = #tpu.pipeline_mode<synchronous>, transform_indices = @transform_7, window_bounds = array<i64: 1, 32>}, {pipeline_mode = #tpu.pipeline_mode<synchronous>, transform_indices = @transform_8, window_bounds = array<i64: 32, 64>}, {pipeline_mode = #tpu.pipeline_mode<synchronous>, transform_indices = @transform_9, window_bounds = array<i64: 1, 64>}, {pipeline_mode = #tpu.pipeline_mode<synchronous>, transform_indices = @transform_10, window_bounds = array<i64: 64, 32>}, {pipeline_mode = #tpu.pipeline_mode<synchronous>, transform_indices = @transform_11, window_bounds = array<i64: 1, 32>}, {transform_indices = @transform_12, window_bounds = array<i64: 34, 32>}]} {
    %c0 = arith.constant 0 : index
    %c0_0 = arith.constant 0 : index
    %0 = vector.load %arg1[%c0, %c0_0] : memref<34x32xf32, #tpu.memory_space<vmem>>, vector<34x32xf32>
    %c0_1 = arith.constant 0 : index
    %c0_2 = arith.constant 0 : index
    %1 = vector.load %arg2[%c0_1, %c0_2] : memref<1x32xf32, #tpu.memory_space<vmem>>, vector<1x32xf32>
    %c0_3 = arith.constant 0 : index
    %c0_4 = arith.constant 0 : index
    %2 = vector.load %arg3[%c0_3, %c0_4] : memref<1x32xf32, #tpu.memory_space<vmem>>, vector<1x32xf32>
    %cst = arith.constant dense<0.000000e+00> : vector<34xf32>
    %3 = vector.multi_reduction <add>, %0, %cst [1] : vector<34x32xf32> to vector<34xf32>
    %4 = vector.shape_cast %3 : vector<34xf32> to vector<34x1xf32>
    %5 = arith.mulf %0, %0 : vector<34x32xf32>
    %cst_5 = arith.constant dense<0.000000e+00> : vector<34xf32>
    %6 = vector.multi_reduction <add>, %5, %cst_5 [1] : vector<34x32xf32> to vector<34xf32>
    %7 = vector.shape_cast %6 : vector<34xf32> to vector<34x1xf32>
    %cst_6 = arith.constant 3.125000e-02 : f32
    %8 = vector.broadcast %cst_6 : f32 to vector<34x1xf32>
    %9 = arith.mulf %4, %8 : vector<34x1xf32>
    %cst_7 = arith.constant 3.125000e-02 : f32
    %10 = vector.broadcast %cst_7 : f32 to vector<34x1xf32>
    %11 = arith.mulf %7, %10 : vector<34x1xf32>
    %12 = arith.mulf %9, %9 : vector<34x1xf32>
    %13 = arith.subf %11, %12 : vector<34x1xf32>
    %cst_8 = arith.constant 0.000000e+00 : f32
    %14 = vector.broadcast %cst_8 : f32 to vector<34x1xf32>
    %15 = arith.maximumf %13, %14 : vector<34x1xf32>
    %16 = vector.broadcast %9 : vector<34x1xf32> to vector<34x32xf32>
    %17 = arith.subf %0, %16 : vector<34x32xf32>
    %cst_9 = arith.constant 9.99999974E-6 : f32
    %18 = vector.broadcast %cst_9 : f32 to vector<34x1xf32>
    %19 = arith.addf %15, %18 : vector<34x1xf32>
    %20 = math.rsqrt %19 : vector<34x1xf32>
    %21 = vector.broadcast %20 : vector<34x1xf32> to vector<34x32xf32>
    %22 = arith.mulf %17, %21 : vector<34x32xf32>
    %23 = vector.broadcast %1 : vector<1x32xf32> to vector<34x32xf32>
    %24 = arith.mulf %22, %23 : vector<34x32xf32>
    %25 = vector.broadcast %2 : vector<1x32xf32> to vector<34x32xf32>
    %26 = arith.addf %24, %25 : vector<34x32xf32>
    %27 = arith.truncf %26 : vector<34x32xf32> to vector<34x32xbf16>
    %c0_10 = arith.constant 0 : index
    %c0_11 = arith.constant 0 : index
    %28 = vector.load %arg4[%c0_10, %c0_11] : memref<32x96xbf16, #tpu.memory_space<vmem>>, vector<32x96xbf16>
    %cst_12 = arith.constant dense<0.000000e+00> : vector<34x96xf32>
    %29 = tpu.matmul %27, %28, %cst_12 {dimension_numbers = #tpu.dot_dimension_numbers<[1], [0], [0], [1], [0, 0, 1, 1], [], []>} : vector<34x32xbf16>, vector<32x96xbf16>, vector<34x96xf32> -> vector<34x96xf32>
    %30 = vector.extract_strided_slice %29 {offsets = [0, 0], sizes = [17, 8], strides = [1, 1]} : vector<34x96xf32> to vector<17x8xf32>
    %31 = arith.truncf %30 : vector<17x8xf32> to vector<17x8xbf16>
    %c0_13 = arith.constant 0 : index
    %c0_14 = arith.constant 0 : index
    %c0_15 = arith.constant 0 : index
    %32 = vector.load %arg14[%c0_13, %c0_14, %c0_15] : memref<8x17x8xbf16, #tpu.memory_space<vmem>>, vector<1x17x8xbf16>
    %33 = vector.shape_cast %32 : vector<1x17x8xbf16> to vector<17x8xbf16>
    %34 = vector.shape_cast %31 : vector<17x8xbf16> to vector<1x17x8xbf16>
    tpu.vector_store %arg14[%c0_13, %c0_14, %c0_15], %34 {strides = array<i32>} : memref<8x17x8xbf16, #tpu.memory_space<vmem>>, vector<1x17x8xbf16>,
    %35 = vector.extract_strided_slice %29 {offsets = [0, 32], sizes = [17, 8], strides = [1, 1]} : vector<34x96xf32> to vector<17x8xf32>
    %36 = arith.truncf %35 : vector<17x8xf32> to vector<17x8xbf16>
    %c0_16 = arith.constant 0 : index
    %c0_17 = arith.constant 0 : index
    %c0_18 = arith.constant 0 : index
    %37 = vector.load %arg15[%c0_16, %c0_17, %c0_18] : memref<8x17x8xbf16, #tpu.memory_space<vmem>>, vector<1x17x8xbf16>
    %38 = vector.shape_cast %37 : vector<1x17x8xbf16> to vector<17x8xbf16>
    %39 = vector.shape_cast %36 : vector<17x8xbf16> to vector<1x17x8xbf16>
    tpu.vector_store %arg15[%c0_16, %c0_17, %c0_18], %39 {strides = array<i32>} : memref<8x17x8xbf16, #tpu.memory_space<vmem>>, vector<1x17x8xbf16>,
    %40 = vector.extract_strided_slice %29 {offsets = [0, 64], sizes = [17, 8], strides = [1, 1]} : vector<34x96xf32> to vector<17x8xf32>
    %41 = arith.truncf %40 : vector<17x8xf32> to vector<17x8xbf16>
    %c0_19 = arith.constant 0 : index
    %c0_20 = arith.constant 0 : index
    %c0_21 = arith.constant 0 : index
    %42 = vector.load %arg16[%c0_19, %c0_20, %c0_21] : memref<8x17x8xbf16, #tpu.memory_space<vmem>>, vector<1x17x8xbf16>
    %43 = vector.shape_cast %42 : vector<1x17x8xbf16> to vector<17x8xbf16>
    %44 = vector.shape_cast %41 : vector<17x8xbf16> to vector<1x17x8xbf16>
    tpu.vector_store %arg16[%c0_19, %c0_20, %c0_21], %44 {strides = array<i32>} : memref<8x17x8xbf16, #tpu.memory_space<vmem>>, vector<1x17x8xbf16>,
    %45 = vector.extract_strided_slice %29 {offsets = [0, 8], sizes = [17, 8], strides = [1, 1]} : vector<34x96xf32> to vector<17x8xf32>
    %46 = arith.truncf %45 : vector<17x8xf32> to vector<17x8xbf16>
    %c1 = arith.constant 1 : index
    %c0_22 = arith.constant 0 : index
    %c0_23 = arith.constant 0 : index
    %47 = vector.load %arg14[%c1, %c0_22, %c0_23] : memref<8x17x8xbf16, #tpu.memory_space<vmem>>, vector<1x17x8xbf16>
    %48 = vector.shape_cast %47 : vector<1x17x8xbf16> to vector<17x8xbf16>
    %49 = vector.shape_cast %46 : vector<17x8xbf16> to vector<1x17x8xbf16>
    tpu.vector_store %arg14[%c1, %c0_22, %c0_23], %49 {strides = array<i32>} : memref<8x17x8xbf16, #tpu.memory_space<vmem>>, vector<1x17x8xbf16>,
    %50 = vector.extract_strided_slice %29 {offsets = [0, 40], sizes = [17, 8], strides = [1, 1]} : vector<34x96xf32> to vector<17x8xf32>
    %51 = arith.truncf %50 : vector<17x8xf32> to vector<17x8xbf16>
    %c1_24 = arith.constant 1 : index
    %c0_25 = arith.constant 0 : index
    %c0_26 = arith.constant 0 : index
    %52 = vector.load %arg15[%c1_24, %c0_25, %c0_26] : memref<8x17x8xbf16, #tpu.memory_space<vmem>>, vector<1x17x8xbf16>
    %53 = vector.shape_cast %52 : vector<1x17x8xbf16> to vector<17x8xbf16>
    %54 = vector.shape_cast %51 : vector<17x8xbf16> to vector<1x17x8xbf16>
    tpu.vector_store %arg15[%c1_24, %c0_25, %c0_26], %54 {strides = array<i32>} : memref<8x17x8xbf16, #tpu.memory_space<vmem>>, vector<1x17x8xbf16>,
    %55 = vector.extract_strided_slice %29 {offsets = [0, 72], sizes = [17, 8], strides = [1, 1]} : vector<34x96xf32> to vector<17x8xf32>
    %56 = arith.truncf %55 : vector<17x8xf32> to vector<17x8xbf16>
    %c1_27 = arith.constant 1 : index
    %c0_28 = arith.constant 0 : index
    %c0_29 = arith.constant 0 : index
    %57 = vector.load %arg16[%c1_27, %c0_28, %c0_29] : memref<8x17x8xbf16, #tpu.memory_space<vmem>>, vector<1x17x8xbf16>
    %58 = vector.shape_cast %57 : vector<1x17x8xbf16> to vector<17x8xbf16>
    %59 = vector.shape_cast %56 : vector<17x8xbf16> to vector<1x17x8xbf16>
    tpu.vector_store %arg16[%c1_27, %c0_28, %c0_29], %59 {strides = array<i32>} : memref<8x17x8xbf16, #tpu.memory_space<vmem>>, vector<1x17x8xbf16>,
    %60 = vector.extract_strided_slice %29 {offsets = [0, 16], sizes = [17, 8], strides = [1, 1]} : vector<34x96xf32> to vector<17x8xf32>
    %61 = arith.truncf %60 : vector<17x8xf32> to vector<17x8xbf16>
    %c2 = arith.constant 2 : index
    %c0_30 = arith.constant 0 : index
    %c0_31 = arith.constant 0 : index
    %62 = vector.load %arg14[%c2, %c0_30, %c0_31] : memref<8x17x8xbf16, #tpu.memory_space<vmem>>, vector<1x17x8xbf16>
    %63 = vector.shape_cast %62 : vector<1x17x8xbf16> to vector<17x8xbf16>
    %64 = vector.shape_cast %61 : vector<17x8xbf16> to vector<1x17x8xbf16>
    tpu.vector_store %arg14[%c2, %c0_30, %c0_31], %64 {strides = array<i32>} : memref<8x17x8xbf16, #tpu.memory_space<vmem>>, vector<1x17x8xbf16>,
    %65 = vector.extract_strided_slice %29 {offsets = [0, 48], sizes = [17, 8], strides = [1, 1]} : vector<34x96xf32> to vector<17x8xf32>
    %66 = arith.truncf %65 : vector<17x8xf32> to vector<17x8xbf16>
    %c2_32 = arith.constant 2 : index
    %c0_33 = arith.constant 0 : index
    %c0_34 = arith.constant 0 : index
    %67 = vector.load %arg15[%c2_32, %c0_33, %c0_34] : memref<8x17x8xbf16, #tpu.memory_space<vmem>>, vector<1x17x8xbf16>
    %68 = vector.shape_cast %67 : vector<1x17x8xbf16> to vector<17x8xbf16>
    %69 = vector.shape_cast %66 : vector<17x8xbf16> to vector<1x17x8xbf16>
    tpu.vector_store %arg15[%c2_32, %c0_33, %c0_34], %69 {strides = array<i32>} : memref<8x17x8xbf16, #tpu.memory_space<vmem>>, vector<1x17x8xbf16>,
    %70 = vector.extract_strided_slice %29 {offsets = [0, 80], sizes = [17, 8], strides = [1, 1]} : vector<34x96xf32> to vector<17x8xf32>
    %71 = arith.truncf %70 : vector<17x8xf32> to vector<17x8xbf16>
    %c2_35 = arith.constant 2 : index
    %c0_36 = arith.constant 0 : index
    %c0_37 = arith.constant 0 : index
    %72 = vector.load %arg16[%c2_35, %c0_36, %c0_37] : memref<8x17x8xbf16, #tpu.memory_space<vmem>>, vector<1x17x8xbf16>
    %73 = vector.shape_cast %72 : vector<1x17x8xbf16> to vector<17x8xbf16>
    %74 = vector.shape_cast %71 : vector<17x8xbf16> to vector<1x17x8xbf16>
    tpu.vector_store %arg16[%c2_35, %c0_36, %c0_37], %74 {strides = array<i32>} : memref<8x17x8xbf16, #tpu.memory_space<vmem>>, vector<1x17x8xbf16>,
    %75 = vector.extract_strided_slice %29 {offsets = [0, 24], sizes = [17, 8], strides = [1, 1]} : vector<34x96xf32> to vector<17x8xf32>
    %76 = arith.truncf %75 : vector<17x8xf32> to vector<17x8xbf16>
    %c3 = arith.constant 3 : index
    %c0_38 = arith.constant 0 : index
    %c0_39 = arith.constant 0 : index
    %77 = vector.load %arg14[%c3, %c0_38, %c0_39] : memref<8x17x8xbf16, #tpu.memory_space<vmem>>, vector<1x17x8xbf16>
    %78 = vector.shape_cast %77 : vector<1x17x8xbf16> to vector<17x8xbf16>
    %79 = vector.shape_cast %76 : vector<17x8xbf16> to vector<1x17x8xbf16>
    tpu.vector_store %arg14[%c3, %c0_38, %c0_39], %79 {strides = array<i32>} : memref<8x17x8xbf16, #tpu.memory_space<vmem>>, vector<1x17x8xbf16>,
    %80 = vector.extract_strided_slice %29 {offsets = [0, 56], sizes = [17, 8], strides = [1, 1]} : vector<34x96xf32> to vector<17x8xf32>
    %81 = arith.truncf %80 : vector<17x8xf32> to vector<17x8xbf16>
    %c3_40 = arith.constant 3 : index
    %c0_41 = arith.constant 0 : index
    %c0_42 = arith.constant 0 : index
    %82 = vector.load %arg15[%c3_40, %c0_41, %c0_42] : memref<8x17x8xbf16, #tpu.memory_space<vmem>>, vector<1x17x8xbf16>
    %83 = vector.shape_cast %82 : vector<1x17x8xbf16> to vector<17x8xbf16>
    %84 = vector.shape_cast %81 : vector<17x8xbf16> to vector<1x17x8xbf16>
    tpu.vector_store %arg15[%c3_40, %c0_41, %c0_42], %84 {strides = array<i32>} : memref<8x17x8xbf16, #tpu.memory_space<vmem>>, vector<1x17x8xbf16>,
    %85 = vector.extract_strided_slice %29 {offsets = [0, 88], sizes = [17, 8], strides = [1, 1]} : vector<34x96xf32> to vector<17x8xf32>
    %86 = arith.truncf %85 : vector<17x8xf32> to vector<17x8xbf16>
    %c3_43 = arith.constant 3 : index
    %c0_44 = arith.constant 0 : index
    %c0_45 = arith.constant 0 : index
    %87 = vector.load %arg16[%c3_43, %c0_44, %c0_45] : memref<8x17x8xbf16, #tpu.memory_space<vmem>>, vector<1x17x8xbf16>
    %88 = vector.shape_cast %87 : vector<1x17x8xbf16> to vector<17x8xbf16>
    %89 = vector.shape_cast %86 : vector<17x8xbf16> to vector<1x17x8xbf16>
    tpu.vector_store %arg16[%c3_43, %c0_44, %c0_45], %89 {strides = array<i32>} : memref<8x17x8xbf16, #tpu.memory_space<vmem>>, vector<1x17x8xbf16>,
    %90 = vector.extract_strided_slice %29 {offsets = [17, 0], sizes = [17, 8], strides = [1, 1]} : vector<34x96xf32> to vector<17x8xf32>
    %91 = arith.truncf %90 : vector<17x8xf32> to vector<17x8xbf16>
    %c4 = arith.constant 4 : index
    %c0_46 = arith.constant 0 : index
    %c0_47 = arith.constant 0 : index
    %92 = vector.load %arg14[%c4, %c0_46, %c0_47] : memref<8x17x8xbf16, #tpu.memory_space<vmem>>, vector<1x17x8xbf16>
    %93 = vector.shape_cast %92 : vector<1x17x8xbf16> to vector<17x8xbf16>
    %94 = vector.shape_cast %91 : vector<17x8xbf16> to vector<1x17x8xbf16>
    tpu.vector_store %arg14[%c4, %c0_46, %c0_47], %94 {strides = array<i32>} : memref<8x17x8xbf16, #tpu.memory_space<vmem>>, vector<1x17x8xbf16>,
    %95 = vector.extract_strided_slice %29 {offsets = [17, 32], sizes = [17, 8], strides = [1, 1]} : vector<34x96xf32> to vector<17x8xf32>
    %96 = arith.truncf %95 : vector<17x8xf32> to vector<17x8xbf16>
    %c4_48 = arith.constant 4 : index
    %c0_49 = arith.constant 0 : index
    %c0_50 = arith.constant 0 : index
    %97 = vector.load %arg15[%c4_48, %c0_49, %c0_50] : memref<8x17x8xbf16, #tpu.memory_space<vmem>>, vector<1x17x8xbf16>
    %98 = vector.shape_cast %97 : vector<1x17x8xbf16> to vector<17x8xbf16>
    %99 = vector.shape_cast %96 : vector<17x8xbf16> to vector<1x17x8xbf16>
    tpu.vector_store %arg15[%c4_48, %c0_49, %c0_50], %99 {strides = array<i32>} : memref<8x17x8xbf16, #tpu.memory_space<vmem>>, vector<1x17x8xbf16>,
    %100 = vector.extract_strided_slice %29 {offsets = [17, 64], sizes = [17, 8], strides = [1, 1]} : vector<34x96xf32> to vector<17x8xf32>
    %101 = arith.truncf %100 : vector<17x8xf32> to vector<17x8xbf16>
    %c4_51 = arith.constant 4 : index
    %c0_52 = arith.constant 0 : index
    %c0_53 = arith.constant 0 : index
    %102 = vector.load %arg16[%c4_51, %c0_52, %c0_53] : memref<8x17x8xbf16, #tpu.memory_space<vmem>>, vector<1x17x8xbf16>
    %103 = vector.shape_cast %102 : vector<1x17x8xbf16> to vector<17x8xbf16>
    %104 = vector.shape_cast %101 : vector<17x8xbf16> to vector<1x17x8xbf16>
    tpu.vector_store %arg16[%c4_51, %c0_52, %c0_53], %104 {strides = array<i32>} : memref<8x17x8xbf16, #tpu.memory_space<vmem>>, vector<1x17x8xbf16>,
    %105 = vector.extract_strided_slice %29 {offsets = [17, 8], sizes = [17, 8], strides = [1, 1]} : vector<34x96xf32> to vector<17x8xf32>
    %106 = arith.truncf %105 : vector<17x8xf32> to vector<17x8xbf16>
    %c5 = arith.constant 5 : index
    %c0_54 = arith.constant 0 : index
    %c0_55 = arith.constant 0 : index
    %107 = vector.load %arg14[%c5, %c0_54, %c0_55] : memref<8x17x8xbf16, #tpu.memory_space<vmem>>, vector<1x17x8xbf16>
    %108 = vector.shape_cast %107 : vector<1x17x8xbf16> to vector<17x8xbf16>
    %109 = vector.shape_cast %106 : vector<17x8xbf16> to vector<1x17x8xbf16>
    tpu.vector_store %arg14[%c5, %c0_54, %c0_55], %109 {strides = array<i32>} : memref<8x17x8xbf16, #tpu.memory_space<vmem>>, vector<1x17x8xbf16>,
    %110 = vector.extract_strided_slice %29 {offsets = [17, 40], sizes = [17, 8], strides = [1, 1]} : vector<34x96xf32> to vector<17x8xf32>
    %111 = arith.truncf %110 : vector<17x8xf32> to vector<17x8xbf16>
    %c5_56 = arith.constant 5 : index
    %c0_57 = arith.constant 0 : index
    %c0_58 = arith.constant 0 : index
    %112 = vector.load %arg15[%c5_56, %c0_57, %c0_58] : memref<8x17x8xbf16, #tpu.memory_space<vmem>>, vector<1x17x8xbf16>
    %113 = vector.shape_cast %112 : vector<1x17x8xbf16> to vector<17x8xbf16>
    %114 = vector.shape_cast %111 : vector<17x8xbf16> to vector<1x17x8xbf16>
    tpu.vector_store %arg15[%c5_56, %c0_57, %c0_58], %114 {strides = array<i32>} : memref<8x17x8xbf16, #tpu.memory_space<vmem>>, vector<1x17x8xbf16>,
    %115 = vector.extract_strided_slice %29 {offsets = [17, 72], sizes = [17, 8], strides = [1, 1]} : vector<34x96xf32> to vector<17x8xf32>
    %116 = arith.truncf %115 : vector<17x8xf32> to vector<17x8xbf16>
    %c5_59 = arith.constant 5 : index
    %c0_60 = arith.constant 0 : index
    %c0_61 = arith.constant 0 : index
    %117 = vector.load %arg16[%c5_59, %c0_60, %c0_61] : memref<8x17x8xbf16, #tpu.memory_space<vmem>>, vector<1x17x8xbf16>
    %118 = vector.shape_cast %117 : vector<1x17x8xbf16> to vector<17x8xbf16>
    %119 = vector.shape_cast %116 : vector<17x8xbf16> to vector<1x17x8xbf16>
    tpu.vector_store %arg16[%c5_59, %c0_60, %c0_61], %119 {strides = array<i32>} : memref<8x17x8xbf16, #tpu.memory_space<vmem>>, vector<1x17x8xbf16>,
    %120 = vector.extract_strided_slice %29 {offsets = [17, 16], sizes = [17, 8], strides = [1, 1]} : vector<34x96xf32> to vector<17x8xf32>
    %121 = arith.truncf %120 : vector<17x8xf32> to vector<17x8xbf16>
    %c6 = arith.constant 6 : index
    %c0_62 = arith.constant 0 : index
    %c0_63 = arith.constant 0 : index
    %122 = vector.load %arg14[%c6, %c0_62, %c0_63] : memref<8x17x8xbf16, #tpu.memory_space<vmem>>, vector<1x17x8xbf16>
    %123 = vector.shape_cast %122 : vector<1x17x8xbf16> to vector<17x8xbf16>
    %124 = vector.shape_cast %121 : vector<17x8xbf16> to vector<1x17x8xbf16>
    tpu.vector_store %arg14[%c6, %c0_62, %c0_63], %124 {strides = array<i32>} : memref<8x17x8xbf16, #tpu.memory_space<vmem>>, vector<1x17x8xbf16>,
    %125 = vector.extract_strided_slice %29 {offsets = [17, 48], sizes = [17, 8], strides = [1, 1]} : vector<34x96xf32> to vector<17x8xf32>
    %126 = arith.truncf %125 : vector<17x8xf32> to vector<17x8xbf16>
    %c6_64 = arith.constant 6 : index
    %c0_65 = arith.constant 0 : index
    %c0_66 = arith.constant 0 : index
    %127 = vector.load %arg15[%c6_64, %c0_65, %c0_66] : memref<8x17x8xbf16, #tpu.memory_space<vmem>>, vector<1x17x8xbf16>
    %128 = vector.shape_cast %127 : vector<1x17x8xbf16> to vector<17x8xbf16>
    %129 = vector.shape_cast %126 : vector<17x8xbf16> to vector<1x17x8xbf16>
    tpu.vector_store %arg15[%c6_64, %c0_65, %c0_66], %129 {strides = array<i32>} : memref<8x17x8xbf16, #tpu.memory_space<vmem>>, vector<1x17x8xbf16>,
    %130 = vector.extract_strided_slice %29 {offsets = [17, 80], sizes = [17, 8], strides = [1, 1]} : vector<34x96xf32> to vector<17x8xf32>
    %131 = arith.truncf %130 : vector<17x8xf32> to vector<17x8xbf16>
    %c6_67 = arith.constant 6 : index
    %c0_68 = arith.constant 0 : index
    %c0_69 = arith.constant 0 : index
    %132 = vector.load %arg16[%c6_67, %c0_68, %c0_69] : memref<8x17x8xbf16, #tpu.memory_space<vmem>>, vector<1x17x8xbf16>
    %133 = vector.shape_cast %132 : vector<1x17x8xbf16> to vector<17x8xbf16>
    %134 = vector.shape_cast %131 : vector<17x8xbf16> to vector<1x17x8xbf16>
    tpu.vector_store %arg16[%c6_67, %c0_68, %c0_69], %134 {strides = array<i32>} : memref<8x17x8xbf16, #tpu.memory_space<vmem>>, vector<1x17x8xbf16>,
    %135 = vector.extract_strided_slice %29 {offsets = [17, 24], sizes = [17, 8], strides = [1, 1]} : vector<34x96xf32> to vector<17x8xf32>
    %136 = arith.truncf %135 : vector<17x8xf32> to vector<17x8xbf16>
    %c7 = arith.constant 7 : index
    %c0_70 = arith.constant 0 : index
    %c0_71 = arith.constant 0 : index
    %137 = vector.load %arg14[%c7, %c0_70, %c0_71] : memref<8x17x8xbf16, #tpu.memory_space<vmem>>, vector<1x17x8xbf16>
    %138 = vector.shape_cast %137 : vector<1x17x8xbf16> to vector<17x8xbf16>
    %139 = vector.shape_cast %136 : vector<17x8xbf16> to vector<1x17x8xbf16>
    tpu.vector_store %arg14[%c7, %c0_70, %c0_71], %139 {strides = array<i32>} : memref<8x17x8xbf16, #tpu.memory_space<vmem>>, vector<1x17x8xbf16>,
    %140 = vector.extract_strided_slice %29 {offsets = [17, 56], sizes = [17, 8], strides = [1, 1]} : vector<34x96xf32> to vector<17x8xf32>
    %141 = arith.truncf %140 : vector<17x8xf32> to vector<17x8xbf16>
    %c7_72 = arith.constant 7 : index
    %c0_73 = arith.constant 0 : index
    %c0_74 = arith.constant 0 : index
    %142 = vector.load %arg15[%c7_72, %c0_73, %c0_74] : memref<8x17x8xbf16, #tpu.memory_space<vmem>>, vector<1x17x8xbf16>
    %143 = vector.shape_cast %142 : vector<1x17x8xbf16> to vector<17x8xbf16>
    %144 = vector.shape_cast %141 : vector<17x8xbf16> to vector<1x17x8xbf16>
    tpu.vector_store %arg15[%c7_72, %c0_73, %c0_74], %144 {strides = array<i32>} : memref<8x17x8xbf16, #tpu.memory_space<vmem>>, vector<1x17x8xbf16>,
    %145 = vector.extract_strided_slice %29 {offsets = [17, 88], sizes = [17, 8], strides = [1, 1]} : vector<34x96xf32> to vector<17x8xf32>
    %146 = arith.truncf %145 : vector<17x8xf32> to vector<17x8xbf16>
    %c7_75 = arith.constant 7 : index
    %c0_76 = arith.constant 0 : index
    %c0_77 = arith.constant 0 : index
    %147 = vector.load %arg16[%c7_75, %c0_76, %c0_77] : memref<8x17x8xbf16, #tpu.memory_space<vmem>>, vector<1x17x8xbf16>
    %148 = vector.shape_cast %147 : vector<1x17x8xbf16> to vector<17x8xbf16>
    %149 = vector.shape_cast %146 : vector<17x8xbf16> to vector<1x17x8xbf16>
    tpu.vector_store %arg16[%c7_75, %c0_76, %c0_77], %149 {strides = array<i32>} : memref<8x17x8xbf16, #tpu.memory_space<vmem>>, vector<1x17x8xbf16>,
    %c0_78 = arith.constant 0 : index
    %c0_79 = arith.constant 0 : index
    %c0_80 = arith.constant 0 : index
    %150 = vector.load %arg14[%c0_78, %c0_79, %c0_80] : memref<8x17x8xbf16, #tpu.memory_space<vmem>>, vector<8x17x8xbf16>
    %c0_81 = arith.constant 0 : index
    %c0_82 = arith.constant 0 : index
    %c0_83 = arith.constant 0 : index
    %151 = vector.load %arg15[%c0_81, %c0_82, %c0_83] : memref<8x17x8xbf16, #tpu.memory_space<vmem>>, vector<8x17x8xbf16>
    %c0_84 = arith.constant 0 : index
    %c0_85 = arith.constant 0 : index
    %c0_86 = arith.constant 0 : index
    %152 = vector.load %arg16[%c0_84, %c0_85, %c0_86] : memref<8x17x8xbf16, #tpu.memory_space<vmem>>, vector<8x17x8xbf16>
    "tpu.trace_start"() <{level = 10 : i32, message = "gnd,gmd->gnm"}> : () -> ()
    %cst_87 = arith.constant dense<0.000000e+00> : vector<8x17x17xf32>
    %153 = tpu.matmul %150, %151, %cst_87 {dimension_numbers = #tpu.dot_dimension_numbers<[2], [2], [1], [1], [0, 0, 0, 1, 1, 1], [0], [0]>} : vector<8x17x8xbf16>, vector<8x17x8xbf16>, vector<8x17x17xf32> -> vector<8x17x17xf32>
    "tpu.trace_stop"() : () -> ()
    %cst_88 = arith.constant dense<0xFF800000> : vector<8x17xf32>
    %154 = vector.multi_reduction <maximumf>, %153, %cst_88 [2] : vector<8x17x17xf32> to vector<8x17xf32>
    %155 = vector.shape_cast %154 : vector<8x17xf32> to vector<8x17x1xf32>
    %156 = vector.broadcast %155 : vector<8x17x1xf32> to vector<8x17x17xf32>
    %157 = arith.subf %153, %156 : vector<8x17x17xf32>
    %158 = math.exp %157 : vector<8x17x17xf32>
    %cst_89 = arith.constant dense<0.000000e+00> : vector<8x17xf32>
    %159 = vector.multi_reduction <add>, %158, %cst_89 [2] : vector<8x17x17xf32> to vector<8x17xf32>
    %160 = vector.shape_cast %159 : vector<8x17xf32> to vector<8x17x1xf32>
    %161 = tpu.reciprocal %160 {approx = true} : vector<8x17x1xf32> -> vector<8x17x1xf32>
    %162 = vector.broadcast %161 : vector<8x17x1xf32> to vector<8x17x17xf32>
    %163 = arith.mulf %158, %162 : vector<8x17x17xf32>
    %164 = arith.truncf %163 : vector<8x17x17xf32> to vector<8x17x17xbf16>
    "tpu.trace_start"() <{level = 10 : i32, message = "gnm,gmd->gnd"}> : () -> ()
    %cst_90 = arith.constant dense<0.000000e+00> : vector<8x17x8xf32>
    %165 = tpu.matmul %164, %152, %cst_90 {dimension_numbers = #tpu.dot_dimension_numbers<[2], [1], [1], [2], [0, 0, 0, 1, 1, 2], [0], [0]>} : vector<8x17x17xbf16>, vector<8x17x8xbf16>, vector<8x17x8xf32> -> vector<8x17x8xf32>
    "tpu.trace_stop"() : () -> ()
    %166 = vector.extract_strided_slice %165 {offsets = [0, 0, 0], sizes = [1, 17, 8], strides = [1, 1, 1]} : vector<8x17x8xf32> to vector<1x17x8xf32>
    %167 = vector.shape_cast %166 : vector<1x17x8xf32> to vector<17x8xf32>
    %168 = arith.truncf %167 : vector<17x8xf32> to vector<17x8xbf16>
    %c0_91 = arith.constant 0 : index
    %c0_92 = arith.constant 0 : index
    %169 = vector.load %arg17[%c0_91, %c0_92] : memref<34x32xbf16, #tpu.memory_space<vmem>>, vector<17x8xbf16>
    tpu.vector_store %arg17[%c0_91, %c0_92], %168 {strides = array<i32>} : memref<34x32xbf16, #tpu.memory_space<vmem>>, vector<17x8xbf16>,
    %170 = vector.extract_strided_slice %165 {offsets = [1, 0, 0], sizes = [1, 17, 8], strides = [1, 1, 1]} : vector<8x17x8xf32> to vector<1x17x8xf32>
    %171 = vector.shape_cast %170 : vector<1x17x8xf32> to vector<17x8xf32>
    %172 = arith.truncf %171 : vector<17x8xf32> to vector<17x8xbf16>
    %c0_93 = arith.constant 0 : index
    %c8 = arith.constant 8 : index
    %173 = vector.load %arg17[%c0_93, %c8] : memref<34x32xbf16, #tpu.memory_space<vmem>>, vector<17x8xbf16>
    tpu.vector_store %arg17[%c0_93, %c8], %172 {strides = array<i32>} : memref<34x32xbf16, #tpu.memory_space<vmem>>, vector<17x8xbf16>,
    %174 = vector.extract_strided_slice %165 {offsets = [2, 0, 0], sizes = [1, 17, 8], strides = [1, 1, 1]} : vector<8x17x8xf32> to vector<1x17x8xf32>
    %175 = vector.shape_cast %174 : vector<1x17x8xf32> to vector<17x8xf32>
    %176 = arith.truncf %175 : vector<17x8xf32> to vector<17x8xbf16>
    %c0_94 = arith.constant 0 : index
    %c16 = arith.constant 16 : index
    %177 = vector.load %arg17[%c0_94, %c16] : memref<34x32xbf16, #tpu.memory_space<vmem>>, vector<17x8xbf16>
    tpu.vector_store %arg17[%c0_94, %c16], %176 {strides = array<i32>} : memref<34x32xbf16, #tpu.memory_space<vmem>>, vector<17x8xbf16>,
    %178 = vector.extract_strided_slice %165 {offsets = [3, 0, 0], sizes = [1, 17, 8], strides = [1, 1, 1]} : vector<8x17x8xf32> to vector<1x17x8xf32>
    %179 = vector.shape_cast %178 : vector<1x17x8xf32> to vector<17x8xf32>
    %180 = arith.truncf %179 : vector<17x8xf32> to vector<17x8xbf16>
    %c0_95 = arith.constant 0 : index
    %c24 = arith.constant 24 : index
    %181 = vector.load %arg17[%c0_95, %c24] : memref<34x32xbf16, #tpu.memory_space<vmem>>, vector<17x8xbf16>
    tpu.vector_store %arg17[%c0_95, %c24], %180 {strides = array<i32>} : memref<34x32xbf16, #tpu.memory_space<vmem>>, vector<17x8xbf16>,
    %182 = vector.extract_strided_slice %165 {offsets = [4, 0, 0], sizes = [1, 17, 8], strides = [1, 1, 1]} : vector<8x17x8xf32> to vector<1x17x8xf32>
    %183 = vector.shape_cast %182 : vector<1x17x8xf32> to vector<17x8xf32>
    %184 = arith.truncf %183 : vector<17x8xf32> to vector<17x8xbf16>
    %c17 = arith.constant 17 : index
    %c0_96 = arith.constant 0 : index
    %185 = vector.load %arg17[%c17, %c0_96] : memref<34x32xbf16, #tpu.memory_space<vmem>>, vector<17x8xbf16>
    tpu.vector_store %arg17[%c17, %c0_96], %184 {strides = array<i32>} : memref<34x32xbf16, #tpu.memory_space<vmem>>, vector<17x8xbf16>,
    %186 = vector.extract_strided_slice %165 {offsets = [5, 0, 0], sizes = [1, 17, 8], strides = [1, 1, 1]} : vector<8x17x8xf32> to vector<1x17x8xf32>
    %187 = vector.shape_cast %186 : vector<1x17x8xf32> to vector<17x8xf32>
    %188 = arith.truncf %187 : vector<17x8xf32> to vector<17x8xbf16>
    %c17_97 = arith.constant 17 : index
    %c8_98 = arith.constant 8 : index
    %189 = vector.load %arg17[%c17_97, %c8_98] : memref<34x32xbf16, #tpu.memory_space<vmem>>, vector<17x8xbf16>
    tpu.vector_store %arg17[%c17_97, %c8_98], %188 {strides = array<i32>} : memref<34x32xbf16, #tpu.memory_space<vmem>>, vector<17x8xbf16>,
    %190 = vector.extract_strided_slice %165 {offsets = [6, 0, 0], sizes = [1, 17, 8], strides = [1, 1, 1]} : vector<8x17x8xf32> to vector<1x17x8xf32>
    %191 = vector.shape_cast %190 : vector<1x17x8xf32> to vector<17x8xf32>
    %192 = arith.truncf %191 : vector<17x8xf32> to vector<17x8xbf16>
    %c17_99 = arith.constant 17 : index
    %c16_100 = arith.constant 16 : index
    %193 = vector.load %arg17[%c17_99, %c16_100] : memref<34x32xbf16, #tpu.memory_space<vmem>>, vector<17x8xbf16>
    tpu.vector_store %arg17[%c17_99, %c16_100], %192 {strides = array<i32>} : memref<34x32xbf16, #tpu.memory_space<vmem>>, vector<17x8xbf16>,
    %194 = vector.extract_strided_slice %165 {offsets = [7, 0, 0], sizes = [1, 17, 8], strides = [1, 1, 1]} : vector<8x17x8xf32> to vector<1x17x8xf32>
    %195 = vector.shape_cast %194 : vector<1x17x8xf32> to vector<17x8xf32>
    %196 = arith.truncf %195 : vector<17x8xf32> to vector<17x8xbf16>
    %c17_101 = arith.constant 17 : index
    %c24_102 = arith.constant 24 : index
    %197 = vector.load %arg17[%c17_101, %c24_102] : memref<34x32xbf16, #tpu.memory_space<vmem>>, vector<17x8xbf16>
    tpu.vector_store %arg17[%c17_101, %c24_102], %196 {strides = array<i32>} : memref<34x32xbf16, #tpu.memory_space<vmem>>, vector<17x8xbf16>,
    %c0_103 = arith.constant 0 : index
    %c0_104 = arith.constant 0 : index
    %198 = vector.load %arg17[%c0_103, %c0_104] : memref<34x32xbf16, #tpu.memory_space<vmem>>, vector<34x32xbf16>
    %c0_105 = arith.constant 0 : index
    %c0_106 = arith.constant 0 : index
    %199 = vector.load %arg5[%c0_105, %c0_106] : memref<32x32xbf16, #tpu.memory_space<vmem>>, vector<32x32xbf16>
    %cst_107 = arith.constant dense<0.000000e+00> : vector<34x32xf32>
    %200 = tpu.matmul %198, %199, %cst_107 {dimension_numbers = #tpu.dot_dimension_numbers<[1], [0], [0], [1], [0, 0, 1, 1], [], []>} : vector<34x32xbf16>, vector<32x32xbf16>, vector<34x32xf32> -> vector<34x32xf32>
    %c0_108 = arith.constant 0 : index
    %c0_109 = arith.constant 0 : index
    %201 = vector.load %arg6[%c0_108, %c0_109] : memref<1x32xf32, #tpu.memory_space<vmem>>, vector<1x32xf32>
    %202 = vector.broadcast %201 : vector<1x32xf32> to vector<34x32xf32>
    %203 = arith.addf %200, %202 : vector<34x32xf32>
    %204 = arith.addf %0, %203 : vector<34x32xf32>
    %c0_110 = arith.constant 0 : index
    %c0_111 = arith.constant 0 : index
    %205 = vector.load %arg7[%c0_110, %c0_111] : memref<1x32xf32, #tpu.memory_space<vmem>>, vector<1x32xf32>
    %c0_112 = arith.constant 0 : index
    %c0_113 = arith.constant 0 : index
    %206 = vector.load %arg8[%c0_112, %c0_113] : memref<1x32xf32, #tpu.memory_space<vmem>>, vector<1x32xf32>
    %cst_114 = arith.constant dense<0.000000e+00> : vector<34xf32>
    %207 = vector.multi_reduction <add>, %204, %cst_114 [1] : vector<34x32xf32> to vector<34xf32>
    %208 = vector.shape_cast %207 : vector<34xf32> to vector<34x1xf32>
    %209 = arith.mulf %204, %204 : vector<34x32xf32>
    %cst_115 = arith.constant dense<0.000000e+00> : vector<34xf32>
    %210 = vector.multi_reduction <add>, %209, %cst_115 [1] : vector<34x32xf32> to vector<34xf32>
    %211 = vector.shape_cast %210 : vector<34xf32> to vector<34x1xf32>
    %cst_116 = arith.constant 3.125000e-02 : f32
    %212 = vector.broadcast %cst_116 : f32 to vector<34x1xf32>
    %213 = arith.mulf %208, %212 : vector<34x1xf32>
    %cst_117 = arith.constant 3.125000e-02 : f32
    %214 = vector.broadcast %cst_117 : f32 to vector<34x1xf32>
    %215 = arith.mulf %211, %214 : vector<34x1xf32>
    %216 = arith.mulf %213, %213 : vector<34x1xf32>
    %217 = arith.subf %215, %216 : vector<34x1xf32>
    %cst_118 = arith.constant 0.000000e+00 : f32
    %218 = vector.broadcast %cst_118 : f32 to vector<34x1xf32>
    %219 = arith.maximumf %217, %218 : vector<34x1xf32>
    %220 = vector.broadcast %213 : vector<34x1xf32> to vector<34x32xf32>
    %221 = arith.subf %204, %220 : vector<34x32xf32>
    %cst_119 = arith.constant 9.99999974E-6 : f32
    %222 = vector.broadcast %cst_119 : f32 to vector<34x1xf32>
    %223 = arith.addf %219, %222 : vector<34x1xf32>
    %224 = math.rsqrt %223 : vector<34x1xf32>
    %225 = vector.broadcast %224 : vector<34x1xf32> to vector<34x32xf32>
    %226 = arith.mulf %221, %225 : vector<34x32xf32>
    %227 = vector.broadcast %205 : vector<1x32xf32> to vector<34x32xf32>
    %228 = arith.mulf %226, %227 : vector<34x32xf32>
    %229 = vector.broadcast %206 : vector<1x32xf32> to vector<34x32xf32>
    %230 = arith.addf %228, %229 : vector<34x32xf32>
    %231 = arith.truncf %230 : vector<34x32xf32> to vector<34x32xbf16>
    %c0_120 = arith.constant 0 : index
    %c0_121 = arith.constant 0 : index
    %232 = vector.load %arg9[%c0_120, %c0_121] : memref<32x64xbf16, #tpu.memory_space<vmem>>, vector<32x64xbf16>
    %cst_122 = arith.constant dense<0.000000e+00> : vector<34x64xf32>
    %233 = tpu.matmul %231, %232, %cst_122 {dimension_numbers = #tpu.dot_dimension_numbers<[1], [0], [0], [1], [0, 0, 1, 1], [], []>} : vector<34x32xbf16>, vector<32x64xbf16>, vector<34x64xf32> -> vector<34x64xf32>
    %c0_123 = arith.constant 0 : index
    %c0_124 = arith.constant 0 : index
    %234 = vector.load %arg10[%c0_123, %c0_124] : memref<1x64xf32, #tpu.memory_space<vmem>>, vector<1x64xf32>
    %235 = vector.broadcast %234 : vector<1x64xf32> to vector<34x64xf32>
    %236 = arith.addf %233, %235 : vector<34x64xf32>
    %cst_125 = arith.constant 5.000000e-01 : f32
    %237 = vector.broadcast %cst_125 : f32 to vector<34x64xf32>
    %238 = arith.mulf %237, %236 : vector<34x64xf32>
    %cst_126 = arith.constant 4.471500e-02 : f32
    %239 = vector.broadcast %cst_126 : f32 to vector<34x64xf32>
    %240 = arith.mulf %239, %236 : vector<34x64xf32>
    %241 = arith.mulf %240, %236 : vector<34x64xf32>
    %242 = arith.mulf %241, %236 : vector<34x64xf32>
    %243 = arith.addf %236, %242 : vector<34x64xf32>
    %cst_127 = arith.constant 0.797884583 : f32
    %244 = vector.broadcast %cst_127 : f32 to vector<34x64xf32>
    %245 = arith.mulf %244, %243 : vector<34x64xf32>
    %246 = math.tanh %245 : vector<34x64xf32>
    %cst_128 = arith.constant 1.000000e+00 : f32
    %247 = vector.broadcast %cst_128 : f32 to vector<34x64xf32>
    %248 = arith.addf %247, %246 : vector<34x64xf32>
    %249 = arith.mulf %238, %248 : vector<34x64xf32>
    %250 = arith.truncf %249 : vector<34x64xf32> to vector<34x64xbf16>
    %c0_129 = arith.constant 0 : index
    %c0_130 = arith.constant 0 : index
    %251 = vector.load %arg11[%c0_129, %c0_130] : memref<64x32xbf16, #tpu.memory_space<vmem>>, vector<64x32xbf16>
    %cst_131 = arith.constant dense<0.000000e+00> : vector<34x32xf32>
    %252 = tpu.matmul %250, %251, %cst_131 {dimension_numbers = #tpu.dot_dimension_numbers<[1], [0], [0], [1], [0, 0, 1, 1], [], []>} : vector<34x64xbf16>, vector<64x32xbf16>, vector<34x32xf32> -> vector<34x32xf32>
    %c0_132 = arith.constant 0 : index
    %c0_133 = arith.constant 0 : index
    %253 = vector.load %arg12[%c0_132, %c0_133] : memref<1x32xf32, #tpu.memory_space<vmem>>, vector<1x32xf32>
    %254 = vector.broadcast %253 : vector<1x32xf32> to vector<34x32xf32>
    %255 = arith.addf %252, %254 : vector<34x32xf32>
    %256 = arith.addf %204, %255 : vector<34x32xf32>
    %c0_134 = arith.constant 0 : index
    %c0_135 = arith.constant 0 : index
    %257 = vector.load %arg13[%c0_134, %c0_135] : memref<34x32xf32, #tpu.memory_space<vmem>>, vector<34x32xf32>
    tpu.vector_store %arg13[%c0_134, %c0_135], %256 {strides = array<i32>} : memref<34x32xf32, #tpu.memory_space<vmem>>, vector<34x32xf32>,
    return
  }
  func.func @transform_0(%arg0: i32) -> (i32, i32) {
    %c0_i32 = arith.constant 0 : i32
    %c0_i32_0 = arith.constant 0 : i32
    return %arg0, %c0_i32 : i32, i32
  }
  func.func @transform_1(%arg0: i32) -> (i32, i32) {
    %c0_i32 = arith.constant 0 : i32
    %c0_i32_0 = arith.constant 0 : i32
    %c0_i32_1 = arith.constant 0 : i32
    return %c0_i32, %c0_i32_0 : i32, i32
  }
  func.func @transform_2(%arg0: i32) -> (i32, i32) {
    %c0_i32 = arith.constant 0 : i32
    %c0_i32_0 = arith.constant 0 : i32
    %c0_i32_1 = arith.constant 0 : i32
    return %c0_i32, %c0_i32_0 : i32, i32
  }
  func.func @transform_3(%arg0: i32) -> (i32, i32) {
    %c0_i32 = arith.constant 0 : i32
    %c0_i32_0 = arith.constant 0 : i32
    %c0_i32_1 = arith.constant 0 : i32
    return %c0_i32, %c0_i32_0 : i32, i32
  }
  func.func @transform_4(%arg0: i32) -> (i32, i32) {
    %c0_i32 = arith.constant 0 : i32
    %c0_i32_0 = arith.constant 0 : i32
    %c0_i32_1 = arith.constant 0 : i32
    return %c0_i32, %c0_i32_0 : i32, i32
  }
  func.func @transform_5(%arg0: i32) -> (i32, i32) {
    %c0_i32 = arith.constant 0 : i32
    %c0_i32_0 = arith.constant 0 : i32
    %c0_i32_1 = arith.constant 0 : i32
    return %c0_i32, %c0_i32_0 : i32, i32
  }
  func.func @transform_6(%arg0: i32) -> (i32, i32) {
    %c0_i32 = arith.constant 0 : i32
    %c0_i32_0 = arith.constant 0 : i32
    %c0_i32_1 = arith.constant 0 : i32
    return %c0_i32, %c0_i32_0 : i32, i32
  }
  func.func @transform_7(%arg0: i32) -> (i32, i32) {
    %c0_i32 = arith.constant 0 : i32
    %c0_i32_0 = arith.constant 0 : i32
    %c0_i32_1 = arith.constant 0 : i32
    return %c0_i32, %c0_i32_0 : i32, i32
  }
  func.func @transform_8(%arg0: i32) -> (i32, i32) {
    %c0_i32 = arith.constant 0 : i32
    %c0_i32_0 = arith.constant 0 : i32
    %c0_i32_1 = arith.constant 0 : i32
    return %c0_i32, %c0_i32_0 : i32, i32
  }
  func.func @transform_9(%arg0: i32) -> (i32, i32) {
    %c0_i32 = arith.constant 0 : i32
    %c0_i32_0 = arith.constant 0 : i32
    %c0_i32_1 = arith.constant 0 : i32
    return %c0_i32, %c0_i32_0 : i32, i32
  }
  func.func @transform_10(%arg0: i32) -> (i32, i32) {
    %c0_i32 = arith.constant 0 : i32
    %c0_i32_0 = arith.constant 0 : i32
    %c0_i32_1 = arith.constant 0 : i32
    return %c0_i32, %c0_i32_0 : i32, i32
  }
  func.func @transform_11(%arg0: i32) -> (i32, i32) {
    %c0_i32 = arith.constant 0 : i32
    %c0_i32_0 = arith.constant 0 : i32
    %c0_i32_1 = arith.constant 0 : i32
    return %c0_i32, %c0_i32_0 : i32, i32
  }
  func.func @transform_12(%arg0: i32) -> (i32, i32) {
    %c0_i32 = arith.constant 0 : i32
    %c0_i32_0 = arith.constant 0 : i32
    return %arg0, %c0_i32 : i32, i32
  }
}

module attributes {stable_mosaic.version = 11 : i64} {
  func.func @head_kernel(%arg0: memref<2x32xf32, #tpu.memory_space<vmem>>, %arg1: memref<1x32xf32, #tpu.memory_space<vmem>>, %arg2: memref<1x32xf32, #tpu.memory_space<vmem>>, %arg3: memref<32x10xbf16, #tpu.memory_space<vmem>>, %arg4: memref<1x10xf32, #tpu.memory_space<vmem>>, %arg5: memref<2x10xf32, #tpu.memory_space<vmem>>) attributes {dimension_semantics = [], scalar_prefetch = 0 : i64, scratch_operands = 0 : i64, tpu.core_type = #tpu.core_type<tc>} {
    %c0 = arith.constant 0 : index
    %c0_0 = arith.constant 0 : index
    %0 = vector.load %arg0[%c0, %c0_0] : memref<2x32xf32, #tpu.memory_space<vmem>>, vector<2x32xf32>
    %c0_1 = arith.constant 0 : index
    %c0_2 = arith.constant 0 : index
    %1 = vector.load %arg1[%c0_1, %c0_2] : memref<1x32xf32, #tpu.memory_space<vmem>>, vector<1x32xf32>
    %c0_3 = arith.constant 0 : index
    %c0_4 = arith.constant 0 : index
    %2 = vector.load %arg2[%c0_3, %c0_4] : memref<1x32xf32, #tpu.memory_space<vmem>>, vector<1x32xf32>
    %cst = arith.constant dense<0.000000e+00> : vector<2xf32>
    %3 = vector.multi_reduction <add>, %0, %cst [1] : vector<2x32xf32> to vector<2xf32>
    %4 = vector.shape_cast %3 : vector<2xf32> to vector<2x1xf32>
    %5 = arith.mulf %0, %0 : vector<2x32xf32>
    %cst_5 = arith.constant dense<0.000000e+00> : vector<2xf32>
    %6 = vector.multi_reduction <add>, %5, %cst_5 [1] : vector<2x32xf32> to vector<2xf32>
    %7 = vector.shape_cast %6 : vector<2xf32> to vector<2x1xf32>
    %cst_6 = arith.constant 3.125000e-02 : f32
    %8 = vector.broadcast %cst_6 : f32 to vector<2x1xf32>
    %9 = arith.mulf %4, %8 : vector<2x1xf32>
    %cst_7 = arith.constant 3.125000e-02 : f32
    %10 = vector.broadcast %cst_7 : f32 to vector<2x1xf32>
    %11 = arith.mulf %7, %10 : vector<2x1xf32>
    %12 = arith.mulf %9, %9 : vector<2x1xf32>
    %13 = arith.subf %11, %12 : vector<2x1xf32>
    %cst_8 = arith.constant 0.000000e+00 : f32
    %14 = vector.broadcast %cst_8 : f32 to vector<2x1xf32>
    %15 = arith.maximumf %13, %14 : vector<2x1xf32>
    %16 = vector.broadcast %9 : vector<2x1xf32> to vector<2x32xf32>
    %17 = arith.subf %0, %16 : vector<2x32xf32>
    %cst_9 = arith.constant 9.99999974E-6 : f32
    %18 = vector.broadcast %cst_9 : f32 to vector<2x1xf32>
    %19 = arith.addf %15, %18 : vector<2x1xf32>
    %20 = math.rsqrt %19 : vector<2x1xf32>
    %21 = vector.broadcast %20 : vector<2x1xf32> to vector<2x32xf32>
    %22 = arith.mulf %17, %21 : vector<2x32xf32>
    %23 = vector.broadcast %1 : vector<1x32xf32> to vector<2x32xf32>
    %24 = arith.mulf %22, %23 : vector<2x32xf32>
    %25 = vector.broadcast %2 : vector<1x32xf32> to vector<2x32xf32>
    %26 = arith.addf %24, %25 : vector<2x32xf32>
    %27 = arith.truncf %26 : vector<2x32xf32> to vector<2x32xbf16>
    %c0_10 = arith.constant 0 : index
    %c0_11 = arith.constant 0 : index
    %28 = vector.load %arg3[%c0_10, %c0_11] : memref<32x10xbf16, #tpu.memory_space<vmem>>, vector<32x10xbf16>
    %cst_12 = arith.constant dense<0.000000e+00> : vector<2x10xf32>
    %29 = tpu.matmul %27, %28, %cst_12 {dimension_numbers = #tpu.dot_dimension_numbers<[1], [0], [0], [1], [0, 0, 1, 1], [], []>} : vector<2x32xbf16>, vector<32x10xbf16>, vector<2x10xf32> -> vector<2x10xf32>
    %c0_13 = arith.constant 0 : index
    %c0_14 = arith.constant 0 : index
    %30 = vector.load %arg4[%c0_13, %c0_14] : memref<1x10xf32, #tpu.memory_space<vmem>>, vector<1x10xf32>
    %31 = vector.broadcast %30 : vector<1x10xf32> to vector<2x10xf32>
    %32 = arith.addf %29, %31 : vector<2x10xf32>
    %c0_15 = arith.constant 0 : index
    %c0_16 = arith.constant 0 : index
    %33 = vector.load %arg5[%c0_15, %c0_16] : memref<2x10xf32, #tpu.memory_space<vmem>>, vector<2x10xf32>
    tpu.vector_store %arg5[%c0_15, %c0_16], %32 {strides = array<i32>} : memref<2x10xf32, #tpu.memory_space<vmem>>, vector<2x10xf32>,
    return
  }
}

</mosaic_0001>

<llo_original>
// kernel: vit_forward.4
$region0: #{vit_forward.4}
  #allocation0 [shape = 'u32[]', space=smem, size = 0x4, offset = 0x4, fixed_abs, tag = 'smem constant byte address 0x4 - core index']
  #allocation1 [shape = 'u32[72,128]{1,0:T(1,128)}', space=vmem, size = 0x9000, scoped, tag = 'internal scratch']
  %s0 = inlined_call_operand.vmem [shape: f32[32,64], index: 0, kind: input, shape index: {}]
  %s1 = inlined_call_operand.vmem [shape: bf16[64,32], index: 1, kind: input, shape index: {}]
  %s2 = inlined_call_operand.vmem [shape: f32[1,32], index: 2, kind: input, shape index: {}]
  %s3 = inlined_call_operand.vmem [shape: f32[32,32], index: 3, kind: output, shape index: {}]
  %s4 = sld [smem:[#allocation0]]
  $region22: #{vit_forward.4} parent=0
    _
  %s6 = ssub.s32 1, %s4
  %s7 = scalar_select 0, %s6, %s4
  // Predicated region
  $region2: #{vit_forward.4} parent=0 // pred_check
    _
  $region3: #{vit_forward.4} parent=0 // pred_check_branch
    %9 = sbr.rel (0) target = $region5
  $region4: #{vit_forward.4} parent=0 // pred_region
    _
  $region5: #{vit_forward.4} parent=0 // pred_fallthru
    _
  // Predicated region
  $region6: #{vit_forward.4} parent=0 // pred_check
    _
  $region7: #{vit_forward.4} parent=0 // pred_check_branch
    %11 = sbr.rel (0) target = $region9
  $region8: #{vit_forward.4} parent=0 // pred_region
    _
  $region9: #{vit_forward.4} parent=0 // pred_fallthru
    _
  // Predicated region
  $region10: #{vit_forward.4} parent=0 // pred_check
    _
  $region11: #{vit_forward.4} parent=0 // pred_check_branch
    %13 = sbr.rel (0) target = $region13
  $region12: #{vit_forward.4} parent=0 // pred_region
    _
  $region13: #{vit_forward.4} parent=0 // pred_fallthru
    _
  %v15 = vld [vmem:[%s0] sm:$0xff]
  %v16 = vld [vmem:[%s0 + $0x8] sm:$0xff]
  %v17 = vld [vmem:[%s0 + $0x10] sm:$0xff]
  %v18 = vld [vmem:[%s0 + $0x18] sm:$0xff]
  %v19 = vpack.c.bf16 %v16, %v15
  %v20 = vpack.c.bf16 %v18, %v17
  %v21 = vld [vmem:[%s1] sm:$0xf]
  %v22 = vld [vmem:[%s1 + $0x4] sm:$0xf]
  %v23 = vld [vmem:[%s1 + $0x8] sm:$0xf]
  %v24 = vld [vmem:[%s1 + $0xc] sm:$0xf]
  %v25 = vld [vmem:[%s1 + $0x10] sm:$0xf]
  %v26 = vld [vmem:[%s1 + $0x14] sm:$0xf]
  %v27 = vld [vmem:[%s1 + $0x18] sm:$0xf]
  %v28 = vld [vmem:[%s1 + $0x1c] sm:$0xf]
  %v29 = vld [vmem:[%s2] sm:$0x1]
  %v31 = vperm.slane %v29, 0
  %v41 = vunpack.c.l.b16 %v21
  %v42 = vunpack.c.l.b16 %v22
  %v43 = vunpack.c.l.b16 %v23
  %v44 = vunpack.c.l.b16 %v24
  %v45 = vunpack.c.l.b16 %v25
  %v46 = vunpack.c.l.b16 %v26
  %v47 = vunpack.c.l.b16 %v27
  %v48 = vunpack.c.l.b16 %v28
  %v49 = vpack.c.b16 %v42, %v41
  %v50 = vpack.c.b16 %v44, %v43
  %v51 = vpack.c.b16 %v46, %v45
  %v52 = vpack.c.b16 %v48, %v47
  %vm57 = vcmask 523264
  %v59 = vsel %vm57, %v19, 0
  %v62 = vsel %vm57, %v20, 0
  %64 = vmatpush.bf16.msra.mxu0 0
  %65 = vmatpush.bf16.msra.mxu0 0
  %66 = vmatpush.bf16.msra.mxu0 0
  %67 = vmatpush.bf16.msra.mxu0 0
  %68 = vmatpush.bf16.msra.mxu0 %v52
  %69 = vmatpush.bf16.msra.mxu0 %v51
  %70 = vmatpush.bf16.msra.mxu0 %v50
  %71 = vmatpush.bf16.msra.mxu0 %v49
  %72 = vmatmul.bf16.gmra.mxu0 %v59
  %v73 = vpop.f32.mrf.mxu0
  %v74 = vadd.f32 %v31, %v73
  %v75 = vpop.f32.mrf.mxu0
  %v76 = vadd.f32 %v31, %v75
  %77 = vmatmul.bf16.gmra.mxu0 %v62
  %v78 = vpop.f32.mrf.mxu0
  %v79 = vadd.f32 %v31, %v78
  %v80 = vpop.f32.mrf.mxu0
  %v81 = vadd.f32 %v31, %v80
  %82 = vdwg.mxu0
  %vm83 = vcmask 261120
  %84 = vst.msk [vmem:[%s3] sm:$0xff] %vm83, %v74
  %85 = vst.msk [vmem:[%s3 + $0x8] sm:$0xff] %vm83, %v76
  %86 = vst.msk [vmem:[%s3 + $0x10] sm:$0xff] %vm83, %v79
  %87 = vst.msk [vmem:[%s3 + $0x18] sm:$0xff] %vm83, %v81
  // Predicated region
  $region14: #{vit_forward.4} parent=0 // pred_check
    _
  $region15: #{vit_forward.4} parent=0 // pred_check_branch
    %89 = sbr.rel (0) target = $region17
  $region16: #{vit_forward.4} parent=0 // pred_region
    _
  $region17: #{vit_forward.4} parent=0 // pred_fallthru
    _
  // Predicated region
  $region18: #{vit_forward.4} parent=0 // pred_check
    _
  $region19: #{vit_forward.4} parent=0 // pred_check_branch
    %91 = sbr.rel (0) target = $region21
  $region20: #{vit_forward.4} parent=0 // pred_region
    _
  $region21: #{vit_forward.4} parent=0 // pred_fallthru
    _

// kernel: vit_forward.7
$region0: #{vit_forward.7}
  #allocation0 [shape = 'u32[]', space=smem, size = 0x4, offset = 0x4, fixed_abs, tag = 'smem constant byte address 0x4 - core index']
  #allocation1 [shape = 'u32[72,128]{1,0:T(1,128)}', space=vmem, size = 0x9000, scoped, tag = 'internal scratch']
  %s0 = inlined_call_operand.vmem [shape: f32[2,32], index: 0, kind: input, shape index: {}]
  %s1 = inlined_call_operand.vmem [shape: f32[1,32], index: 1, kind: input, shape index: {}]
  %s2 = inlined_call_operand.vmem [shape: f32[1,32], index: 2, kind: input, shape index: {}]
  %s3 = inlined_call_operand.vmem [shape: bf16[32,10], index: 3, kind: input, shape index: {}]
  %s4 = inlined_call_operand.vmem [shape: f32[1,10], index: 4, kind: input, shape index: {}]
  %s5 = inlined_call_operand.hbm [shape: f32[2,10], index: 5, kind: output, shape index: {}]
  %s6 = sld [smem:[#allocation0]]
  $region30: #{vit_forward.7} parent=0
    _
  %s8 = ssub.s32 1, %s6
  %s9 = scalar_select 0, %s8, %s6
  $region1: #{vit_forward.7} parent=0
    #allocation2 [shape = 'u8[1024]{0}', space=vmem, size = 0x400, scoped, tag = 'output window, operand 0, single buffered']
    #allocation3 [shape = 's32[1]{0}', space=sflag, size = 0x4, scoped, tag = 'scoped memory for vit_forward.7']
    %10 = vsyncpa [#allocation3], 0
    // Predicated region
    $region2: #{vit_forward.7} parent=1 // pred_check
      _
    $region3: #{vit_forward.7} parent=1 // pred_check_branch
      %12 = sbr.rel (0) target = $region5
    $region4: #{vit_forward.7} parent=1 // pred_region
      _
    $region5: #{vit_forward.7} parent=1 // pred_fallthru
      _
    // Predicated region
    $region6: #{vit_forward.7} parent=1 // pred_check
      _
    $region7: #{vit_forward.7} parent=1 // pred_check_branch
      %14 = sbr.rel (0) target = $region9
    $region8: #{vit_forward.7} parent=1 // pred_region
      _
    $region9: #{vit_forward.7} parent=1 // pred_fallthru
      _
    // Predicated region
    $region10: #{vit_forward.7} parent=1 // pred_check
      _
    $region11: #{vit_forward.7} parent=1 // pred_check_branch
      %16 = sbr.rel (0) target = $region13
    $region12: #{vit_forward.7} parent=1 // pred_region
      _
    $region13: #{vit_forward.7} parent=1 // pred_fallthru
      _
    // Predicated region
    $region14: #{vit_forward.7} parent=1 // pred_check
      _
    $region15: #{vit_forward.7} parent=1 // pred_check_branch
      %18 = sbr.rel (0) target = $region17
    $region16: #{vit_forward.7} parent=1 // pred_region
      _
    $region17: #{vit_forward.7} parent=1 // pred_fallthru
      _
    // Predicated region
    $region18: #{vit_forward.7} parent=1 // pred_check
      _
    $region19: #{vit_forward.7} parent=1 // pred_check_branch
      %20 = sbr.rel (0) target = $region21
    $region20: #{vit_forward.7} parent=1 // pred_region
      _
    $region21: #{vit_forward.7} parent=1 // pred_fallthru
      _
    %v22 = vld [vmem:[%s0] sm:$0x3]
    %v23 = vld [vmem:[%s1] sm:$0x1]
    %v24 = vld [vmem:[%s2] sm:$0x1]
    %vm25 = vcmask 254976
    %v26 = vsel %vm25, %v22, 0.0
    %27 = vadd.xlane.f32.xlu0 %v26
    %v28 = vpop.xlane.xlu0 %27
    %v29 = vmul.f32 %v22, %v22
    %v30 = vsel %vm25, %v29, 0.0
    %31 = vadd.xlane.f32.xlu0 %v30
    %v32 = vpop.xlane.xlu0 %31
    %v33 = vmul.f32 %v28, 0.03125
    %v34 = vmul.f32 %v32, 0.03125
    %v35 = vmul.f32 %v33, %v33
    %v36 = vsub.f32 %v34, %v35
    %v37 = vmax.f32 %v36, 0.0
    %v38 = vsub.f32 %v22, %v33
    %v39 = vadd.f32 %v37, 1e-05
    %v40 = vrsqrt.pop %v39
    %v41 = vmul.f32 %v40, %v39
    %v42 = vmul.f32 %v41, %v40
    %v43 = vmul.f32 0.5, %v42
    %v44 = vsub.f32 1.5, %v43
    %v45 = vmul.f32 %v40, %v44
    %vm46 = vweird.f32 %v39
    %vm47 = vweird.f32 %v40
    %vm48 = vmor %vm46, %vm47
    %v49 = vsel %vm48, %v40, %v45
    %v50 = vmul.f32 %v38, %v49
    %v52 = vperm.slane %v23, 0
    %v54 = vmul.f32 %v50, %v52
    %v56 = vperm.slane %v24, 0
    %v58 = vadd.f32 %v54, %v56
    %v59 = vpack.c.bf16 %v58, %v58
    %v60 = vld [vmem:[%s3] sm:$0xf]
    %v61 = vld [vmem:[%s3 + $0x4] sm:$0xf]
    %v62 = vld [vmem:[%s3 + $0x8] sm:$0xf]
    %v63 = vld [vmem:[%s3 + $0xc] sm:$0xf]
    %v64 = vld [vmem:[%s4] sm:$0x1]
    %v66 = vperm.slane %v64, 0
    %v72 = vunpack.c.l.b16 %v60
    %v73 = vunpack.c.l.b16 %v61
    %v74 = vunpack.c.l.b16 %v62
    %v75 = vunpack.c.l.b16 %v63
    %v76 = vpack.c.b16 %v73, %v72
    %v77 = vpack.c.b16 %v75, %v74
    %vm80 = vcmask 261120
    %v82 = vsel %vm80, %v59, 0
    %84 = vmatpush.bf16.msra.mxu0 0
    %85 = vmatpush.bf16.msra.mxu0 0
    %86 = vmatpush.bf16.msra.mxu0 0
    %87 = vmatpush.bf16.msra.mxu0 0
    %88 = vmatpush.bf16.msra.mxu0 0
    %89 = vmatpush.bf16.msra.mxu0 0
    %90 = vmatpush.bf16.msra.mxu0 %v77
    %91 = vmatpush.bf16.msra.mxu0 %v76
    %92 = vmatmul.bf16.gmra.mxu0 %v82
    %v93 = vpop.f32.mrf.mxu0
    %v94 = vadd.f32 %v66, %v93
    %v95 = vpop.f32.mrf.mxu0
    %96 = vdwg.mxu0
    %vm97 = vcmask 74752
    %98 = vst.msk [vmem:[#allocation2] sm:$0x3] %vm97, %v94
    // Predicated region
    $region22: #{vit_forward.7} parent=1 // pred_check
      _
    $region23: #{vit_forward.7} parent=1 // pred_check_branch
      %100 = sbr.rel (0) target = $region25
    $region24: #{vit_forward.7} parent=1 // pred_region
      %102 = vsyncadd [#allocation3], 0
      %s104 = sshll.u32 [#allocation2], 4
      %s105 = int_to_ptr.vmem [resolvable:$true] %s104
      %s106 = sshll.u32 %s5, 4
      %s107 = int_to_ptr.hbm [resolvable:$true] %s106
      %109 = dma.vmem_to_hbm [thread:$0]  %s105, 32, %s107, [#allocation3]
    $region25: #{vit_forward.7} parent=1 // pred_fallthru
      _
    // Predicated region
    $region26: #{vit_forward.7} parent=1 // pred_check
      _
    $region27: #{vit_forward.7} parent=1 // pred_check_branch
      %111 = sbr.rel (0) target = $region29
    $region28: #{vit_forward.7} parent=1 // pred_region
      %113 = dma.done [#allocation3], 32
    $region29: #{vit_forward.7} parent=1 // pred_fallthru
      _
    %114 = vsyncpa [#allocation3], 1

// kernel: vit_forward.5
$region0: #{vit_forward.5}
  #allocation0 [shape = 'u32[]', space=smem, size = 0x4, offset = 0x4, fixed_abs, tag = 'smem constant byte address 0x4 - core index']
  #allocation1 [shape = 'u32[72,128]{1,0:T(1,128)}', space=vmem, size = 0x9000, scoped, tag = 'internal scratch']
  #allocation2 [shape = 'bf16[8,17,8]{2,1,0:T(8,128)(2,1)}', space=vmem, size = 0xc000, scoped, tag = 'scratch operand']
  #allocation3 [shape = 'bf16[8,17,8]{2,1,0:T(8,128)(2,1)}', space=vmem, size = 0xc000, scoped, tag = 'scratch operand']
  #allocation4 [shape = 'bf16[8,17,8]{2,1,0:T(8,128)(2,1)}', space=vmem, size = 0xc000, scoped, tag = 'scratch operand']
  #allocation5 [shape = 'bf16[34,32]{1,0:T(8,128)(2,1)}', space=vmem, size = 0x2800, scoped, tag = 'scratch operand']
  %s0 = inlined_call_operand.vmem [shape: f32[34,32], index: 0, kind: input, shape index: {}, may-alias: {0,12}]
  %s1 = inlined_call_operand.vmem [shape: f32[1,32], index: 1, kind: input, shape index: {}]
  %s2 = inlined_call_operand.vmem [shape: f32[1,32], index: 2, kind: input, shape index: {}]
  %s3 = inlined_call_operand.vmem [shape: bf16[32,96], index: 3, kind: input, shape index: {}]
  %s4 = inlined_call_operand.vmem [shape: bf16[32,32], index: 4, kind: input, shape index: {}]
  %s5 = inlined_call_operand.vmem [shape: f32[1,32], index: 5, kind: input, shape index: {}]
  %s6 = inlined_call_operand.vmem [shape: f32[1,32], index: 6, kind: input, shape index: {}]
  %s7 = inlined_call_operand.vmem [shape: f32[1,32], index: 7, kind: input, shape index: {}]
  %s8 = inlined_call_operand.vmem [shape: bf16[32,64], index: 8, kind: input, shape index: {}]
  %s9 = inlined_call_operand.vmem [shape: f32[1,64], index: 9, kind: input, shape index: {}]
  %s10 = inlined_call_operand.vmem [shape: bf16[64,32], index: 10, kind: input, shape index: {}]
  %s11 = inlined_call_operand.vmem [shape: f32[1,32], index: 11, kind: input, shape index: {}]
  %s12 = inlined_call_operand.vmem [shape: f32[34,32], index: 12, kind: output, shape index: {}, may-alias: {0,12}]
  %s13 = sld [smem:[#allocation0]]
  $region58: #{vit_forward.5} parent=0
    _
  %s15 = ssub.s32 1, %s13
  %s16 = scalar_select 0, %s15, %s13
  // Predicated region
  $region2: #{vit_forward.5} parent=0 // pred_check
    _
  $region3: #{vit_forward.5} parent=0 // pred_check_branch
    %18 = sbr.rel (0) target = $region5
  $region4: #{vit_forward.5} parent=0 // pred_region
    _
  $region5: #{vit_forward.5} parent=0 // pred_fallthru
    _
  // Predicated region
  $region6: #{vit_forward.5} parent=0 // pred_check
    _
  $region7: #{vit_forward.5} parent=0 // pred_check_branch
    %20 = sbr.rel (0) target = $region9
  $region8: #{vit_forward.5} parent=0 // pred_region
    _
  $region9: #{vit_forward.5} parent=0 // pred_fallthru
    _
  // Predicated region
  $region10: #{vit_forward.5} parent=0 // pred_check
    _
  $region11: #{vit_forward.5} parent=0 // pred_check_branch
    %22 = sbr.rel (0) target = $region13
  $region12: #{vit_forward.5} parent=0 // pred_region
    _
  $region13: #{vit_forward.5} parent=0 // pred_fallthru
    _
  // Predicated region
  $region14: #{vit_forward.5} parent=0 // pred_check
    _
  $region15: #{vit_forward.5} parent=0 // pred_check_branch
    %24 = sbr.rel (0) target = $region17
  $region16: #{vit_forward.5} parent=0 // pred_region
    _
  $region17: #{vit_forward.5} parent=0 // pred_fallthru
    _
  // Predicated region
  $region18: #{vit_forward.5} parent=0 // pred_check
    _
  $region19: #{vit_forward.5} parent=0 // pred_check_branch
    %26 = sbr.rel (0) target = $region21
  $region20: #{vit_forward.5} parent=0 // pred_region
    _
  $region21: #{vit_forward.5} parent=0 // pred_fallthru
    _
  // Predicated region
  $region22: #{vit_forward.5} parent=0 // pred_check
    _
  $region23: #{vit_forward.5} parent=0 // pred_check_branch
    %28 = sbr.rel (0) target = $region25
  $region24: #{vit_forward.5} parent=0 // pred_region
    _
  $region25: #{vit_forward.5} parent=0 // pred_fallthru
    _
  // Predicated region
  $region26: #{vit_forward.5} parent=0 // pred_check
    _
  $region27: #{vit_forward.5} parent=0 // pred_check_branch
    %30 = sbr.rel (0) target = $region29
  $region28: #{vit_forward.5} parent=0 // pred_region
    _
  $region29: #{vit_forward.5} parent=0 // pred_fallthru
    _
  // Predicated region
  $region30: #{vit_forward.5} parent=0 // pred_check
    _
  $region31: #{vit_forward.5} parent=0 // pred_check_branch
    %32 = sbr.rel (0) target = $region33
  $region32: #{vit_forward.5} parent=0 // pred_region
    _
  $region33: #{vit_forward.5} parent=0 // pred_fallthru
    _
  // Predicated region
  $region34: #{vit_forward.5} parent=0 // pred_check
    _
  $region35: #{vit_forward.5} parent=0 // pred_check_branch
    %34 = sbr.rel (0) target = $region37
  $region36: #{vit_forward.5} parent=0 // pred_region
    _
  $region37: #{vit_forward.5} parent=0 // pred_fallthru
    _
  // Predicated region
  $region38: #{vit_forward.5} parent=0 // pred_check
    _
  $region39: #{vit_forward.5} parent=0 // pred_check_branch
    %36 = sbr.rel (0) target = $region41
  $region40: #{vit_forward.5} parent=0 // pred_region
    _
  $region41: #{vit_forward.5} parent=0 // pred_fallthru
    _
  // Predicated region
  $region42: #{vit_forward.5} parent=0 // pred_check
    _
  $region43: #{vit_forward.5} parent=0 // pred_check_branch
    %38 = sbr.rel (0) target = $region45
  $region44: #{vit_forward.5} parent=0 // pred_region
    _
  $region45: #{vit_forward.5} parent=0 // pred_fallthru
    _
  // Predicated region
  $region46: #{vit_forward.5} parent=0 // pred_check
    _
  $region47: #{vit_forward.5} parent=0 // pred_check_branch
    %40 = sbr.rel (0) target = $region49
  $region48: #{vit_forward.5} parent=0 // pred_region
    _
  $region49: #{vit_forward.5} parent=0 // pred_fallthru
    _
  %v42 = vld [vmem:[%s0] sm:$0xff]
  %v43 = vld [vmem:[%s0 + $0x8] sm:$0xff]
  %v44 = vld [vmem:[%s0 + $0x10] sm:$0xff]
  %v45 = vld [vmem:[%s0 + $0x18] sm:$0xff]
  %v46 = vld [vmem:[%s0 + $0x20] sm:$0x3]
  %v47 = vld [vmem:[%s1] sm:$0x1]
  %v48 = vld [vmem:[%s2] sm:$0x1]
  %vm49 = vcmask 261120
  %v50 = vsel %vm49, %v42, 0.0
  %51 = vadd.xlane.f32.xlu0 %v50
  %v52 = vpop.xlane.xlu0 %51
  %v53 = vsel %vm49, %v43, 0.0
  %54 = vadd.xlane.f32.xlu0 %v53
  %v55 = vpop.xlane.xlu0 %54
  %v56 = vsel %vm49, %v44, 0.0
  %57 = vadd.xlane.f32.xlu0 %v56
  %v58 = vpop.xlane.xlu0 %57
  %v59 = vsel %vm49, %v45, 0.0
  %60 = vadd.xlane.f32.xlu0 %v59
  %v61 = vpop.xlane.xlu0 %60
  %vm62 = vcmask 254976
  %v63 = vsel %vm62, %v46, 0.0
  %64 = vadd.xlane.f32.xlu0 %v63
  %v65 = vpop.xlane.xlu0 %64
  %v66 = vmul.f32 %v42, %v42
  %v67 = vmul.f32 %v43, %v43
  %v68 = vmul.f32 %v44, %v44
  %v69 = vmul.f32 %v45, %v45
  %v70 = vmul.f32 %v46, %v46
  %v71 = vsel %vm49, %v66, 0.0
  %72 = vadd.xlane.f32.xlu0 %v71
  %v73 = vpop.xlane.xlu0 %72
  %v74 = vsel %vm49, %v67, 0.0
  %75 = vadd.xlane.f32.xlu0 %v74
  %v76 = vpop.xlane.xlu0 %75
  %v77 = vsel %vm49, %v68, 0.0
  %78 = vadd.xlane.f32.xlu0 %v77
  %v79 = vpop.xlane.xlu0 %78
  %v80 = vsel %vm49, %v69, 0.0
  %81 = vadd.xlane.f32.xlu0 %v80
  %v82 = vpop.xlane.xlu0 %81
  %v83 = vsel %vm62, %v70, 0.0
  %84 = vadd.xlane.f32.xlu0 %v83
  %v85 = vpop.xlane.xlu0 %84
  %v86 = vmul.f32 %v52, 0.03125
  %v87 = vmul.f32 %v55, 0.03125
  %v88 = vmul.f32 %v58, 0.03125
  %v89 = vmul.f32 %v61, 0.03125
  %v90 = vmul.f32 %v65, 0.03125
  %v91 = vmul.f32 %v73, 0.03125
  %v92 = vmul.f32 %v76, 0.03125
  %v93 = vmul.f32 %v79, 0.03125
  %v94 = vmul.f32 %v82, 0.03125
  %v95 = vmul.f32 %v85, 0.03125
  %v96 = vmul.f32 %v86, %v86
  %v97 = vmul.f32 %v87, %v87
  %v98 = vmul.f32 %v88, %v88
  %v99 = vmul.f32 %v89, %v89
  %v100 = vmul.f32 %v90, %v90
  %v101 = vsub.f32 %v91, %v96
  %v102 = vsub.f32 %v92, %v97
  %v103 = vsub.f32 %v93, %v98
  %v104 = vsub.f32 %v94, %v99
  %v105 = vsub.f32 %v95, %v100
  %v106 = vmax.f32 %v101, 0.0
  %v107 = vmax.f32 %v102, 0.0
  %v108 = vmax.f32 %v103, 0.0
  %v109 = vmax.f32 %v104, 0.0
  %v110 = vmax.f32 %v105, 0.0
  %v111 = vsub.f32 %v42, %v86
  %v112 = vsub.f32 %v43, %v87
  %v113 = vsub.f32 %v44, %v88
  %v114 = vsub.f32 %v45, %v89
  %v115 = vsub.f32 %v46, %v90
  %v116 = vadd.f32 %v106, 1e-05
  %v117 = vadd.f32 %v107, 1e-05
  %v118 = vadd.f32 %v108, 1e-05
  %v119 = vadd.f32 %v109, 1e-05
  %v120 = vadd.f32 %v110, 1e-05
  %v121 = vrsqrt.pop %v116
  %v122 = vmul.f32 %v121, %v116
  %v123 = vmul.f32 %v122, %v121
  %v124 = vmul.f32 0.5, %v123
  %v125 = vsub.f32 1.5, %v124
  %v126 = vmul.f32 %v121, %v125
  %vm127 = vweird.f32 %v116
  %vm128 = vweird.f32 %v121
  %vm129 = vmor %vm127, %vm128
  %v130 = vsel %vm129, %v121, %v126
  %v131 = vrsqrt.pop %v117
  %v132 = vmul.f32 %v131, %v117
  %v133 = vmul.f32 %v132, %v131
  %v134 = vmul.f32 0.5, %v133
  %v135 = vsub.f32 1.5, %v134
  %v136 = vmul.f32 %v131, %v135
  %vm137 = vweird.f32 %v117
  %vm138 = vweird.f32 %v131
  %vm139 = vmor %vm137, %vm138
  %v140 = vsel %vm139, %v131, %v136
  %v141 = vrsqrt.pop %v118
  %v142 = vmul.f32 %v141, %v118
  %v143 = vmul.f32 %v142, %v141
  %v144 = vmul.f32 0.5, %v143
  %v145 = vsub.f32 1.5, %v144
  %v146 = vmul.f32 %v141, %v145
  %vm147 = vweird.f32 %v118
  %vm148 = vweird.f32 %v141
  %vm149 = vmor %vm147, %vm148
  %v150 = vsel %vm149, %v141, %v146
  %v151 = vrsqrt.pop %v119
  %v152 = vmul.f32 %v151, %v119
  %v153 = vmul.f32 %v152, %v151
  %v154 = vmul.f32 0.5, %v153
  %v155 = vsub.f32 1.5, %v154
  %v156 = vmul.f32 %v151, %v155
  %vm157 = vweird.f32 %v119
  %vm158 = vweird.f32 %v151
  %vm159 = vmor %vm157, %vm158
  %v160 = vsel %vm159, %v151, %v156
  %v161 = vrsqrt.pop %v120
  %v162 = vmul.f32 %v161, %v120
  %v163 = vmul.f32 %v162, %v161
  %v164 = vmul.f32 0.5, %v163
  %v165 = vsub.f32 1.5, %v164
  %v166 = vmul.f32 %v161, %v165
  %vm167 = vweird.f32 %v120
  %vm168 = vweird.f32 %v161
  %vm169 = vmor %vm167, %vm168
  %v170 = vsel %vm169, %v161, %v166
  %v171 = vmul.f32 %v111, %v130
  %v172 = vmul.f32 %v112, %v140
  %v173 = vmul.f32 %v113, %v150
  %v174 = vmul.f32 %v114, %v160
  %v175 = vmul.f32 %v115, %v170
  %v177 = vperm.slane %v47, 0
  %v179 = vmul.f32 %v171, %v177
  %v180 = vmul.f32 %v172, %v177
  %v181 = vmul.f32 %v173, %v177
  %v182 = vmul.f32 %v174, %v177
  %v183 = vmul.f32 %v175, %v177
  %v185 = vperm.slane %v48, 0
  %v187 = vadd.f32 %v179, %v185
  %v188 = vadd.f32 %v180, %v185
  %v189 = vadd.f32 %v181, %v185
  %v190 = vadd.f32 %v182, %v185
  %v191 = vadd.f32 %v183, %v185
  %v192 = vpack.c.bf16 %v188, %v187
  %v193 = vpack.c.bf16 %v190, %v189
  %v194 = vpack.c.bf16 %v191, %v191
  %v195 = vld [vmem:[%s3] sm:$0xf]
  %v196 = vld [vmem:[%s3 + $0x4] sm:$0xf]
  %v197 = vld [vmem:[%s3 + $0x8] sm:$0xf]
  %v198 = vld [vmem:[%s3 + $0xc] sm:$0xf]
  %v203 = vunpack.c.l.b16 %v195
  %v204 = vunpack.c.l.b16 %v196
  %v205 = vunpack.c.l.b16 %v197
  %v206 = vunpack.c.l.b16 %v198
  %v207 = vpack.c.b16 %v204, %v203
  %v208 = vpack.c.b16 %v206, %v205
  %v212 = vsel %vm49, %v192, 0
  %v215 = vsel %vm49, %v193, 0
  %v218 = vsel %vm49, %v194, 0
  %220 = vmatpush.bf16.msra.mxu0 0
  %221 = vmatpush.bf16.msra.mxu0 0
  %222 = vmatpush.bf16.msra.mxu0 0
  %223 = vmatpush.bf16.msra.mxu0 0
  %224 = vmatpush.bf16.msra.mxu0 0
  %225 = vmatpush.bf16.msra.mxu0 0
  %226 = vmatpush.bf16.msra.mxu0 %v208
  %227 = vmatpush.bf16.msra.mxu0 %v207
  %228 = vmatmul.bf16.gmra.mxu0 %v212
  %v229 = vpop.f32.mrf.mxu0
  %v230 = vadd.f32 0.0, %v229
  %v231 = vpop.f32.mrf.mxu0
  %v232 = vadd.f32 0.0, %v231
  %233 = vmatmul.bf16.gmra.mxu0 %v215
  %v234 = vpop.f32.mrf.mxu0
  %v235 = vadd.f32 0.0, %v234
  %v236 = vpop.f32.mrf.mxu0
  %v237 = vadd.f32 0.0, %v236
  %238 = vmatmul.bf16.gmra.mxu0 %v218
  %v239 = vpop.f32.mrf.mxu0
  %v240 = vadd.f32 0.0, %v239
  %v241 = vpop.f32.mrf.mxu0
  %242 = vdwg.mxu0
  %v243 = vpack.c.bf16 %v230, %v230
  %v244 = vpack.c.bf16 %v232, %v232
  %v245 = vpack.c.bf16 %v235, %v235
  %vm246 = vcmask 60416
  %247 = vst.msk [vmem:[#allocation2] sm:$0xf] %vm246, %v243
  %248 = vst.msk [vmem:[#allocation2 + $0x4] sm:$0xf] %vm246, %v244
  %vm249 = vcmask 57344
  %vm250 = vsmask.f32 256
  %vm251 = vmand %vm249, %vm250
  %v252 = vld [vmem:[#allocation2 + $0x8] sm:$0x1]
  %v253 = vsel %vm251, %v245, %v252
  %254 = vst [vmem:[#allocation2 + $0x8] sm:$0x1] %v253
  %258 = vrot.lane.b32.xlu0 %v243, 96
  %v259 = vpop.permute.xlu0 %258
  %260 = vrot.lane.b32.xlu0 %v244, 96
  %v261 = vpop.permute.xlu0 %260
  %262 = vrot.lane.b32.xlu0 %v245, 96
  %v263 = vpop.permute.xlu0 %262
  %267 = vst.msk [vmem:[#allocation3] sm:$0xf] %vm246, %v259
  %268 = vst.msk [vmem:[#allocation3 + $0x4] sm:$0xf] %vm246, %v261
  %v269 = vld [vmem:[#allocation3 + $0x8] sm:$0x1]
  %v270 = vsel %vm251, %v263, %v269
  %271 = vst [vmem:[#allocation3 + $0x8] sm:$0x1] %v270
  %272 = vrot.lane.b32.xlu0 %v243, 64
  %v273 = vpop.permute.xlu0 %272
  %274 = vrot.lane.b32.xlu0 %v244, 64
  %v275 = vpop.permute.xlu0 %274
  %276 = vrot.lane.b32.xlu0 %v245, 64
  %v277 = vpop.permute.xlu0 %276
  %281 = vst.msk [vmem:[#allocation4] sm:$0xf] %vm246, %v273
  %282 = vst.msk [vmem:[#allocation4 + $0x4] sm:$0xf] %vm246, %v275
  %v283 = vld [vmem:[#allocation4 + $0x8] sm:$0x1]
  %v284 = vsel %vm251, %v277, %v283
  %285 = vst [vmem:[#allocation4 + $0x8] sm:$0x1] %v284
  %286 = vrot.lane.b32.xlu0 %v243, 120
  %v287 = vpop.permute.xlu0 %286
  %288 = vrot.lane.b32.xlu0 %v244, 120
  %v289 = vpop.permute.xlu0 %288
  %290 = vrot.lane.b32.xlu0 %v245, 120
  %v291 = vpop.permute.xlu0 %290
  %s295 = scalar_lea.vmem [#allocation2], 12
  %296 = vst.msk [vmem:[%s295] sm:$0xf] %vm246, %v287
  %297 = vst.msk [vmem:[%s295 + $0x4] sm:$0xf] %vm246, %v289
  %v298 = vld [vmem:[%s295 + $0x8] sm:$0x1]
  %v299 = vsel %vm251, %v291, %v298
  %300 = vst [vmem:[%s295 + $0x8] sm:$0x1] %v299
  %301 = vrot.lane.b32.xlu0 %v243, 88
  %v302 = vpop.permute.xlu0 %301
  %303 = vrot.lane.b32.xlu0 %v244, 88
  %v304 = vpop.permute.xlu0 %303
  %305 = vrot.lane.b32.xlu0 %v245, 88
  %v306 = vpop.permute.xlu0 %305
  %s310 = scalar_lea.vmem [#allocation3], 12
  %311 = vst.msk [vmem:[%s310] sm:$0xf] %vm246, %v302
  %312 = vst.msk [vmem:[%s310 + $0x4] sm:$0xf] %vm246, %v304
  %v313 = vld [vmem:[%s310 + $0x8] sm:$0x1]
  %v314 = vsel %vm251, %v306, %v313
  %315 = vst [vmem:[%s310 + $0x8] sm:$0x1] %v314
  %316 = vrot.lane.b32.xlu0 %v243, 56
  %v317 = vpop.permute.xlu0 %316
  %318 = vrot.lane.b32.xlu0 %v244, 56
  %v319 = vpop.permute.xlu0 %318
  %320 = vrot.lane.b32.xlu0 %v245, 56
  %v321 = vpop.permute.xlu0 %320
  %s325 = scalar_lea.vmem [#allocation4], 12
  %326 = vst.msk [vmem:[%s325] sm:$0xf] %vm246, %v317
  %327 = vst.msk [vmem:[%s325 + $0x4] sm:$0xf] %vm246, %v319
  %v328 = vld [vmem:[%s325 + $0x8] sm:$0x1]
  %v329 = vsel %vm251, %v321, %v328
  %330 = vst [vmem:[%s325 + $0x8] sm:$0x1] %v329
  %331 = vrot.lane.b32.xlu0 %v243, 112
  %v332 = vpop.permute.xlu0 %331
  %333 = vrot.lane.b32.xlu0 %v244, 112
  %v334 = vpop.permute.xlu0 %333
  %335 = vrot.lane.b32.xlu0 %v245, 112
  %v336 = vpop.permute.xlu0 %335
  %s340 = scalar_lea.vmem [#allocation2], 24
  %341 = vst.msk [vmem:[%s340] sm:$0xf] %vm246, %v332
  %342 = vst.msk [vmem:[%s340 + $0x4] sm:$0xf] %vm246, %v334
  %v343 = vld [vmem:[%s340 + $0x8] sm:$0x1]
  %v344 = vsel %vm251, %v336, %v343
  %345 = vst [vmem:[%s340 + $0x8] sm:$0x1] %v344
  %346 = vrot.lane.b32.xlu0 %v243, 80
  %v347 = vpop.permute.xlu0 %346
  %348 = vrot.lane.b32.xlu0 %v244, 80
  %v349 = vpop.permute.xlu0 %348
  %350 = vrot.lane.b32.xlu0 %v245, 80
  %v351 = vpop.permute.xlu0 %350
  %s355 = scalar_lea.vmem [#allocation3], 24
  %356 = vst.msk [vmem:[%s355] sm:$0xf] %vm246, %v347
  %357 = vst.msk [vmem:[%s355 + $0x4] sm:$0xf] %vm246, %v349
  %v358 = vld [vmem:[%s355 + $0x8] sm:$0x1]
  %v359 = vsel %vm251, %v351, %v358
  %360 = vst [vmem:[%s355 + $0x8] sm:$0x1] %v359
  %361 = vrot.lane.b32.xlu0 %v243, 48
  %v362 = vpop.permute.xlu0 %361
  %363 = vrot.lane.b32.xlu0 %v244, 48
  %v364 = vpop.permute.xlu0 %363
  %365 = vrot.lane.b32.xlu0 %v245, 48
  %v366 = vpop.permute.xlu0 %365
  %s370 = scalar_lea.vmem [#allocation4], 24
  %371 = vst.msk [vmem:[%s370] sm:$0xf] %vm246, %v362
  %372 = vst.msk [vmem:[%s370 + $0x4] sm:$0xf] %vm246, %v364
  %v373 = vld [vmem:[%s370 + $0x8] sm:$0x1]
  %v374 = vsel %vm251, %v366, %v373
  %375 = vst [vmem:[%s370 + $0x8] sm:$0x1] %v374
  %376 = vrot.lane.b32.xlu0 %v243, 104
  %v377 = vpop.permute.xlu0 %376
  %378 = vrot.lane.b32.xlu0 %v244, 104
  %v379 = vpop.permute.xlu0 %378
  %380 = vrot.lane.b32.xlu0 %v245, 104
  %v381 = vpop.permute.xlu0 %380
  %s385 = scalar_lea.vmem [#allocation2], 36
  %386 = vst.msk [vmem:[%s385] sm:$0xf] %vm246, %v377
  %387 = vst.msk [vmem:[%s385 + $0x4] sm:$0xf] %vm246, %v379
  %v388 = vld [vmem:[%s385 + $0x8] sm:$0x1]
  %v389 = vsel %vm251, %v381, %v388
  %390 = vst [vmem:[%s385 + $0x8] sm:$0x1] %v389
  %391 = vrot.lane.b32.xlu0 %v243, 72
  %v392 = vpop.permute.xlu0 %391
  %393 = vrot.lane.b32.xlu0 %v244, 72
  %v394 = vpop.permute.xlu0 %393
  %395 = vrot.lane.b32.xlu0 %v245, 72
  %v396 = vpop.permute.xlu0 %395
  %s400 = scalar_lea.vmem [#allocation3], 36
  %401 = vst.msk [vmem:[%s400] sm:$0xf] %vm246, %v392
  %402 = vst.msk [vmem:[%s400 + $0x4] sm:$0xf] %vm246, %v394
  %v403 = vld [vmem:[%s400 + $0x8] sm:$0x1]
  %v404 = vsel %vm251, %v396, %v403
  %405 = vst [vmem:[%s400 + $0x8] sm:$0x1] %v404
  %406 = vrot.lane.b32.xlu0 %v243, 40
  %v407 = vpop.permute.xlu0 %406
  %408 = vrot.lane.b32.xlu0 %v244, 40
  %v409 = vpop.permute.xlu0 %408
  %410 = vrot.lane.b32.xlu0 %v245, 40
  %v411 = vpop.permute.xlu0 %410
  %s415 = scalar_lea.vmem [#allocation4], 36
  %416 = vst.msk [vmem:[%s415] sm:$0xf] %vm246, %v407
  %417 = vst.msk [vmem:[%s415 + $0x4] sm:$0xf] %vm246, %v409
  %v418 = vld [vmem:[%s415 + $0x8] sm:$0x1]
  %v419 = vsel %vm251, %v411, %v418
  %420 = vst [vmem:[%s415 + $0x8] sm:$0x1] %v419
  %v421 = vpack.c.bf16 %v237, %v237
  %v422 = vpack.c.bf16 %v240, %v240
  %vm423 = vsmask.f32 3328
  %vm424 = vsmask.f32 7440
  %vm425 = vmor %vm423, %vm424
  %v427 = vshrl.u32 %v245, 16
  %v429 = vrot.slane %v427, 4
  %v430 = vshll.u32 %v245, 16
  %v432 = vrot.slane %v430, 5
  %v433 = vor.u32 %v429, %v432
  %v434 = vrot.slane %v433, 4
  %v436 = vshll.u32 %v421, 16
  %v438 = vrot.slane %v436, 5
  %v439 = vsel %vm425, %v434, %v438
  %v440 = vshrl.u32 %v421, 16
  %v442 = vrot.slane %v440, 4
  %v443 = vor.u32 %v442, %v438
  %v444 = vrot.slane %v443, 4
  %v446 = vshll.u32 %v422, 16
  %v448 = vrot.slane %v446, 5
  %v449 = vsel %vm425, %v444, %v448
  %v450 = vshrl.u32 %v422, 16
  %v452 = vrot.slane %v450, 4
  %v453 = vrot.slane %v452, 4
  %s457 = scalar_lea.vmem [#allocation2], 48
  %458 = vst.msk [vmem:[%s457] sm:$0xf] %vm246, %v439
  %459 = vst.msk [vmem:[%s457 + $0x4] sm:$0xf] %vm246, %v449
  %v460 = vld [vmem:[%s457 + $0x8] sm:$0x1]
  %v461 = vsel %vm251, %v453, %v460
  %462 = vst [vmem:[%s457 + $0x8] sm:$0x1] %v461
  %463 = vrot.lane.b32.xlu0 %v439, 96
  %v464 = vpop.permute.xlu0 %463
  %465 = vrot.lane.b32.xlu0 %v449, 96
  %v466 = vpop.permute.xlu0 %465
  %467 = vrot.lane.b32.xlu0 %v453, 96
  %v468 = vpop.permute.xlu0 %467
  %s472 = scalar_lea.vmem [#allocation3], 48
  %473 = vst.msk [vmem:[%s472] sm:$0xf] %vm246, %v464
  %474 = vst.msk [vmem:[%s472 + $0x4] sm:$0xf] %vm246, %v466
  %v475 = vld [vmem:[%s472 + $0x8] sm:$0x1]
  %v476 = vsel %vm251, %v468, %v475
  %477 = vst [vmem:[%s472 + $0x8] sm:$0x1] %v476
  %478 = vrot.lane.b32.xlu0 %v439, 64
  %v479 = vpop.permute.xlu0 %478
  %480 = vrot.lane.b32.xlu0 %v449, 64
  %v481 = vpop.permute.xlu0 %480
  %482 = vrot.lane.b32.xlu0 %v453, 64
  %v483 = vpop.permute.xlu0 %482
  %s487 = scalar_lea.vmem [#allocation4], 48
  %488 = vst.msk [vmem:[%s487] sm:$0xf] %vm246, %v479
  %489 = vst.msk [vmem:[%s487 + $0x4] sm:$0xf] %vm246, %v481
  %v490 = vld [vmem:[%s487 + $0x8] sm:$0x1]
  %v491 = vsel %vm251, %v483, %v490
  %492 = vst [vmem:[%s487 + $0x8] sm:$0x1] %v491
  %493 = vrot.lane.b32.xlu0 %v439, 120
  %v494 = vpop.permute.xlu0 %493
  %495 = vrot.lane.b32.xlu0 %v449, 120
  %v496 = vpop.permute.xlu0 %495
  %497 = vrot.lane.b32.xlu0 %v453, 120
  %v498 = vpop.permute.xlu0 %497
  %s502 = scalar_lea.vmem [#allocation2], 60
  %503 = vst.msk [vmem:[%s502] sm:$0xf] %vm246, %v494
  %504 = vst.msk [vmem:[%s502 + $0x4] sm:$0xf] %vm246, %v496
  %v505 = vld [vmem:[%s502 + $0x8] sm:$0x1]
  %v506 = vsel %vm251, %v498, %v505
  %507 = vst [vmem:[%s502 + $0x8] sm:$0x1] %v506
  %508 = vrot.lane.b32.xlu0 %v439, 88
  %v509 = vpop.permute.xlu0 %508
  %510 = vrot.lane.b32.xlu0 %v449, 88
  %v511 = vpop.permute.xlu0 %510
  %512 = vrot.lane.b32.xlu0 %v453, 88
  %v513 = vpop.permute.xlu0 %512
  %s517 = scalar_lea.vmem [#allocation3], 60
  %518 = vst.msk [vmem:[%s517] sm:$0xf] %vm246, %v509
  %519 = vst.msk [vmem:[%s517 + $0x4] sm:$0xf] %vm246, %v511
  %v520 = vld [vmem:[%s517 + $0x8] sm:$0x1]
  %v521 = vsel %vm251, %v513, %v520
  %522 = vst [vmem:[%s517 + $0x8] sm:$0x1] %v521
  %523 = vrot.lane.b32.xlu0 %v439, 56
  %v524 = vpop.permute.xlu0 %523
  %525 = vrot.lane.b32.xlu0 %v449, 56
  %v526 = vpop.permute.xlu0 %525
  %527 = vrot.lane.b32.xlu0 %v453, 56
  %v528 = vpop.permute.xlu0 %527
  %s532 = scalar_lea.vmem [#allocation4], 60
  %533 = vst.msk [vmem:[%s532] sm:$0xf] %vm246, %v524
  %534 = vst.msk [vmem:[%s532 + $0x4] sm:$0xf] %vm246, %v526
  %v535 = vld [vmem:[%s532 + $0x8] sm:$0x1]
  %v536 = vsel %vm251, %v528, %v535
  %537 = vst [vmem:[%s532 + $0x8] sm:$0x1] %v536
  %538 = vrot.lane.b32.xlu0 %v439, 112
  %v539 = vpop.permute.xlu0 %538
  %540 = vrot.lane.b32.xlu0 %v449, 112
  %v541 = vpop.permute.xlu0 %540
  %542 = vrot.lane.b32.xlu0 %v453, 112
  %v543 = vpop.permute.xlu0 %542
  %s547 = scalar_lea.vmem [#allocation2], 72
  %548 = vst.msk [vmem:[%s547] sm:$0xf] %vm246, %v539
  %549 = vst.msk [vmem:[%s547 + $0x4] sm:$0xf] %vm246, %v541
  %v550 = vld [vmem:[%s547 + $0x8] sm:$0x1]
  %v551 = vsel %vm251, %v543, %v550
  %552 = vst [vmem:[%s547 + $0x8] sm:$0x1] %v551
  %553 = vrot.lane.b32.xlu0 %v439, 80
  %v554 = vpop.permute.xlu0 %553
  %555 = vrot.lane.b32.xlu0 %v449, 80
  %v556 = vpop.permute.xlu0 %555
  %557 = vrot.lane.b32.xlu0 %v453, 80
  %v558 = vpop.permute.xlu0 %557
  %s562 = scalar_lea.vmem [#allocation3], 72
  %563 = vst.msk [vmem:[%s562] sm:$0xf] %vm246, %v554
  %564 = vst.msk [vmem:[%s562 + $0x4] sm:$0xf] %vm246, %v556
  %v565 = vld [vmem:[%s562 + $0x8] sm:$0x1]
  %v566 = vsel %vm251, %v558, %v565
  %567 = vst [vmem:[%s562 + $0x8] sm:$0x1] %v566
  %568 = vrot.lane.b32.xlu0 %v439, 48
  %v569 = vpop.permute.xlu0 %568
  %570 = vrot.lane.b32.xlu0 %v449, 48
  %v571 = vpop.permute.xlu0 %570
  %572 = vrot.lane.b32.xlu0 %v453, 48
  %v573 = vpop.permute.xlu0 %572
  %s577 = scalar_lea.vmem [#allocation4], 72
  %578 = vst.msk [vmem:[%s577] sm:$0xf] %vm246, %v569
  %579 = vst.msk [vmem:[%s577 + $0x4] sm:$0xf] %vm246, %v571
  %v580 = vld [vmem:[%s577 + $0x8] sm:$0x1]
  %v581 = vsel %vm251, %v573, %v580
  %582 = vst [vmem:[%s577 + $0x8] sm:$0x1] %v581
  %583 = vrot.lane.b32.xlu0 %v439, 104
  %v584 = vpop.permute.xlu0 %583
  %585 = vrot.lane.b32.xlu0 %v449, 104
  %v586 = vpop.permute.xlu0 %585
  %587 = vrot.lane.b32.xlu0 %v453, 104
  %v588 = vpop.permute.xlu0 %587
  %s592 = scalar_lea.vmem [#allocation2], 84
  %593 = vst.msk [vmem:[%s592] sm:$0xf] %vm246, %v584
  %594 = vst.msk [vmem:[%s592 + $0x4] sm:$0xf] %vm246, %v586
  %v595 = vld [vmem:[%s592 + $0x8] sm:$0x1]
  %v596 = vsel %vm251, %v588, %v595
  %597 = vst [vmem:[%s592 + $0x8] sm:$0x1] %v596
  %598 = vrot.lane.b32.xlu0 %v439, 72
  %v599 = vpop.permute.xlu0 %598
  %600 = vrot.lane.b32.xlu0 %v449, 72
  %v601 = vpop.permute.xlu0 %600
  %602 = vrot.lane.b32.xlu0 %v453, 72
  %v603 = vpop.permute.xlu0 %602
  %s607 = scalar_lea.vmem [#allocation3], 84
  %608 = vst.msk [vmem:[%s607] sm:$0xf] %vm246, %v599
  %609 = vst.msk [vmem:[%s607 + $0x4] sm:$0xf] %vm246, %v601
  %v610 = vld [vmem:[%s607 + $0x8] sm:$0x1]
  %v611 = vsel %vm251, %v603, %v610
  %612 = vst [vmem:[%s607 + $0x8] sm:$0x1] %v611
  %613 = vrot.lane.b32.xlu0 %v439, 40
  %v614 = vpop.permute.xlu0 %613
  %615 = vrot.lane.b32.xlu0 %v449, 40
  %v616 = vpop.permute.xlu0 %615
  %617 = vrot.lane.b32.xlu0 %v453, 40
  %v618 = vpop.permute.xlu0 %617
  %s622 = scalar_lea.vmem [#allocation4], 84
  %623 = vst.msk [vmem:[%s622] sm:$0xf] %vm246, %v614
  %624 = vst.msk [vmem:[%s622 + $0x4] sm:$0xf] %vm246, %v616
  %v625 = vld [vmem:[%s622 + $0x8] sm:$0x1]
  %v626 = vsel %vm251, %v618, %v625
  %627 = vst [vmem:[%s622 + $0x8] sm:$0x1] %v626
  %v628 = vld [vmem:[#allocation2] sm:$0xf]
  %v629 = vld [vmem:[#allocation2 + $0x4] sm:$0xf]
  %v630 = vld [vmem:[#allocation2 + $0x8] sm:$0x1]
  %v631 = vld [vmem:[#allocation2 + $0xc] sm:$0xf]
  %v632 = vld [vmem:[#allocation2 + $0x10] sm:$0xf]
  %v633 = vld [vmem:[#allocation2 + $0x14] sm:$0x1]
  %v634 = vld [vmem:[#allocation2 + $0x18] sm:$0xf]
  %v635 = vld [vmem:[#allocation2 + $0x1c] sm:$0xf]
  %v636 = vld [vmem:[#allocation2 + $0x20] sm:$0x1]
  %v637 = vld [vmem:[#allocation2 + $0x24] sm:$0xf]
  %v638 = vld [vmem:[#allocation2 + $0x28] sm:$0xf]
  %v639 = vld [vmem:[#allocation2 + $0x2c] sm:$0x1]
  %v640 = vld [vmem:[#allocation2 + $0x30] sm:$0xf]
  %v641 = vld [vmem:[#allocation2 + $0x34] sm:$0xf]
  %v642 = vld [vmem:[#allocation2 + $0x38] sm:$0x1]
  %v643 = vld [vmem:[#allocation2 + $0x3c] sm:$0xf]
  %v644 = vld [vmem:[#allocation2 + $0x40] sm:$0xf]
  %v645 = vld [vmem:[#allocation2 + $0x44] sm:$0x1]
  %v646 = vld [vmem:[#allocation2 + $0x48] sm:$0xf]
  %v647 = vld [vmem:[#allocation2 + $0x4c] sm:$0xf]
  %v648 = vld [vmem:[#allocation2 + $0x50] sm:$0x1]
  %v649 = vld [vmem:[#allocation2 + $0x54] sm:$0xf]
  %v650 = vld [vmem:[#allocation2 + $0x58] sm:$0xf]
  %v651 = vld [vmem:[#allocation2 + $0x5c] sm:$0x1]
  %v652 = vld [vmem:[#allocation3] sm:$0xf]
  %v653 = vld [vmem:[#allocation3 + $0x4] sm:$0xf]
  %v654 = vld [vmem:[#allocation3 + $0x8] sm:$0x1]
  %v655 = vld [vmem:[#allocation3 + $0xc] sm:$0xf]
  %v656 = vld [vmem:[#allocation3 + $0x10] sm:$0xf]
  %v657 = vld [vmem:[#allocation3 + $0x14] sm:$0x1]
  %v658 = vld [vmem:[#allocation3 + $0x18] sm:$0xf]
  %v659 = vld [vmem:[#allocation3 + $0x1c] sm:$0xf]
  %v660 = vld [vmem:[#allocation3 + $0x20] sm:$0x1]
  %v661 = vld [vmem:[#allocation3 + $0x24] sm:$0xf]
  %v662 = vld [vmem:[#allocation3 + $0x28] sm:$0xf]
  %v663 = vld [vmem:[#allocation3 + $0x2c] sm:$0x1]
  %v664 = vld [vmem:[#allocation3 + $0x30] sm:$0xf]
  %v665 = vld [vmem:[#allocation3 + $0x34] sm:$0xf]
  %v666 = vld [vmem:[#allocation3 + $0x38] sm:$0x1]
  %v667 = vld [vmem:[#allocation3 + $0x3c] sm:$0xf]
  %v668 = vld [vmem:[#allocation3 + $0x40] sm:$0xf]
  %v669 = vld [vmem:[#allocation3 + $0x44] sm:$0x1]
  %v670 = vld [vmem:[#allocation3 + $0x48] sm:$0xf]
  %v671 = vld [vmem:[#allocation3 + $0x4c] sm:$0xf]
  %v672 = vld [vmem:[#allocation3 + $0x50] sm:$0x1]
  %v673 = vld [vmem:[#allocation3 + $0x54] sm:$0xf]
  %v674 = vld [vmem:[#allocation3 + $0x58] sm:$0xf]
  %v675 = vld [vmem:[#allocation3 + $0x5c] sm:$0x1]
  %v676 = vld [vmem:[#allocation4] sm:$0xf]
  %v677 = vld [vmem:[#allocation4 + $0x4] sm:$0xf]
  %v678 = vld [vmem:[#allocation4 + $0x8] sm:$0x1]
  %v679 = vld [vmem:[#allocation4 + $0xc] sm:$0xf]
  %v680 = vld [vmem:[#allocation4 + $0x10] sm:$0xf]
  %v681 = vld [vmem:[#allocation4 + $0x14] sm:$0x1]
  %v682 = vld [vmem:[#allocation4 + $0x18] sm:$0xf]
  %v683 = vld [vmem:[#allocation4 + $0x1c] sm:$0xf]
  %v684 = vld [vmem:[#allocation4 + $0x20] sm:$0x1]
  %v685 = vld [vmem:[#allocation4 + $0x24] sm:$0xf]
  %v686 = vld [vmem:[#allocation4 + $0x28] sm:$0xf]
  %v687 = vld [vmem:[#allocation4 + $0x2c] sm:$0x1]
  %v688 = vld [vmem:[#allocation4 + $0x30] sm:$0xf]
  %v689 = vld [vmem:[#allocation4 + $0x34] sm:$0xf]
  %v690 = vld [vmem:[#allocation4 + $0x38] sm:$0x1]
  %v691 = vld [vmem:[#allocation4 + $0x3c] sm:$0xf]
  %v692 = vld [vmem:[#allocation4 + $0x40] sm:$0xf]
  %v693 = vld [vmem:[#allocation4 + $0x44] sm:$0x1]
  %v694 = vld [vmem:[#allocation4 + $0x48] sm:$0xf]
  %v695 = vld [vmem:[#allocation4 + $0x4c] sm:$0xf]
  %v696 = vld [vmem:[#allocation4 + $0x50] sm:$0x1]
  %v697 = vld [vmem:[#allocation4 + $0x54] sm:$0xf]
  %v698 = vld [vmem:[#allocation4 + $0x58] sm:$0xf]
  %v699 = vld [vmem:[#allocation4 + $0x5c] sm:$0x1]
  %v703 = vunpack.c.l.b16 %v628
  %v704 = vunpack.c.l.b16 %v629
  %v705 = vunpack.c.l.b16 %v630
  %v706 = vpack.c.b16 %v704, %v703
  %v707 = vpack.c.b16 %v705, %v705
  %v711 = vunpack.c.l.b16 %v652
  %v712 = vunpack.c.l.b16 %v653
  %v713 = vunpack.c.l.b16 %v654
  %v714 = vpack.c.b16 %v712, %v711
  %v715 = vpack.c.b16 %v713, %v713
  %vm716 = vcmask 64512
  %v718 = vsel %vm716, %v706, 0
  %v721 = vsel %vm716, %v707, 0
  %v724 = vsel %vm716, %v714, 0
  %v727 = vsel %vm716, %v715, 0
  %729 = vmatpush.bf16.xpose.msra.mxu0 0
  %730 = vmatpush.bf16.xpose.msra.mxu0 0
  %731 = vmatpush.bf16.xpose.msra.mxu0 0
  %732 = vmatpush.bf16.xpose.msra.mxu0 0
  %733 = vmatpush.bf16.xpose.msra.mxu0 0
  %734 = vmatpush.bf16.xpose.msra.mxu0 0
  %735 = vmatpush.bf16.xpose.msra.mxu0 %v727
  %736 = vmatpush.bf16.xpose.msra.mxu0 %v724
  %737 = vmatmul.bf16.gmra.mxu0 %v718
  %v738 = vpop.f32.mrf.mxu0
  %v739 = vadd.f32 0.0, %v738
  %v740 = vpop.f32.mrf.mxu0
  %v741 = vadd.f32 0.0, %v740
  %742 = vmatmul.bf16.gmra.mxu0 %v721
  %v743 = vpop.f32.mrf.mxu0
  %v744 = vadd.f32 0.0, %v743
  %v745 = vpop.f32.mrf.mxu0
  %746 = vdwg.mxu0
  %v750 = vunpack.c.l.b16 %v631
  %v751 = vunpack.c.l.b16 %v632
  %v752 = vunpack.c.l.b16 %v633
  %v753 = vpack.c.b16 %v751, %v750
  %v754 = vpack.c.b16 %v752, %v752
  %v758 = vunpack.c.l.b16 %v655
  %v759 = vunpack.c.l.b16 %v656
  %v760 = vunpack.c.l.b16 %v657
  %v761 = vpack.c.b16 %v759, %v758
  %v762 = vpack.c.b16 %v760, %v760
  %v764 = vsel %vm716, %v753, 0
  %v767 = vsel %vm716, %v754, 0
  %v770 = vsel %vm716, %v761, 0
  %v773 = vsel %vm716, %v762, 0
  %775 = vmatpush.bf16.xpose.msra.mxu0 0
  %776 = vmatpush.bf16.xpose.msra.mxu0 0
  %777 = vmatpush.bf16.xpose.msra.mxu0 0
  %778 = vmatpush.bf16.xpose.msra.mxu0 0
  %779 = vmatpush.bf16.xpose.msra.mxu0 0
  %780 = vmatpush.bf16.xpose.msra.mxu0 0
  %781 = vmatpush.bf16.xpose.msra.mxu0 %v773
  %782 = vmatpush.bf16.xpose.msra.mxu0 %v770
  %783 = vmatmul.bf16.gmra.mxu0 %v764
  %v784 = vpop.f32.mrf.mxu0
  %v785 = vadd.f32 0.0, %v784
  %v786 = vpop.f32.mrf.mxu0
  %v787 = vadd.f32 0.0, %v786
  %788 = vmatmul.bf16.gmra.mxu0 %v767
  %v789 = vpop.f32.mrf.mxu0
  %v790 = vadd.f32 0.0, %v789
  %v791 = vpop.f32.mrf.mxu0
  %792 = vdwg.mxu0
  %v796 = vunpack.c.l.b16 %v634
  %v797 = vunpack.c.l.b16 %v635
  %v798 = vunpack.c.l.b16 %v636
  %v799 = vpack.c.b16 %v797, %v796
  %v800 = vpack.c.b16 %v798, %v798
  %v804 = vunpack.c.l.b16 %v658
  %v805 = vunpack.c.l.b16 %v659
  %v806 = vunpack.c.l.b16 %v660
  %v807 = vpack.c.b16 %v805, %v804
  %v808 = vpack.c.b16 %v806, %v806
  %v810 = vsel %vm716, %v799, 0
  %v813 = vsel %vm716, %v800, 0
  %v816 = vsel %vm716, %v807, 0
  %v819 = vsel %vm716, %v808, 0
  %821 = vmatpush.bf16.xpose.msra.mxu0 0
  %822 = vmatpush.bf16.xpose.msra.mxu0 0
  %823 = vmatpush.bf16.xpose.msra.mxu0 0
  %824 = vmatpush.bf16.xpose.msra.mxu0 0
  %825 = vmatpush.bf16.xpose.msra.mxu0 0
  %826 = vmatpush.bf16.xpose.msra.mxu0 0
  %827 = vmatpush.bf16.xpose.msra.mxu0 %v819
  %828 = vmatpush.bf16.xpose.msra.mxu0 %v816
  %829 = vmatmul.bf16.gmra.mxu0 %v810
  %v830 = vpop.f32.mrf.mxu0
  %v831 = vadd.f32 0.0, %v830
  %v832 = vpop.f32.mrf.mxu0
  %v833 = vadd.f32 0.0, %v832
  %834 = vmatmul.bf16.gmra.mxu0 %v813
  %v835 = vpop.f32.mrf.mxu0
  %v836 = vadd.f32 0.0, %v835
  %v837 = vpop.f32.mrf.mxu0
  %838 = vdwg.mxu0
  %v842 = vunpack.c.l.b16 %v637
  %v843 = vunpack.c.l.b16 %v638
  %v844 = vunpack.c.l.b16 %v639
  %v845 = vpack.c.b16 %v843, %v842
  %v846 = vpack.c.b16 %v844, %v844
  %v850 = vunpack.c.l.b16 %v661
  %v851 = vunpack.c.l.b16 %v662
  %v852 = vunpack.c.l.b16 %v663
  %v853 = vpack.c.b16 %v851, %v850
  %v854 = vpack.c.b16 %v852, %v852
  %v856 = vsel %vm716, %v845, 0
  %v859 = vsel %vm716, %v846, 0
  %v862 = vsel %vm716, %v853, 0
  %v865 = vsel %vm716, %v854, 0
  %867 = vmatpush.bf16.xpose.msra.mxu0 0
  %868 = vmatpush.bf16.xpose.msra.mxu0 0
  %869 = vmatpush.bf16.xpose.msra.mxu0 0
  %870 = vmatpush.bf16.xpose.msra.mxu0 0
  %871 = vmatpush.bf16.xpose.msra.mxu0 0
  %872 = vmatpush.bf16.xpose.msra.mxu0 0
  %873 = vmatpush.bf16.xpose.msra.mxu0 %v865
  %874 = vmatpush.bf16.xpose.msra.mxu0 %v862
  %875 = vmatmul.bf16.gmra.mxu0 %v856
  %v876 = vpop.f32.mrf.mxu0
  %v877 = vadd.f32 0.0, %v876
  %v878 = vpop.f32.mrf.mxu0
  %v879 = vadd.f32 0.0, %v878
  %880 = vmatmul.bf16.gmra.mxu0 %v859
  %v881 = vpop.f32.mrf.mxu0
  %v882 = vadd.f32 0.0, %v881
  %v883 = vpop.f32.mrf.mxu0
  %884 = vdwg.mxu0
  %v888 = vunpack.c.l.b16 %v640
  %v889 = vunpack.c.l.b16 %v641
  %v890 = vunpack.c.l.b16 %v642
  %v891 = vpack.c.b16 %v889, %v888
  %v892 = vpack.c.b16 %v890, %v890
  %v896 = vunpack.c.l.b16 %v664
  %v897 = vunpack.c.l.b16 %v665
  %v898 = vunpack.c.l.b16 %v666
  %v899 = vpack.c.b16 %v897, %v896
  %v900 = vpack.c.b16 %v898, %v898
  %v902 = vsel %vm716, %v891, 0
  %v905 = vsel %vm716, %v892, 0
  %v908 = vsel %vm716, %v899, 0
  %v911 = vsel %vm716, %v900, 0
  %913 = vmatpush.bf16.xpose.msra.mxu0 0
  %914 = vmatpush.bf16.xpose.msra.mxu0 0
  %915 = vmatpush.bf16.xpose.msra.mxu0 0
  %916 = vmatpush.bf16.xpose.msra.mxu0 0
  %917 = vmatpush.bf16.xpose.msra.mxu0 0
  %918 = vmatpush.bf16.xpose.msra.mxu0 0
  %919 = vmatpush.bf16.xpose.msra.mxu0 %v911
  %920 = vmatpush.bf16.xpose.msra.mxu0 %v908
  %921 = vmatmul.bf16.gmra.mxu0 %v902
  %v922 = vpop.f32.mrf.mxu0
  %v923 = vadd.f32 0.0, %v922
  %v924 = vpop.f32.mrf.mxu0
  %v925 = vadd.f32 0.0, %v924
  %926 = vmatmul.bf16.gmra.mxu0 %v905
  %v927 = vpop.f32.mrf.mxu0
  %v928 = vadd.f32 0.0, %v927
  %v929 = vpop.f32.mrf.mxu0
  %930 = vdwg.mxu0
  %v934 = vunpack.c.l.b16 %v643
  %v935 = vunpack.c.l.b16 %v644
  %v936 = vunpack.c.l.b16 %v645
  %v937 = vpack.c.b16 %v935, %v934
  %v938 = vpack.c.b16 %v936, %v936
  %v942 = vunpack.c.l.b16 %v667
  %v943 = vunpack.c.l.b16 %v668
  %v944 = vunpack.c.l.b16 %v669
  %v945 = vpack.c.b16 %v943, %v942
  %v946 = vpack.c.b16 %v944, %v944
  %v948 = vsel %vm716, %v937, 0
  %v951 = vsel %vm716, %v938, 0
  %v954 = vsel %vm716, %v945, 0
  %v957 = vsel %vm716, %v946, 0
  %959 = vmatpush.bf16.xpose.msra.mxu0 0
  %960 = vmatpush.bf16.xpose.msra.mxu0 0
  %961 = vmatpush.bf16.xpose.msra.mxu0 0
  %962 = vmatpush.bf16.xpose.msra.mxu0 0
  %963 = vmatpush.bf16.xpose.msra.mxu0 0
  %964 = vmatpush.bf16.xpose.msra.mxu0 0
  %965 = vmatpush.bf16.xpose.msra.mxu0 %v957
  %966 = vmatpush.bf16.xpose.msra.mxu0 %v954
  %967 = vmatmul.bf16.gmra.mxu0 %v948
  %v968 = vpop.f32.mrf.mxu0
  %v969 = vadd.f32 0.0, %v968
  %v970 = vpop.f32.mrf.mxu0
  %v971 = vadd.f32 0.0, %v970
  %972 = vmatmul.bf16.gmra.mxu0 %v951
  %v973 = vpop.f32.mrf.mxu0
  %v974 = vadd.f32 0.0, %v973
  %v975 = vpop.f32.mrf.mxu0
  %976 = vdwg.mxu0
  %v980 = vunpack.c.l.b16 %v646
  %v981 = vunpack.c.l.b16 %v647
  %v982 = vunpack.c.l.b16 %v648
  %v983 = vpack.c.b16 %v981, %v980
  %v984 = vpack.c.b16 %v982, %v982
  %v988 = vunpack.c.l.b16 %v670
  %v989 = vunpack.c.l.b16 %v671
  %v990 = vunpack.c.l.b16 %v672
  %v991 = vpack.c.b16 %v989, %v988
  %v992 = vpack.c.b16 %v990, %v990
  %v994 = vsel %vm716, %v983, 0
  %v997 = vsel %vm716, %v984, 0
  %v1000 = vsel %vm716, %v991, 0
  %v1003 = vsel %vm716, %v992, 0
  %1005 = vmatpush.bf16.xpose.msra.mxu0 0
  %1006 = vmatpush.bf16.xpose.msra.mxu0 0
  %1007 = vmatpush.bf16.xpose.msra.mxu0 0
  %1008 = vmatpush.bf16.xpose.msra.mxu0 0
  %1009 = vmatpush.bf16.xpose.msra.mxu0 0
  %1010 = vmatpush.bf16.xpose.msra.mxu0 0
  %1011 = vmatpush.bf16.xpose.msra.mxu0 %v1003
  %1012 = vmatpush.bf16.xpose.msra.mxu0 %v1000
  %1013 = vmatmul.bf16.gmra.mxu0 %v994
  %v1014 = vpop.f32.mrf.mxu0
  %v1015 = vadd.f32 0.0, %v1014
  %v1016 = vpop.f32.mrf.mxu0
  %v1017 = vadd.f32 0.0, %v1016
  %1018 = vmatmul.bf16.gmra.mxu0 %v997
  %v1019 = vpop.f32.mrf.mxu0
  %v1020 = vadd.f32 0.0, %v1019
  %v1021 = vpop.f32.mrf.mxu0
  %1022 = vdwg.mxu0
  %v1026 = vunpack.c.l.b16 %v649
  %v1027 = vunpack.c.l.b16 %v650
  %v1028 = vunpack.c.l.b16 %v651
  %v1029 = vpack.c.b16 %v1027, %v1026
  %v1030 = vpack.c.b16 %v1028, %v1028
  %v1034 = vunpack.c.l.b16 %v673
  %v1035 = vunpack.c.l.b16 %v674
  %v1036 = vunpack.c.l.b16 %v675
  %v1037 = vpack.c.b16 %v1035, %v1034
  %v1038 = vpack.c.b16 %v1036, %v1036
  %v1040 = vsel %vm716, %v1029, 0
  %v1043 = vsel %vm716, %v1030, 0
  %v1046 = vsel %vm716, %v1037, 0
  %v1049 = vsel %vm716, %v1038, 0
  %1051 = vmatpush.bf16.xpose.msra.mxu0 0
  %1052 = vmatpush.bf16.xpose.msra.mxu0 0
  %1053 = vmatpush.bf16.xpose.msra.mxu0 0
  %1054 = vmatpush.bf16.xpose.msra.mxu0 0
  %1055 = vmatpush.bf16.xpose.msra.mxu0 0
  %1056 = vmatpush.bf16.xpose.msra.mxu0 0
  %1057 = vmatpush.bf16.xpose.msra.mxu0 %v1049
  %1058 = vmatpush.bf16.xpose.msra.mxu0 %v1046
  %1059 = vmatmul.bf16.gmra.mxu0 %v1040
  %v1060 = vpop.f32.mrf.mxu0
  %v1061 = vadd.f32 0.0, %v1060
  %v1062 = vpop.f32.mrf.mxu0
  %v1063 = vadd.f32 0.0, %v1062
  %1064 = vmatmul.bf16.gmra.mxu0 %v1043
  %v1065 = vpop.f32.mrf.mxu0
  %v1066 = vadd.f32 0.0, %v1065
  %v1067 = vpop.f32.mrf.mxu0
  %1068 = vdwg.mxu0
  %vm1069 = vcmask 138240
  %v1070 = vsel %vm1069, %v739, -inf
  %1071 = vmax.xlane.f32.xlu0 %v1070
  %v1072 = vpop.xlane.xlu0 %1071
  %v1073 = vsel %vm1069, %v741, -inf
  %1074 = vmax.xlane.f32.xlu0 %v1073
  %v1075 = vpop.xlane.xlu0 %1074
  %vm1076 = vcmask 131072
  %v1077 = vsel %vm1076, %v744, -inf
  %1078 = vmax.xlane.f32.xlu0 %v1077
  %v1079 = vpop.xlane.xlu0 %1078
  %v1080 = vsel %vm1069, %v785, -inf
  %1081 = vmax.xlane.f32.xlu0 %v1080
  %v1082 = vpop.xlane.xlu0 %1081
  %v1083 = vsel %vm1069, %v787, -inf
  %1084 = vmax.xlane.f32.xlu0 %v1083
  %v1085 = vpop.xlane.xlu0 %1084
  %v1086 = vsel %vm1076, %v790, -inf
  %1087 = vmax.xlane.f32.xlu0 %v1086
  %v1088 = vpop.xlane.xlu0 %1087
  %v1089 = vsel %vm1069, %v831, -inf
  %1090 = vmax.xlane.f32.xlu0 %v1089
  %v1091 = vpop.xlane.xlu0 %1090
  %v1092 = vsel %vm1069, %v833, -inf
  %1093 = vmax.xlane.f32.xlu0 %v1092
  %v1094 = vpop.xlane.xlu0 %1093
  %v1095 = vsel %vm1076, %v836, -inf
  %1096 = vmax.xlane.f32.xlu0 %v1095
  %v1097 = vpop.xlane.xlu0 %1096
  %v1098 = vsel %vm1069, %v877, -inf
  %1099 = vmax.xlane.f32.xlu0 %v1098
  %v1100 = vpop.xlane.xlu0 %1099
  %v1101 = vsel %vm1069, %v879, -inf
  %1102 = vmax.xlane.f32.xlu0 %v1101
  %v1103 = vpop.xlane.xlu0 %1102
  %v1104 = vsel %vm1076, %v882, -inf
  %1105 = vmax.xlane.f32.xlu0 %v1104
  %v1106 = vpop.xlane.xlu0 %1105
  %v1107 = vsel %vm1069, %v923, -inf
  %1108 = vmax.xlane.f32.xlu0 %v1107
  %v1109 = vpop.xlane.xlu0 %1108
  %v1110 = vsel %vm1069, %v925, -inf
  %1111 = vmax.xlane.f32.xlu0 %v1110
  %v1112 = vpop.xlane.xlu0 %1111
  %v1113 = vsel %vm1076, %v928, -inf
  %1114 = vmax.xlane.f32.xlu0 %v1113
  %v1115 = vpop.xlane.xlu0 %1114
  %v1116 = vsel %vm1069, %v969, -inf
  %1117 = vmax.xlane.f32.xlu0 %v1116
  %v1118 = vpop.xlane.xlu0 %1117
  %v1119 = vsel %vm1069, %v971, -inf
  %1120 = vmax.xlane.f32.xlu0 %v1119
  %v1121 = vpop.xlane.xlu0 %1120
  %v1122 = vsel %vm1076, %v974, -inf
  %1123 = vmax.xlane.f32.xlu0 %v1122
  %v1124 = vpop.xlane.xlu0 %1123
  %v1125 = vsel %vm1069, %v1015, -inf
  %1126 = vmax.xlane.f32.xlu0 %v1125
  %v1127 = vpop.xlane.xlu0 %1126
  %v1128 = vsel %vm1069, %v1017, -inf
  %1129 = vmax.xlane.f32.xlu0 %v1128
  %v1130 = vpop.xlane.xlu0 %1129
  %v1131 = vsel %vm1076, %v1020, -inf
  %1132 = vmax.xlane.f32.xlu0 %v1131
  %v1133 = vpop.xlane.xlu0 %1132
  %v1134 = vsel %vm1069, %v1061, -inf
  %1135 = vmax.xlane.f32.xlu0 %v1134
  %v1136 = vpop.xlane.xlu0 %1135
  %v1137 = vsel %vm1069, %v1063, -inf
  %1138 = vmax.xlane.f32.xlu0 %v1137
  %v1139 = vpop.xlane.xlu0 %1138
  %v1140 = vsel %vm1076, %v1066, -inf
  %1141 = vmax.xlane.f32.xlu0 %v1140
  %v1142 = vpop.xlane.xlu0 %1141
  %v1143 = vsub.f32 %v739, %v1072
  %v1144 = vsub.f32 %v741, %v1075
  %v1145 = vsub.f32 %v744, %v1079
  %v1146 = vsub.f32 %v785, %v1082
  %v1147 = vsub.f32 %v787, %v1085
  %v1148 = vsub.f32 %v790, %v1088
  %v1149 = vsub.f32 %v831, %v1091
  %v1150 = vsub.f32 %v833, %v1094
  %v1151 = vsub.f32 %v836, %v1097
  %v1152 = vsub.f32 %v877, %v1100
  %v1153 = vsub.f32 %v879, %v1103
  %v1154 = vsub.f32 %v882, %v1106
  %v1155 = vsub.f32 %v923, %v1109
  %v1156 = vsub.f32 %v925, %v1112
  %v1157 = vsub.f32 %v928, %v1115
  %v1158 = vsub.f32 %v969, %v1118
  %v1159 = vsub.f32 %v971, %v1121
  %v1160 = vsub.f32 %v974, %v1124
  %v1161 = vsub.f32 %v1015, %v1127
  %v1162 = vsub.f32 %v1017, %v1130
  %v1163 = vsub.f32 %v1020, %v1133
  %v1164 = vsub.f32 %v1061, %v1136
  %v1165 = vsub.f32 %v1063, %v1139
  %v1166 = vsub.f32 %v1066, %v1142
  %v1167 = vmul.f32 %v1143, 1.442695
  %v1168 = vpow.pop %v1167
  %v1169 = vmul.f32 %v1144, 1.442695
  %v1170 = vpow.pop %v1169
  %v1171 = vmul.f32 %v1145, 1.442695
  %v1172 = vpow.pop %v1171
  %v1173 = vmul.f32 %v1146, 1.442695
  %v1174 = vpow.pop %v1173
  %v1175 = vmul.f32 %v1147, 1.442695
  %v1176 = vpow.pop %v1175
  %v1177 = vmul.f32 %v1148, 1.442695
  %v1178 = vpow.pop %v1177
  %v1179 = vmul.f32 %v1149, 1.442695
  %v1180 = vpow.pop %v1179
  %v1181 = vmul.f32 %v1150, 1.442695
  %v1182 = vpow.pop %v1181
  %v1183 = vmul.f32 %v1151, 1.442695
  %v1184 = vpow.pop %v1183
  %v1185 = vmul.f32 %v1152, 1.442695
  %v1186 = vpow.pop %v1185
  %v1187 = vmul.f32 %v1153, 1.442695
  %v1188 = vpow.pop %v1187
  %v1189 = vmul.f32 %v1154, 1.442695
  %v1190 = vpow.pop %v1189
  %v1191 = vmul.f32 %v1155, 1.442695
  %v1192 = vpow.pop %v1191
  %v1193 = vmul.f32 %v1156, 1.442695
  %v1194 = vpow.pop %v1193
  %v1195 = vmul.f32 %v1157, 1.442695
  %v1196 = vpow.pop %v1195
  %v1197 = vmul.f32 %v1158, 1.442695
  %v1198 = vpow.pop %v1197
  %v1199 = vmul.f32 %v1159, 1.442695
  %v1200 = vpow.pop %v1199
  %v1201 = vmul.f32 %v1160, 1.442695
  %v1202 = vpow.pop %v1201
  %v1203 = vmul.f32 %v1161, 1.442695
  %v1204 = vpow.pop %v1203
  %v1205 = vmul.f32 %v1162, 1.442695
  %v1206 = vpow.pop %v1205
  %v1207 = vmul.f32 %v1163, 1.442695
  %v1208 = vpow.pop %v1207
  %v1209 = vmul.f32 %v1164, 1.442695
  %v1210 = vpow.pop %v1209
  %v1211 = vmul.f32 %v1165, 1.442695
  %v1212 = vpow.pop %v1211
  %v1213 = vmul.f32 %v1166, 1.442695
  %v1214 = vpow.pop %v1213
  %v1215 = vsel %vm1069, %v1168, 0.0
  %1216 = vadd.xlane.f32.xlu0 %v1215
  %v1217 = vpop.xlane.xlu0 %1216
  %v1218 = vsel %vm1069, %v1170, 0.0
  %1219 = vadd.xlane.f32.xlu0 %v1218
  %v1220 = vpop.xlane.xlu0 %1219
  %v1221 = vsel %vm1076, %v1172, 0.0
  %1222 = vadd.xlane.f32.xlu0 %v1221
  %v1223 = vpop.xlane.xlu0 %1222
  %v1224 = vsel %vm1069, %v1174, 0.0
  %1225 = vadd.xlane.f32.xlu0 %v1224
  %v1226 = vpop.xlane.xlu0 %1225
  %v1227 = vsel %vm1069, %v1176, 0.0
  %1228 = vadd.xlane.f32.xlu0 %v1227
  %v1229 = vpop.xlane.xlu0 %1228
  %v1230 = vsel %vm1076, %v1178, 0.0
  %1231 = vadd.xlane.f32.xlu0 %v1230
  %v1232 = vpop.xlane.xlu0 %1231
  %v1233 = vsel %vm1069, %v1180, 0.0
  %1234 = vadd.xlane.f32.xlu0 %v1233
  %v1235 = vpop.xlane.xlu0 %1234
  %v1236 = vsel %vm1069, %v1182, 0.0
  %1237 = vadd.xlane.f32.xlu0 %v1236
  %v1238 = vpop.xlane.xlu0 %1237
  %v1239 = vsel %vm1076, %v1184, 0.0
  %1240 = vadd.xlane.f32.xlu0 %v1239
  %v1241 = vpop.xlane.xlu0 %1240
  %v1242 = vsel %vm1069, %v1186, 0.0
  %1243 = vadd.xlane.f32.xlu0 %v1242
  %v1244 = vpop.xlane.xlu0 %1243
  %v1245 = vsel %vm1069, %v1188, 0.0
  %1246 = vadd.xlane.f32.xlu0 %v1245
  %v1247 = vpop.xlane.xlu0 %1246
  %v1248 = vsel %vm1076, %v1190, 0.0
  %1249 = vadd.xlane.f32.xlu0 %v1248
  %v1250 = vpop.xlane.xlu0 %1249
  %v1251 = vsel %vm1069, %v1192, 0.0
  %1252 = vadd.xlane.f32.xlu0 %v1251
  %v1253 = vpop.xlane.xlu0 %1252
  %v1254 = vsel %vm1069, %v1194, 0.0
  %1255 = vadd.xlane.f32.xlu0 %v1254
  %v1256 = vpop.xlane.xlu0 %1255
  %v1257 = vsel %vm1076, %v1196, 0.0
  %1258 = vadd.xlane.f32.xlu0 %v1257
  %v1259 = vpop.xlane.xlu0 %1258
  %v1260 = vsel %vm1069, %v1198, 0.0
  %1261 = vadd.xlane.f32.xlu0 %v1260
  %v1262 = vpop.xlane.xlu0 %1261
  %v1263 = vsel %vm1069, %v1200, 0.0
  %1264 = vadd.xlane.f32.xlu0 %v1263
  %v1265 = vpop.xlane.xlu0 %1264
  %v1266 = vsel %vm1076, %v1202, 0.0
  %1267 = vadd.xlane.f32.xlu0 %v1266
  %v1268 = vpop.xlane.xlu0 %1267
  %v1269 = vsel %vm1069, %v1204, 0.0
  %1270 = vadd.xlane.f32.xlu0 %v1269
  %v1271 = vpop.xlane.xlu0 %1270
  %v1272 = vsel %vm1069, %v1206, 0.0
  %1273 = vadd.xlane.f32.xlu0 %v1272
  %v1274 = vpop.xlane.xlu0 %1273
  %v1275 = vsel %vm1076, %v1208, 0.0
  %1276 = vadd.xlane.f32.xlu0 %v1275
  %v1277 = vpop.xlane.xlu0 %1276
  %v1278 = vsel %vm1069, %v1210, 0.0
  %1279 = vadd.xlane.f32.xlu0 %v1278
  %v1280 = vpop.xlane.xlu0 %1279
  %v1281 = vsel %vm1069, %v1212, 0.0
  %1282 = vadd.xlane.f32.xlu0 %v1281
  %v1283 = vpop.xlane.xlu0 %1282
  %v1284 = vsel %vm1076, %v1214, 0.0
  %1285 = vadd.xlane.f32.xlu0 %v1284
  %v1286 = vpop.xlane.xlu0 %1285
  %v1287 = vrcp.pop %v1217
  %v1288 = vrcp.pop %v1220
  %v1289 = vrcp.pop %v1223
  %v1290 = vrcp.pop %v1226
  %v1291 = vrcp.pop %v1229
  %v1292 = vrcp.pop %v1232
  %v1293 = vrcp.pop %v1235
  %v1294 = vrcp.pop %v1238
  %v1295 = vrcp.pop %v1241
  %v1296 = vrcp.pop %v1244
  %v1297 = vrcp.pop %v1247
  %v1298 = vrcp.pop %v1250
  %v1299 = vrcp.pop %v1253
  %v1300 = vrcp.pop %v1256
  %v1301 = vrcp.pop %v1259
  %v1302 = vrcp.pop %v1262
  %v1303 = vrcp.pop %v1265
  %v1304 = vrcp.pop %v1268
  %v1305 = vrcp.pop %v1271
  %v1306 = vrcp.pop %v1274
  %v1307 = vrcp.pop %v1277
  %v1308 = vrcp.pop %v1280
  %v1309 = vrcp.pop %v1283
  %v1310 = vrcp.pop %v1286
  %v1311 = vmul.f32 %v1168, %v1287
  %v1312 = vmul.f32 %v1170, %v1288
  %v1313 = vmul.f32 %v1172, %v1289
  %v1314 = vmul.f32 %v1174, %v1290
  %v1315 = vmul.f32 %v1176, %v1291
  %v1316 = vmul.f32 %v1178, %v1292
  %v1317 = vmul.f32 %v1180, %v1293
  %v1318 = vmul.f32 %v1182, %v1294
  %v1319 = vmul.f32 %v1184, %v1295
  %v1320 = vmul.f32 %v1186, %v1296
  %v1321 = vmul.f32 %v1188, %v1297
  %v1322 = vmul.f32 %v1190, %v1298
  %v1323 = vmul.f32 %v1192, %v1299
  %v1324 = vmul.f32 %v1194, %v1300
  %v1325 = vmul.f32 %v1196, %v1301
  %v1326 = vmul.f32 %v1198, %v1302
  %v1327 = vmul.f32 %v1200, %v1303
  %v1328 = vmul.f32 %v1202, %v1304
  %v1329 = vmul.f32 %v1204, %v1305
  %v1330 = vmul.f32 %v1206, %v1306
  %v1331 = vmul.f32 %v1208, %v1307
  %v1332 = vmul.f32 %v1210, %v1308
  %v1333 = vmul.f32 %v1212, %v1309
  %v1334 = vmul.f32 %v1214, %v1310
  %v1335 = vpack.c.bf16 %v1311, %v1311
  %v1336 = vpack.c.bf16 %v1312, %v1312
  %v1337 = vpack.c.bf16 %v1313, %v1313
  %v1338 = vpack.c.bf16 %v1314, %v1314
  %v1339 = vpack.c.bf16 %v1315, %v1315
  %v1340 = vpack.c.bf16 %v1316, %v1316
  %v1341 = vpack.c.bf16 %v1317, %v1317
  %v1342 = vpack.c.bf16 %v1318, %v1318
  %v1343 = vpack.c.bf16 %v1319, %v1319
  %v1344 = vpack.c.bf16 %v1320, %v1320
  %v1345 = vpack.c.bf16 %v1321, %v1321
  %v1346 = vpack.c.bf16 %v1322, %v1322
  %v1347 = vpack.c.bf16 %v1323, %v1323
  %v1348 = vpack.c.bf16 %v1324, %v1324
  %v1349 = vpack.c.bf16 %v1325, %v1325
  %v1350 = vpack.c.bf16 %v1326, %v1326
  %v1351 = vpack.c.bf16 %v1327, %v1327
  %v1352 = vpack.c.bf16 %v1328, %v1328
  %v1353 = vpack.c.bf16 %v1329, %v1329
  %v1354 = vpack.c.bf16 %v1330, %v1330
  %v1355 = vpack.c.bf16 %v1331, %v1331
  %v1356 = vpack.c.bf16 %v1332, %v1332
  %v1357 = vpack.c.bf16 %v1333, %v1333
  %v1358 = vpack.c.bf16 %v1334, %v1334
  %v1362 = vunpack.c.l.b16 %v1335
  %v1363 = vunpack.c.l.b16 %v1336
  %v1364 = vunpack.c.l.b16 %v1337
  %v1365 = vpack.c.b16 %v1363, %v1362
  %v1366 = vpack.c.b16 %v1364, %v1364
  %v1370 = vunpack.c.l.b16 %v676
  %v1371 = vunpack.c.l.b16 %v677
  %v1372 = vunpack.c.l.b16 %v678
  %v1373 = vpack.c.b16 %v1371, %v1370
  %v1374 = vpack.c.b16 %v1372, %v1372
  %v1377 = vsel %vm1069, %v1365, 0
  %v1380 = vsel %vm1069, %v1366, 0
  %vm1382 = vcmask 1040384
  %v1383 = vsel 0, 4294967295, 65535
  %v1384 = vsel %vm1382, %v1383, 0
  %v1386 = vand.u32 %v1374, %v1384
  %1388 = vmatpush.bf16.msra.mxu0 0
  %1389 = vmatpush.bf16.msra.mxu0 0
  %1390 = vmatpush.bf16.msra.mxu0 0
  %1391 = vmatpush.bf16.msra.mxu0 0
  %1392 = vmatpush.bf16.msra.mxu0 0
  %1393 = vmatpush.bf16.msra.mxu0 0
  %1394 = vmatpush.bf16.msra.mxu0 %v1386
  %1395 = vmatpush.bf16.msra.mxu0 %v1373
  %1396 = vmatmul.bf16.gmra.mxu0 %v1377
  %v1397 = vpop.f32.mrf.mxu0
  %v1398 = vadd.f32 0.0, %v1397
  %v1399 = vpop.f32.mrf.mxu0
  %v1400 = vadd.f32 0.0, %v1399
  %1401 = vmatmul.bf16.gmra.mxu0 %v1380
  %v1402 = vpop.f32.mrf.mxu0
  %v1403 = vadd.f32 0.0, %v1402
  %v1404 = vpop.f32.mrf.mxu0
  %1405 = vdwg.mxu0
  %v1409 = vunpack.c.l.b16 %v1338
  %v1410 = vunpack.c.l.b16 %v1339
  %v1411 = vunpack.c.l.b16 %v1340
  %v1412 = vpack.c.b16 %v1410, %v1409
  %v1413 = vpack.c.b16 %v1411, %v1411
  %v1417 = vunpack.c.l.b16 %v679
  %v1418 = vunpack.c.l.b16 %v680
  %v1419 = vunpack.c.l.b16 %v681
  %v1420 = vpack.c.b16 %v1418, %v1417
  %v1421 = vpack.c.b16 %v1419, %v1419
  %v1424 = vsel %vm1069, %v1412, 0
  %v1427 = vsel %vm1069, %v1413, 0
  %v1430 = vand.u32 %v1421, %v1384
  %1432 = vmatpush.bf16.msra.mxu0 0
  %1433 = vmatpush.bf16.msra.mxu0 0
  %1434 = vmatpush.bf16.msra.mxu0 0
  %1435 = vmatpush.bf16.msra.mxu0 0
  %1436 = vmatpush.bf16.msra.mxu0 0
  %1437 = vmatpush.bf16.msra.mxu0 0
  %1438 = vmatpush.bf16.msra.mxu0 %v1430
  %1439 = vmatpush.bf16.msra.mxu0 %v1420
  %1440 = vmatmul.bf16.gmra.mxu0 %v1424
  %v1441 = vpop.f32.mrf.mxu0
  %v1442 = vadd.f32 0.0, %v1441
  %v1443 = vpop.f32.mrf.mxu0
  %v1444 = vadd.f32 0.0, %v1443
  %1445 = vmatmul.bf16.gmra.mxu0 %v1427
  %v1446 = vpop.f32.mrf.mxu0
  %v1447 = vadd.f32 0.0, %v1446
  %v1448 = vpop.f32.mrf.mxu0
  %1449 = vdwg.mxu0
  %v1453 = vunpack.c.l.b16 %v1341
  %v1454 = vunpack.c.l.b16 %v1342
  %v1455 = vunpack.c.l.b16 %v1343
  %v1456 = vpack.c.b16 %v1454, %v1453
  %v1457 = vpack.c.b16 %v1455, %v1455
  %v1461 = vunpack.c.l.b16 %v682
  %v1462 = vunpack.c.l.b16 %v683
  %v1463 = vunpack.c.l.b16 %v684
  %v1464 = vpack.c.b16 %v1462, %v1461
  %v1465 = vpack.c.b16 %v1463, %v1463
  %v1468 = vsel %vm1069, %v1456, 0
  %v1471 = vsel %vm1069, %v1457, 0
  %v1474 = vand.u32 %v1465, %v1384
  %1476 = vmatpush.bf16.msra.mxu0 0
  %1477 = vmatpush.bf16.msra.mxu0 0
  %1478 = vmatpush.bf16.msra.mxu0 0
  %1479 = vmatpush.bf16.msra.mxu0 0
  %1480 = vmatpush.bf16.msra.mxu0 0
  %1481 = vmatpush.bf16.msra.mxu0 0
  %1482 = vmatpush.bf16.msra.mxu0 %v1474
  %1483 = vmatpush.bf16.msra.mxu0 %v1464
  %1484 = vmatmul.bf16.gmra.mxu0 %v1468
  %v1485 = vpop.f32.mrf.mxu0
  %v1486 = vadd.f32 0.0, %v1485
  %v1487 = vpop.f32.mrf.mxu0
  %v1488 = vadd.f32 0.0, %v1487
  %1489 = vmatmul.bf16.gmra.mxu0 %v1471
  %v1490 = vpop.f32.mrf.mxu0
  %v1491 = vadd.f32 0.0, %v1490
  %v1492 = vpop.f32.mrf.mxu0
  %1493 = vdwg.mxu0
  %v1497 = vunpack.c.l.b16 %v1344
  %v1498 = vunpack.c.l.b16 %v1345
  %v1499 = vunpack.c.l.b16 %v1346
  %v1500 = vpack.c.b16 %v1498, %v1497
  %v1501 = vpack.c.b16 %v1499, %v1499
  %v1505 = vunpack.c.l.b16 %v685
  %v1506 = vunpack.c.l.b16 %v686
  %v1507 = vunpack.c.l.b16 %v687
  %v1508 = vpack.c.b16 %v1506, %v1505
  %v1509 = vpack.c.b16 %v1507, %v1507
  %v1512 = vsel %vm1069, %v1500, 0
  %v1515 = vsel %vm1069, %v1501, 0
  %v1518 = vand.u32 %v1509, %v1384
  %1520 = vmatpush.bf16.msra.mxu0 0
  %1521 = vmatpush.bf16.msra.mxu0 0
  %1522 = vmatpush.bf16.msra.mxu0 0
  %1523 = vmatpush.bf16.msra.mxu0 0
  %1524 = vmatpush.bf16.msra.mxu0 0
  %1525 = vmatpush.bf16.msra.mxu0 0
  %1526 = vmatpush.bf16.msra.mxu0 %v1518
  %1527 = vmatpush.bf16.msra.mxu0 %v1508
  %1528 = vmatmul.bf16.gmra.mxu0 %v1512
  %v1529 = vpop.f32.mrf.mxu0
  %v1530 = vadd.f32 0.0, %v1529
  %v1531 = vpop.f32.mrf.mxu0
  %v1532 = vadd.f32 0.0, %v1531
  %1533 = vmatmul.bf16.gmra.mxu0 %v1515
  %v1534 = vpop.f32.mrf.mxu0
  %v1535 = vadd.f32 0.0, %v1534
  %v1536 = vpop.f32.mrf.mxu0
  %1537 = vdwg.mxu0
  %v1541 = vunpack.c.l.b16 %v1347
  %v1542 = vunpack.c.l.b16 %v1348
  %v1543 = vunpack.c.l.b16 %v1349
  %v1544 = vpack.c.b16 %v1542, %v1541
  %v1545 = vpack.c.b16 %v1543, %v1543
  %v1549 = vunpack.c.l.b16 %v688
  %v1550 = vunpack.c.l.b16 %v689
  %v1551 = vunpack.c.l.b16 %v690
  %v1552 = vpack.c.b16 %v1550, %v1549
  %v1553 = vpack.c.b16 %v1551, %v1551
  %v1556 = vsel %vm1069, %v1544, 0
  %v1559 = vsel %vm1069, %v1545, 0
  %v1562 = vand.u32 %v1553, %v1384
  %1564 = vmatpush.bf16.msra.mxu0 0
  %1565 = vmatpush.bf16.msra.mxu0 0
  %1566 = vmatpush.bf16.msra.mxu0 0
  %1567 = vmatpush.bf16.msra.mxu0 0
  %1568 = vmatpush.bf16.msra.mxu0 0
  %1569 = vmatpush.bf16.msra.mxu0 0
  %1570 = vmatpush.bf16.msra.mxu0 %v1562
  %1571 = vmatpush.bf16.msra.mxu0 %v1552
  %1572 = vmatmul.bf16.gmra.mxu0 %v1556
  %v1573 = vpop.f32.mrf.mxu0
  %v1574 = vadd.f32 0.0, %v1573
  %v1575 = vpop.f32.mrf.mxu0
  %v1576 = vadd.f32 0.0, %v1575
  %1577 = vmatmul.bf16.gmra.mxu0 %v1559
  %v1578 = vpop.f32.mrf.mxu0
  %v1579 = vadd.f32 0.0, %v1578
  %v1580 = vpop.f32.mrf.mxu0
  %1581 = vdwg.mxu0
  %v1585 = vunpack.c.l.b16 %v1350
  %v1586 = vunpack.c.l.b16 %v1351
  %v1587 = vunpack.c.l.b16 %v1352
  %v1588 = vpack.c.b16 %v1586, %v1585
  %v1589 = vpack.c.b16 %v1587, %v1587
  %v1593 = vunpack.c.l.b16 %v691
  %v1594 = vunpack.c.l.b16 %v692
  %v1595 = vunpack.c.l.b16 %v693
  %v1596 = vpack.c.b16 %v1594, %v1593
  %v1597 = vpack.c.b16 %v1595, %v1595
  %v1600 = vsel %vm1069, %v1588, 0
  %v1603 = vsel %vm1069, %v1589, 0
  %v1606 = vand.u32 %v1597, %v1384
  %1608 = vmatpush.bf16.msra.mxu0 0
  %1609 = vmatpush.bf16.msra.mxu0 0
  %1610 = vmatpush.bf16.msra.mxu0 0
  %1611 = vmatpush.bf16.msra.mxu0 0
  %1612 = vmatpush.bf16.msra.mxu0 0
  %1613 = vmatpush.bf16.msra.mxu0 0
  %1614 = vmatpush.bf16.msra.mxu0 %v1606
  %1615 = vmatpush.bf16.msra.mxu0 %v1596
  %1616 = vmatmul.bf16.gmra.mxu0 %v1600
  %v1617 = vpop.f32.mrf.mxu0
  %v1618 = vadd.f32 0.0, %v1617
  %v1619 = vpop.f32.mrf.mxu0
  %v1620 = vadd.f32 0.0, %v1619
  %1621 = vmatmul.bf16.gmra.mxu0 %v1603
  %v1622 = vpop.f32.mrf.mxu0
  %v1623 = vadd.f32 0.0, %v1622
  %v1624 = vpop.f32.mrf.mxu0
  %1625 = vdwg.mxu0
  %v1629 = vunpack.c.l.b16 %v1353
  %v1630 = vunpack.c.l.b16 %v1354
  %v1631 = vunpack.c.l.b16 %v1355
  %v1632 = vpack.c.b16 %v1630, %v1629
  %v1633 = vpack.c.b16 %v1631, %v1631
  %v1637 = vunpack.c.l.b16 %v694
  %v1638 = vunpack.c.l.b16 %v695
  %v1639 = vunpack.c.l.b16 %v696
  %v1640 = vpack.c.b16 %v1638, %v1637
  %v1641 = vpack.c.b16 %v1639, %v1639
  %v1644 = vsel %vm1069, %v1632, 0
  %v1647 = vsel %vm1069, %v1633, 0
  %v1650 = vand.u32 %v1641, %v1384
  %1652 = vmatpush.bf16.msra.mxu0 0
  %1653 = vmatpush.bf16.msra.mxu0 0
  %1654 = vmatpush.bf16.msra.mxu0 0
  %1655 = vmatpush.bf16.msra.mxu0 0
  %1656 = vmatpush.bf16.msra.mxu0 0
  %1657 = vmatpush.bf16.msra.mxu0 0
  %1658 = vmatpush.bf16.msra.mxu0 %v1650
  %1659 = vmatpush.bf16.msra.mxu0 %v1640
  %1660 = vmatmul.bf16.gmra.mxu0 %v1644
  %v1661 = vpop.f32.mrf.mxu0
  %v1662 = vadd.f32 0.0, %v1661
  %v1663 = vpop.f32.mrf.mxu0
  %v1664 = vadd.f32 0.0, %v1663
  %1665 = vmatmul.bf16.gmra.mxu0 %v1647
  %v1666 = vpop.f32.mrf.mxu0
  %v1667 = vadd.f32 0.0, %v1666
  %v1668 = vpop.f32.mrf.mxu0
  %1669 = vdwg.mxu0
  %v1673 = vunpack.c.l.b16 %v1356
  %v1674 = vunpack.c.l.b16 %v1357
  %v1675 = vunpack.c.l.b16 %v1358
  %v1676 = vpack.c.b16 %v1674, %v1673
  %v1677 = vpack.c.b16 %v1675, %v1675
  %v1681 = vunpack.c.l.b16 %v697
  %v1682 = vunpack.c.l.b16 %v698
  %v1683 = vunpack.c.l.b16 %v699
  %v1684 = vpack.c.b16 %v1682, %v1681
  %v1685 = vpack.c.b16 %v1683, %v1683
  %v1688 = vsel %vm1069, %v1676, 0
  %v1691 = vsel %vm1069, %v1677, 0
  %v1694 = vand.u32 %v1685, %v1384
  %1696 = vmatpush.bf16.msra.mxu0 0
  %1697 = vmatpush.bf16.msra.mxu0 0
  %1698 = vmatpush.bf16.msra.mxu0 0
  %1699 = vmatpush.bf16.msra.mxu0 0
  %1700 = vmatpush.bf16.msra.mxu0 0
  %1701 = vmatpush.bf16.msra.mxu0 0
  %1702 = vmatpush.bf16.msra.mxu0 %v1694
  %1703 = vmatpush.bf16.msra.mxu0 %v1684
  %1704 = vmatmul.bf16.gmra.mxu0 %v1688
  %v1705 = vpop.f32.mrf.mxu0
  %v1706 = vadd.f32 0.0, %v1705
  %v1707 = vpop.f32.mrf.mxu0
  %v1708 = vadd.f32 0.0, %v1707
  %1709 = vmatmul.bf16.gmra.mxu0 %v1691
  %v1710 = vpop.f32.mrf.mxu0
  %v1711 = vadd.f32 0.0, %v1710
  %v1712 = vpop.f32.mrf.mxu0
  %1713 = vdwg.mxu0
  %v1714 = vpack.c.bf16 %v1398, %v1398
  %v1715 = vpack.c.bf16 %v1400, %v1400
  %v1716 = vpack.c.bf16 %v1403, %v1403
  %1717 = vst.msk [vmem:[#allocation5] sm:$0xf] %vm246, %v1714
  %1718 = vst.msk [vmem:[#allocation5 + $0x4] sm:$0xf] %vm246, %v1715
  %v1719 = vld [vmem:[#allocation5 + $0x8] sm:$0x1]
  %v1720 = vsel %vm251, %v1716, %v1719
  %1721 = vst [vmem:[#allocation5 + $0x8] sm:$0x1] %v1720
  %v1722 = vpack.c.bf16 %v1442, %v1442
  %v1723 = vpack.c.bf16 %v1444, %v1444
  %v1724 = vpack.c.bf16 %v1447, %v1447
  %1728 = vrot.lane.b32.xlu0 %v1722, 8
  %v1729 = vpop.permute.xlu0 %1728
  %1730 = vrot.lane.b32.xlu0 %v1723, 8
  %v1731 = vpop.permute.xlu0 %1730
  %1732 = vrot.lane.b32.xlu0 %v1724, 8
  %v1733 = vpop.permute.xlu0 %1732
  %vm1737 = vcmask 126016
  %1738 = vst.msk [vmem:[#allocation5] sm:$0xf] %vm1737, %v1729
  %1739 = vst.msk [vmem:[#allocation5 + $0x4] sm:$0xf] %vm1737, %v1731
  %vm1740 = vcmask 122944
  %vm1741 = vmand %vm1740, %vm250
  %v1742 = vld [vmem:[#allocation5 + $0x8] sm:$0x1]
  %v1743 = vsel %vm1741, %v1733, %v1742
  %1744 = vst [vmem:[#allocation5 + $0x8] sm:$0x1] %v1743
  %v1745 = vpack.c.bf16 %v1486, %v1486
  %v1746 = vpack.c.bf16 %v1488, %v1488
  %v1747 = vpack.c.bf16 %v1491, %v1491
  %1751 = vrot.lane.b32.xlu0 %v1745, 16
  %v1752 = vpop.permute.xlu0 %1751
  %1753 = vrot.lane.b32.xlu0 %v1746, 16
  %v1754 = vpop.permute.xlu0 %1753
  %1755 = vrot.lane.b32.xlu0 %v1747, 16
  %v1756 = vpop.permute.xlu0 %1755
  %vm1760 = vcmask 191616
  %1761 = vst.msk [vmem:[#allocation5] sm:$0xf] %vm1760, %v1752
  %1762 = vst.msk [vmem:[#allocation5 + $0x4] sm:$0xf] %vm1760, %v1754
  %vm1763 = vcmask 188544
  %vm1764 = vmand %vm1763, %vm250
  %v1765 = vld [vmem:[#allocation5 + $0x8] sm:$0x1]
  %v1766 = vsel %vm1764, %v1756, %v1765
  %1767 = vst [vmem:[#allocation5 + $0x8] sm:$0x1] %v1766
  %v1768 = vpack.c.bf16 %v1530, %v1530
  %v1769 = vpack.c.bf16 %v1532, %v1532
  %v1770 = vpack.c.bf16 %v1535, %v1535
  %1774 = vrot.lane.b32.xlu0 %v1768, 24
  %v1775 = vpop.permute.xlu0 %1774
  %1776 = vrot.lane.b32.xlu0 %v1769, 24
  %v1777 = vpop.permute.xlu0 %1776
  %1778 = vrot.lane.b32.xlu0 %v1770, 24
  %v1779 = vpop.permute.xlu0 %1778
  %vm1783 = vcmask 257216
  %1784 = vst.msk [vmem:[#allocation5] sm:$0xf] %vm1783, %v1775
  %1785 = vst.msk [vmem:[#allocation5 + $0x4] sm:$0xf] %vm1783, %v1777
  %vm1786 = vcmask 254144
  %vm1787 = vmand %vm1786, %vm250
  %v1788 = vld [vmem:[#allocation5 + $0x8] sm:$0x1]
  %v1789 = vsel %vm1787, %v1779, %v1788
  %1790 = vst [vmem:[#allocation5 + $0x8] sm:$0x1] %v1789
  %v1791 = vpack.c.bf16 %v1574, %v1574
  %v1792 = vpack.c.bf16 %v1576, %v1576
  %v1793 = vpack.c.bf16 %v1579, %v1579
  %vm1794 = vsmask.f32 4368
  %vm1795 = vmor %vm250, %vm1794
  %v1797 = vshrl.u32 %v1791, 16
  %v1799 = vrot.slane %v1797, 7
  %v1800 = vshll.u32 %v1791, 16
  %v1802 = vor.u32 %v1799, %v1800
  %v1803 = vrot.slane %v1799, 4
  %v1805 = vshrl.u32 %v1792, 16
  %v1807 = vrot.slane %v1805, 7
  %v1808 = vshll.u32 %v1792, 16
  %v1810 = vor.u32 %v1807, %v1808
  %v1811 = vsel %vm1795, %v1803, %v1810
  %v1812 = vrot.slane %v1807, 4
  %v1814 = vshll.u32 %v1793, 16
  %v1816 = vsel %vm1795, %v1812, %v1814
  %vm1820 = vcmask 60416
  %vm1821 = vsmask.f32 7938
  %vm1822 = vmand %vm1820, %vm1821
  %v1823 = vld [vmem:[#allocation5 + $0x8] sm:$0xf]
  %v1824 = vsel %vm1822, %v1802, %v1823
  %1825 = vst [vmem:[#allocation5 + $0x8] sm:$0xf] %v1824
  %1826 = vst.msk [vmem:[#allocation5 + $0xc] sm:$0xf] %vm246, %v1811
  %vm1827 = vcmask 57344
  %1828 = vst.msk [vmem:[#allocation5 + $0x10] sm:$0x1] %vm1827, %v1816
  %v1829 = vpack.c.bf16 %v1618, %v1618
  %v1830 = vpack.c.bf16 %v1620, %v1620
  %v1831 = vpack.c.bf16 %v1623, %v1623
  %v1833 = vshrl.u32 %v1829, 16
  %v1835 = vrot.slane %v1833, 7
  %v1836 = vshll.u32 %v1829, 16
  %v1838 = vor.u32 %v1835, %v1836
  %v1839 = vrot.slane %v1835, 4
  %v1841 = vshrl.u32 %v1830, 16
  %v1843 = vrot.slane %v1841, 7
  %v1844 = vshll.u32 %v1830, 16
  %v1846 = vor.u32 %v1843, %v1844
  %v1847 = vsel %vm1795, %v1839, %v1846
  %v1848 = vrot.slane %v1843, 4
  %v1850 = vshll.u32 %v1831, 16
  %v1852 = vsel %vm1795, %v1848, %v1850
  %1853 = vrot.lane.b32.xlu0 %v1838, 8
  %v1854 = vpop.permute.xlu0 %1853
  %1855 = vrot.lane.b32.xlu0 %v1847, 8
  %v1856 = vpop.permute.xlu0 %1855
  %1857 = vrot.lane.b32.xlu0 %v1852, 8
  %v1858 = vpop.permute.xlu0 %1857
  %vm1862 = vcmask 126016
  %vm1863 = vmand %vm1862, %vm1821
  %v1864 = vld [vmem:[#allocation5 + $0x8] sm:$0xf]
  %v1865 = vsel %vm1863, %v1854, %v1864
  %1866 = vst [vmem:[#allocation5 + $0x8] sm:$0xf] %v1865
  %1867 = vst.msk [vmem:[#allocation5 + $0xc] sm:$0xf] %vm1737, %v1856
  %vm1868 = vcmask 122944
  %1869 = vst.msk [vmem:[#allocation5 + $0x10] sm:$0x1] %vm1868, %v1858
  %v1870 = vpack.c.bf16 %v1662, %v1662
  %v1871 = vpack.c.bf16 %v1664, %v1664
  %v1872 = vpack.c.bf16 %v1667, %v1667
  %v1874 = vshrl.u32 %v1870, 16
  %v1876 = vrot.slane %v1874, 7
  %v1877 = vshll.u32 %v1870, 16
  %v1879 = vor.u32 %v1876, %v1877
  %v1880 = vrot.slane %v1876, 4
  %v1882 = vshrl.u32 %v1871, 16
  %v1884 = vrot.slane %v1882, 7
  %v1885 = vshll.u32 %v1871, 16
  %v1887 = vor.u32 %v1884, %v1885
  %v1888 = vsel %vm1795, %v1880, %v1887
  %v1889 = vrot.slane %v1884, 4
  %v1891 = vshll.u32 %v1872, 16
  %v1893 = vsel %vm1795, %v1889, %v1891
  %1894 = vrot.lane.b32.xlu0 %v1879, 16
  %v1895 = vpop.permute.xlu0 %1894
  %1896 = vrot.lane.b32.xlu0 %v1888, 16
  %v1897 = vpop.permute.xlu0 %1896
  %1898 = vrot.lane.b32.xlu0 %v1893, 16
  %v1899 = vpop.permute.xlu0 %1898
  %vm1903 = vcmask 191616
  %vm1904 = vmand %vm1903, %vm1821
  %v1905 = vld [vmem:[#allocation5 + $0x8] sm:$0xf]
  %v1906 = vsel %vm1904, %v1895, %v1905
  %1907 = vst [vmem:[#allocation5 + $0x8] sm:$0xf] %v1906
  %1908 = vst.msk [vmem:[#allocation5 + $0xc] sm:$0xf] %vm1760, %v1897
  %vm1909 = vcmask 188544
  %1910 = vst.msk [vmem:[#allocation5 + $0x10] sm:$0x1] %vm1909, %v1899
  %v1911 = vpack.c.bf16 %v1706, %v1706
  %v1912 = vpack.c.bf16 %v1708, %v1708
  %v1913 = vpack.c.bf16 %v1711, %v1711
  %v1915 = vshrl.u32 %v1911, 16
  %v1917 = vrot.slane %v1915, 7
  %v1918 = vshll.u32 %v1911, 16
  %v1920 = vor.u32 %v1917, %v1918
  %v1921 = vrot.slane %v1917, 4
  %v1923 = vshrl.u32 %v1912, 16
  %v1925 = vrot.slane %v1923, 7
  %v1926 = vshll.u32 %v1912, 16
  %v1928 = vor.u32 %v1925, %v1926
  %v1929 = vsel %vm1795, %v1921, %v1928
  %v1930 = vrot.slane %v1925, 4
  %v1932 = vshll.u32 %v1913, 16
  %v1934 = vsel %vm1795, %v1930, %v1932
  %1935 = vrot.lane.b32.xlu0 %v1920, 24
  %v1936 = vpop.permute.xlu0 %1935
  %1937 = vrot.lane.b32.xlu0 %v1929, 24
  %v1938 = vpop.permute.xlu0 %1937
  %1939 = vrot.lane.b32.xlu0 %v1934, 24
  %v1940 = vpop.permute.xlu0 %1939
  %vm1944 = vcmask 257216
  %vm1945 = vmand %vm1944, %vm1821
  %v1946 = vld [vmem:[#allocation5 + $0x8] sm:$0xf]
  %v1947 = vsel %vm1945, %v1936, %v1946
  %1948 = vst [vmem:[#allocation5 + $0x8] sm:$0xf] %v1947
  %1949 = vst.msk [vmem:[#allocation5 + $0xc] sm:$0xf] %vm1783, %v1938
  %vm1950 = vcmask 254144
  %1951 = vst.msk [vmem:[#allocation5 + $0x10] sm:$0x1] %vm1950, %v1940
  %v1952 = vld [vmem:[#allocation5] sm:$0xf]
  %v1953 = vld [vmem:[#allocation5 + $0x4] sm:$0xf]
  %v1954 = vld [vmem:[#allocation5 + $0x8] sm:$0xf]
  %v1955 = vld [vmem:[#allocation5 + $0xc] sm:$0xf]
  %v1956 = vld [vmem:[#allocation5 + $0x10] sm:$0x1]
  %v1957 = vld [vmem:[%s4] sm:$0xf]
  %v1958 = vld [vmem:[%s4 + $0x4] sm:$0xf]
  %v1959 = vld [vmem:[%s4 + $0x8] sm:$0xf]
  %v1960 = vld [vmem:[%s4 + $0xc] sm:$0xf]
  %v1961 = vld [vmem:[%s5] sm:$0x1]
  %v1963 = vperm.slane %v1961, 0
  %v1970 = vunpack.c.l.b16 %v1952
  %v1971 = vunpack.c.l.b16 %v1953
  %v1972 = vunpack.c.l.b16 %v1954
  %v1973 = vunpack.c.l.b16 %v1955
  %v1974 = vunpack.c.l.b16 %v1956
  %v1975 = vpack.c.b16 %v1971, %v1970
  %v1976 = vpack.c.b16 %v1973, %v1972
  %v1977 = vpack.c.b16 %v1974, %v1974
  %v1982 = vunpack.c.l.b16 %v1957
  %v1983 = vunpack.c.l.b16 %v1958
  %v1984 = vunpack.c.l.b16 %v1959
  %v1985 = vunpack.c.l.b16 %v1960
  %v1986 = vpack.c.b16 %v1983, %v1982
  %v1987 = vpack.c.b16 %v1985, %v1984
  %v1991 = vsel %vm49, %v1975, 0
  %v1994 = vsel %vm49, %v1976, 0
  %v1997 = vsel %vm49, %v1977, 0
  %1999 = vmatpush.bf16.msra.mxu0 0
  %2000 = vmatpush.bf16.msra.mxu0 0
  %2001 = vmatpush.bf16.msra.mxu0 0
  %2002 = vmatpush.bf16.msra.mxu0 0
  %2003 = vmatpush.bf16.msra.mxu0 0
  %2004 = vmatpush.bf16.msra.mxu0 0
  %2005 = vmatpush.bf16.msra.mxu0 %v1987
  %2006 = vmatpush.bf16.msra.mxu0 %v1986
  %2007 = vmatmul.bf16.gmra.mxu0 %v1991
  %v2008 = vpop.f32.mrf.mxu0
  %v2009 = vadd.f32 %v1963, %v2008
  %v2010 = vpop.f32.mrf.mxu0
  %v2011 = vadd.f32 %v1963, %v2010
  %2012 = vmatmul.bf16.gmra.mxu0 %v1994
  %v2013 = vpop.f32.mrf.mxu0
  %v2014 = vadd.f32 %v1963, %v2013
  %v2015 = vpop.f32.mrf.mxu0
  %v2016 = vadd.f32 %v1963, %v2015
  %2017 = vmatmul.bf16.gmra.mxu0 %v1997
  %v2018 = vpop.f32.mrf.mxu0
  %v2019 = vadd.f32 %v1963, %v2018
  %v2020 = vpop.f32.mrf.mxu0
  %2021 = vdwg.mxu0
  %v2022 = vadd.f32 %v42, %v2009
  %v2023 = vadd.f32 %v43, %v2011
  %v2024 = vadd.f32 %v44, %v2014
  %v2025 = vadd.f32 %v45, %v2016
  %v2026 = vadd.f32 %v46, %v2019
  %v2027 = vld [vmem:[%s6] sm:$0x1]
  %v2028 = vld [vmem:[%s7] sm:$0x1]
  %v2029 = vsel %vm49, %v2022, 0.0
  %2030 = vadd.xlane.f32.xlu0 %v2029
  %v2031 = vpop.xlane.xlu0 %2030
  %v2032 = vsel %vm49, %v2023, 0.0
  %2033 = vadd.xlane.f32.xlu0 %v2032
  %v2034 = vpop.xlane.xlu0 %2033
  %v2035 = vsel %vm49, %v2024, 0.0
  %2036 = vadd.xlane.f32.xlu0 %v2035
  %v2037 = vpop.xlane.xlu0 %2036
  %v2038 = vsel %vm49, %v2025, 0.0
  %2039 = vadd.xlane.f32.xlu0 %v2038
  %v2040 = vpop.xlane.xlu0 %2039
  %v2041 = vsel %vm62, %v2026, 0.0
  %2042 = vadd.xlane.f32.xlu0 %v2041
  %v2043 = vpop.xlane.xlu0 %2042
  %v2044 = vmul.f32 %v2022, %v2022
  %v2045 = vmul.f32 %v2023, %v2023
  %v2046 = vmul.f32 %v2024, %v2024
  %v2047 = vmul.f32 %v2025, %v2025
  %v2048 = vmul.f32 %v2026, %v2026
  %v2049 = vsel %vm49, %v2044, 0.0
  %2050 = vadd.xlane.f32.xlu0 %v2049
  %v2051 = vpop.xlane.xlu0 %2050
  %v2052 = vsel %vm49, %v2045, 0.0
  %2053 = vadd.xlane.f32.xlu0 %v2052
  %v2054 = vpop.xlane.xlu0 %2053
  %v2055 = vsel %vm49, %v2046, 0.0
  %2056 = vadd.xlane.f32.xlu0 %v2055
  %v2057 = vpop.xlane.xlu0 %2056
  %v2058 = vsel %vm49, %v2047, 0.0
  %2059 = vadd.xlane.f32.xlu0 %v2058
  %v2060 = vpop.xlane.xlu0 %2059
  %v2061 = vsel %vm62, %v2048, 0.0
  %2062 = vadd.xlane.f32.xlu0 %v2061
  %v2063 = vpop.xlane.xlu0 %2062
  %v2064 = vmul.f32 %v2031, 0.03125
  %v2065 = vmul.f32 %v2034, 0.03125
  %v2066 = vmul.f32 %v2037, 0.03125
  %v2067 = vmul.f32 %v2040, 0.03125
  %v2068 = vmul.f32 %v2043, 0.03125
  %v2069 = vmul.f32 %v2051, 0.03125
  %v2070 = vmul.f32 %v2054, 0.03125
  %v2071 = vmul.f32 %v2057, 0.03125
  %v2072 = vmul.f32 %v2060, 0.03125
  %v2073 = vmul.f32 %v2063, 0.03125
  %v2074 = vmul.f32 %v2064, %v2064
  %v2075 = vmul.f32 %v2065, %v2065
  %v2076 = vmul.f32 %v2066, %v2066
  %v2077 = vmul.f32 %v2067, %v2067
  %v2078 = vmul.f32 %v2068, %v2068
  %v2079 = vsub.f32 %v2069, %v2074
  %v2080 = vsub.f32 %v2070, %v2075
  %v2081 = vsub.f32 %v2071, %v2076
  %v2082 = vsub.f32 %v2072, %v2077
  %v2083 = vsub.f32 %v2073, %v2078
  %v2084 = vmax.f32 %v2079, 0.0
  %v2085 = vmax.f32 %v2080, 0.0
  %v2086 = vmax.f32 %v2081, 0.0
  %v2087 = vmax.f32 %v2082, 0.0
  %v2088 = vmax.f32 %v2083, 0.0
  %v2089 = vsub.f32 %v2022, %v2064
  %v2090 = vsub.f32 %v2023, %v2065
  %v2091 = vsub.f32 %v2024, %v2066
  %v2092 = vsub.f32 %v2025, %v2067
  %v2093 = vsub.f32 %v2026, %v2068
  %v2094 = vadd.f32 %v2084, 1e-05
  %v2095 = vadd.f32 %v2085, 1e-05
  %v2096 = vadd.f32 %v2086, 1e-05
  %v2097 = vadd.f32 %v2087, 1e-05
  %v2098 = vadd.f32 %v2088, 1e-05
  %v2099 = vrsqrt.pop %v2094
  %v2100 = vmul.f32 %v2099, %v2094
  %v2101 = vmul.f32 %v2100, %v2099
  %v2102 = vmul.f32 0.5, %v2101
  %v2103 = vsub.f32 1.5, %v2102
  %v2104 = vmul.f32 %v2099, %v2103
  %vm2105 = vweird.f32 %v2094
  %vm2106 = vweird.f32 %v2099
  %vm2107 = vmor %vm2105, %vm2106
  %v2108 = vsel %vm2107, %v2099, %v2104
  %v2109 = vrsqrt.pop %v2095
  %v2110 = vmul.f32 %v2109, %v2095
  %v2111 = vmul.f32 %v2110, %v2109
  %v2112 = vmul.f32 0.5, %v2111
  %v2113 = vsub.f32 1.5, %v2112
  %v2114 = vmul.f32 %v2109, %v2113
  %vm2115 = vweird.f32 %v2095
  %vm2116 = vweird.f32 %v2109
  %vm2117 = vmor %vm2115, %vm2116
  %v2118 = vsel %vm2117, %v2109, %v2114
  %v2119 = vrsqrt.pop %v2096
  %v2120 = vmul.f32 %v2119, %v2096
  %v2121 = vmul.f32 %v2120, %v2119
  %v2122 = vmul.f32 0.5, %v2121
  %v2123 = vsub.f32 1.5, %v2122
  %v2124 = vmul.f32 %v2119, %v2123
  %vm2125 = vweird.f32 %v2096
  %vm2126 = vweird.f32 %v2119
  %vm2127 = vmor %vm2125, %vm2126
  %v2128 = vsel %vm2127, %v2119, %v2124
  %v2129 = vrsqrt.pop %v2097
  %v2130 = vmul.f32 %v2129, %v2097
  %v2131 = vmul.f32 %v2130, %v2129
  %v2132 = vmul.f32 0.5, %v2131
  %v2133 = vsub.f32 1.5, %v2132
  %v2134 = vmul.f32 %v2129, %v2133
  %vm2135 = vweird.f32 %v2097
  %vm2136 = vweird.f32 %v2129
  %vm2137 = vmor %vm2135, %vm2136
  %v2138 = vsel %vm2137, %v2129, %v2134
  %v2139 = vrsqrt.pop %v2098
  %v2140 = vmul.f32 %v2139, %v2098
  %v2141 = vmul.f32 %v2140, %v2139
  %v2142 = vmul.f32 0.5, %v2141
  %v2143 = vsub.f32 1.5, %v2142
  %v2144 = vmul.f32 %v2139, %v2143
  %vm2145 = vweird.f32 %v2098
  %vm2146 = vweird.f32 %v2139
  %vm2147 = vmor %vm2145, %vm2146
  %v2148 = vsel %vm2147, %v2139, %v2144
  %v2149 = vmul.f32 %v2089, %v2108
  %v2150 = vmul.f32 %v2090, %v2118
  %v2151 = vmul.f32 %v2091, %v2128
  %v2152 = vmul.f32 %v2092, %v2138
  %v2153 = vmul.f32 %v2093, %v2148
  %v2155 = vperm.slane %v2027, 0
  %v2157 = vmul.f32 %v2149, %v2155
  %v2158 = vmul.f32 %v2150, %v2155
  %v2159 = vmul.f32 %v2151, %v2155
  %v2160 = vmul.f32 %v2152, %v2155
  %v2161 = vmul.f32 %v2153, %v2155
  %v2163 = vperm.slane %v2028, 0
  %v2165 = vadd.f32 %v2157, %v2163
  %v2166 = vadd.f32 %v2158, %v2163
  %v2167 = vadd.f32 %v2159, %v2163
  %v2168 = vadd.f32 %v2160, %v2163
  %v2169 = vadd.f32 %v2161, %v2163
  %v2170 = vpack.c.bf16 %v2166, %v2165
  %v2171 = vpack.c.bf16 %v2168, %v2167
  %v2172 = vpack.c.bf16 %v2169, %v2169
  %v2173 = vld [vmem:[%s8] sm:$0xf]
  %v2174 = vld [vmem:[%s8 + $0x4] sm:$0xf]
  %v2175 = vld [vmem:[%s8 + $0x8] sm:$0xf]
  %v2176 = vld [vmem:[%s8 + $0xc] sm:$0xf]
  %v2177 = vld [vmem:[%s9] sm:$0x1]
  %v2179 = vperm.slane %v2177, 0
  %v2185 = vunpack.c.l.b16 %v2173
  %v2186 = vunpack.c.l.b16 %v2174
  %v2187 = vunpack.c.l.b16 %v2175
  %v2188 = vunpack.c.l.b16 %v2176
  %v2189 = vpack.c.b16 %v2186, %v2185
  %v2190 = vpack.c.b16 %v2188, %v2187
  %v2194 = vsel %vm49, %v2170, 0
  %v2197 = vsel %vm49, %v2171, 0
  %v2200 = vsel %vm49, %v2172, 0
  %2202 = vmatpush.bf16.msra.mxu0 0
  %2203 = vmatpush.bf16.msra.mxu0 0
  %2204 = vmatpush.bf16.msra.mxu0 0
  %2205 = vmatpush.bf16.msra.mxu0 0
  %2206 = vmatpush.bf16.msra.mxu0 0
  %2207 = vmatpush.bf16.msra.mxu0 0
  %2208 = vmatpush.bf16.msra.mxu0 %v2190
  %2209 = vmatpush.bf16.msra.mxu0 %v2189
  %2210 = vmatmul.bf16.gmra.mxu0 %v2194
  %v2211 = vpop.f32.mrf.mxu0
  %v2212 = vadd.f32 %v2179, %v2211
  %v2213 = vpop.f32.mrf.mxu0
  %v2214 = vadd.f32 %v2179, %v2213
  %2215 = vmatmul.bf16.gmra.mxu0 %v2197
  %v2216 = vpop.f32.mrf.mxu0
  %v2217 = vadd.f32 %v2179, %v2216
  %v2218 = vpop.f32.mrf.mxu0
  %v2219 = vadd.f32 %v2179, %v2218
  %2220 = vmatmul.bf16.gmra.mxu0 %v2200
  %v2221 = vpop.f32.mrf.mxu0
  %v2222 = vadd.f32 %v2179, %v2221
  %v2223 = vpop.f32.mrf.mxu0
  %2224 = vdwg.mxu0
  %v2225 = vmul.f32 %v2212, 0.5
  %v2226 = vmul.f32 %v2214, 0.5
  %v2227 = vmul.f32 %v2217, 0.5
  %v2228 = vmul.f32 %v2219, 0.5
  %v2229 = vmul.f32 %v2222, 0.5
  %v2230 = vmul.f32 %v2212, 0.044715
  %v2231 = vmul.f32 %v2214, 0.044715
  %v2232 = vmul.f32 %v2217, 0.044715
  %v2233 = vmul.f32 %v2219, 0.044715
  %v2234 = vmul.f32 %v2222, 0.044715
  %v2235 = vmul.f32 %v2230, %v2212
  %v2236 = vmul.f32 %v2231, %v2214
  %v2237 = vmul.f32 %v2232, %v2217
  %v2238 = vmul.f32 %v2233, %v2219
  %v2239 = vmul.f32 %v2234, %v2222
  %v2240 = vmul.f32 %v2235, %v2212
  %v2241 = vmul.f32 %v2236, %v2214
  %v2242 = vmul.f32 %v2237, %v2217
  %v2243 = vmul.f32 %v2238, %v2219
  %v2244 = vmul.f32 %v2239, %v2222
  %v2245 = vadd.f32 %v2212, %v2240
  %v2246 = vadd.f32 %v2214, %v2241
  %v2247 = vadd.f32 %v2217, %v2242
  %v2248 = vadd.f32 %v2219, %v2243
  %v2249 = vadd.f32 %v2222, %v2244
  %v2250 = vmul.f32 %v2245, 0.7978846
  %v2251 = vmul.f32 %v2246, 0.7978846
  %v2252 = vmul.f32 %v2247, 0.7978846
  %v2253 = vmul.f32 %v2248, 0.7978846
  %v2254 = vmul.f32 %v2249, 0.7978846
  %v2255 = vtanh.pop %v2250
  %v2256 = vtanh.pop %v2251
  %v2257 = vtanh.pop %v2252
  %v2258 = vtanh.pop %v2253
  %v2259 = vtanh.pop %v2254
  %v2260 = vadd.f32 %v2255, 1.0
  %v2261 = vadd.f32 %v2256, 1.0
  %v2262 = vadd.f32 %v2257, 1.0
  %v2263 = vadd.f32 %v2258, 1.0
  %v2264 = vadd.f32 %v2259, 1.0
  %v2265 = vmul.f32 %v2225, %v2260
  %v2266 = vmul.f32 %v2226, %v2261
  %v2267 = vmul.f32 %v2227, %v2262
  %v2268 = vmul.f32 %v2228, %v2263
  %v2269 = vmul.f32 %v2229, %v2264
  %v2270 = vpack.c.bf16 %v2266, %v2265
  %v2271 = vpack.c.bf16 %v2268, %v2267
  %v2272 = vpack.c.bf16 %v2269, %v2269
  %v2273 = vld [vmem:[%s10] sm:$0xf]
  %v2274 = vld [vmem:[%s10 + $0x4] sm:$0xf]
  %v2275 = vld [vmem:[%s10 + $0x8] sm:$0xf]
  %v2276 = vld [vmem:[%s10 + $0xc] sm:$0xf]
  %v2277 = vld [vmem:[%s10 + $0x10] sm:$0xf]
  %v2278 = vld [vmem:[%s10 + $0x14] sm:$0xf]
  %v2279 = vld [vmem:[%s10 + $0x18] sm:$0xf]
  %v2280 = vld [vmem:[%s10 + $0x1c] sm:$0xf]
  %v2281 = vld [vmem:[%s11] sm:$0x1]
  %v2283 = vperm.slane %v2281, 0
  %v2293 = vunpack.c.l.b16 %v2273
  %v2294 = vunpack.c.l.b16 %v2274
  %v2295 = vunpack.c.l.b16 %v2275
  %v2296 = vunpack.c.l.b16 %v2276
  %v2297 = vunpack.c.l.b16 %v2277
  %v2298 = vunpack.c.l.b16 %v2278
  %v2299 = vunpack.c.l.b16 %v2279
  %v2300 = vunpack.c.l.b16 %v2280
  %v2301 = vpack.c.b16 %v2294, %v2293
  %v2302 = vpack.c.b16 %v2296, %v2295
  %v2303 = vpack.c.b16 %v2298, %v2297
  %v2304 = vpack.c.b16 %v2300, %v2299
  %vm2309 = vcmask 523264
  %v2311 = vsel %vm2309, %v2270, 0
  %v2314 = vsel %vm2309, %v2271, 0
  %v2317 = vsel %vm2309, %v2272, 0
  %2319 = vmatpush.bf16.msra.mxu0 0
  %2320 = vmatpush.bf16.msra.mxu0 0
  %2321 = vmatpush.bf16.msra.mxu0 0
  %2322 = vmatpush.bf16.msra.mxu0 0
  %2323 = vmatpush.bf16.msra.mxu0 %v2304
  %2324 = vmatpush.bf16.msra.mxu0 %v2303
  %2325 = vmatpush.bf16.msra.mxu0 %v2302
  %2326 = vmatpush.bf16.msra.mxu0 %v2301
  %2327 = vmatmul.bf16.gmra.mxu0 %v2311
  %v2328 = vpop.f32.mrf.mxu0
  %v2329 = vadd.f32 %v2283, %v2328
  %v2330 = vpop.f32.mrf.mxu0
  %v2331 = vadd.f32 %v2283, %v2330
  %2332 = vmatmul.bf16.gmra.mxu0 %v2314
  %v2333 = vpop.f32.mrf.mxu0
  %v2334 = vadd.f32 %v2283, %v2333
  %v2335 = vpop.f32.mrf.mxu0
  %v2336 = vadd.f32 %v2283, %v2335
  %2337 = vmatmul.bf16.gmra.mxu0 %v2317
  %v2338 = vpop.f32.mrf.mxu0
  %v2339 = vadd.f32 %v2283, %v2338
  %v2340 = vpop.f32.mrf.mxu0
  %2341 = vdwg.mxu0
  %v2342 = vadd.f32 %v2022, %v2329
  %v2343 = vadd.f32 %v2023, %v2331
  %v2344 = vadd.f32 %v2024, %v2334
  %v2345 = vadd.f32 %v2025, %v2336
  %v2346 = vadd.f32 %v2026, %v2339
  %2347 = vst.msk [vmem:[%s12] sm:$0xff] %vm49, %v2342
  %2348 = vst.msk [vmem:[%s12 + $0x8] sm:$0xff] %vm49, %v2343
  %2349 = vst.msk [vmem:[%s12 + $0x10] sm:$0xff] %vm49, %v2344
  %2350 = vst.msk [vmem:[%s12 + $0x18] sm:$0xff] %vm49, %v2345
  %2351 = vst.msk [vmem:[%s12 + $0x20] sm:$0x3] %vm62, %v2346
  // Predicated region
  $region50: #{vit_forward.5} parent=0 // pred_check
    _
  $region51: #{vit_forward.5} parent=0 // pred_check_branch
    %2353 = sbr.rel (0) target = $region53
  $region52: #{vit_forward.5} parent=0 // pred_region
    _
  $region53: #{vit_forward.5} parent=0 // pred_fallthru
    _
  // Predicated region
  $region54: #{vit_forward.5} parent=0 // pred_check
    _
  $region55: #{vit_forward.5} parent=0 // pred_check_branch
    %2355 = sbr.rel (0) target = $region57
  $region56: #{vit_forward.5} parent=0 // pred_region
    _
  $region57: #{vit_forward.5} parent=0 // pred_fallthru
    _

</llo_original>
